<compile_context>
chip_gen: v6e
topology: v6e:2x2x1
jax: 0.10.0
libtpu: 0.0.40
codegen_flags: <defaults>
</compile_context>

<pallas_src>
import math

import jax
import jax.numpy as jnp
from jax.experimental import pallas as pl
from jax.experimental.pallas import tpu as pltpu

INPUT_BITS = 256   # output features
LATENT_DIM = 256   # input features
HIDDEN = 512
DROP_P = 0.2
INV_KEEP = 1.0 / (1.0 - DROP_P)
NOISE_STD = 0.05


def _round_up(x, m):
    return ((x + m - 1) // m) * m


def _generator_kernel(z_ref, w1_ref, b1_ref, w2_ref, b2_ref, w3_ref, b3_ref,
                      m1_ref, m2_ref, noise_ref, out_ref):
    # Layer 1: Linear (bf16 MXU, f32 accumulate) + ReLU + Dropout
    h1 = jnp.dot(z_ref[...].astype(jnp.bfloat16), w1_ref[...],
                 preferred_element_type=jnp.float32) + b1_ref[...]
    h1 = jnp.maximum(h1, 0.0) * (m1_ref[...].astype(jnp.float32) * INV_KEEP)

    # Layer 2: Linear + ReLU + Dropout
    h2 = jnp.dot(h1.astype(jnp.bfloat16), w2_ref[...],
                 preferred_element_type=jnp.float32) + b2_ref[...]
    h2 = jnp.maximum(h2, 0.0) * (m2_ref[...].astype(jnp.float32) * INV_KEEP)

    # Layer 3: Linear + Hardtanh(-1, 1)
    h3 = jnp.dot(h2.astype(jnp.bfloat16), w3_ref[...],
                 preferred_element_type=jnp.float32) + b3_ref[...]
    out = jnp.clip(h3, -1.0, 1.0)

    # out + randn_like(out) * 0.05 (noise streamed unscaled in bf16)
    out_ref[...] = (out + noise_ref[...].astype(jnp.float32) * NOISE_STD
                    ).astype(out_ref.dtype)


def generator_forward(z, params, keep1, keep2, noise, *, tb=None):
    """z: (B, LATENT_DIM) f32; keep*: (B, HIDDEN) int8 {0,1};
    noise: (B, INPUT_BITS) bf16 (unscaled N(0,1)). Returns (B, INPUT_BITS) f32."""
    B, D = z.shape
    assert D == LATENT_DIM
    w1, b1, w2, b2, w3, b3 = params

    if tb is None:
        # 128 fills a v5e 128x128 MXU pass; 256 fills v6e/v7x's 256x256 MXU.
        # Keep >=2 grid steps when possible so v7x uses both TensorCores.
        tb = 256 if B >= 512 else 128
    tb = min(tb, _round_up(B, 8))

    Bp = _round_up(B, tb)
    if Bp != B:
        pad = Bp - B
        z = jnp.pad(z, ((0, pad), (0, 0)))
        keep1 = jnp.pad(keep1, ((0, pad), (0, 0)))
        keep2 = jnp.pad(keep2, ((0, pad), (0, 0)))
        noise = jnp.pad(noise, ((0, pad), (0, 0)))

    grid = (Bp // tb,)
    full = lambda shape: pl.BlockSpec(shape, lambda i: (0, 0))

    flops = 2 * Bp * (LATENT_DIM * HIDDEN + HIDDEN * HIDDEN + HIDDEN * INPUT_BITS)
    bytes_accessed = (
        Bp * LATENT_DIM * 4                               # z (f32)
        + 2 * Bp * HIDDEN * 1                             # dropout masks (int8)
        + Bp * INPUT_BITS * 2                             # noise (bf16)
        + Bp * INPUT_BITS * 4                             # output (f32)
        + (LATENT_DIM * HIDDEN + HIDDEN * HIDDEN + HIDDEN * INPUT_BITS) * 2  # weights bf16
        + (HIDDEN + HIDDEN + INPUT_BITS) * 4              # biases f32
    )

    return pl.pallas_call(
        _generator_kernel,
        out_shape=jax.ShapeDtypeStruct((Bp, INPUT_BITS), jnp.float32),
        grid_spec=pltpu.PrefetchScalarGridSpec(
            num_scalar_prefetch=0,
            grid=grid,
            in_specs=[
                pl.BlockSpec((tb, LATENT_DIM), lambda i: (i, 0)),     # z
                full((LATENT_DIM, HIDDEN)),                           # w1 (bf16)
                full((1, HIDDEN)),                                    # b1 (f32)
                full((HIDDEN, HIDDEN)),                               # w2 (bf16)
                full((1, HIDDEN)),                                    # b2 (f32)
                full((HIDDEN, INPUT_BITS)),                           # w3 (bf16)
                full((1, INPUT_BITS)),                                # b3 (f32)
                pl.BlockSpec((tb, HIDDEN), lambda i: (i, 0)),         # dropout mask 1 (int8)
                pl.BlockSpec((tb, HIDDEN), lambda i: (i, 0)),         # dropout mask 2 (int8)
                pl.BlockSpec((tb, INPUT_BITS), lambda i: (i, 0)),     # noise (bf16)
            ],
            out_specs=pl.BlockSpec((tb, INPUT_BITS), lambda i: (i, 0)),
        ),
        compiler_params=pltpu.CompilerParams(
            dimension_semantics=("parallel",)),
        cost_estimate=pl.CostEstimate(
            flops=flops, transcendentals=0, bytes_accessed=bytes_accessed),
    )(z, w1, b1, w2, b2, w3, b3, keep1, keep2, noise)[:B]


def init_params(key):
    """Same shapes as the PyTorch module (W pre-transposed); weights in bf16."""
    ks = jax.random.split(key, 6)

    def linear(kw, kb, fan_in, fan_out):
        bound = 1.0 / math.sqrt(fan_in)
        w = jax.random.uniform(kw, (fan_in, fan_out), jnp.float32, -bound, bound)
        b = jax.random.uniform(kb, (1, fan_out), jnp.float32, -bound, bound)
        return w.astype(jnp.bfloat16), b

    w1, b1 = linear(ks[0], ks[1], LATENT_DIM, HIDDEN)
    w2, b2 = linear(ks[2], ks[3], HIDDEN, HIDDEN)
    w3, b3 = linear(ks[4], ks[5], HIDDEN, INPUT_BITS)
    return (w1, b1, w2, b2, w3, b3)


if __name__ == "__main__":
    key = jax.random.PRNGKey(0)
    k_param, k_z, k_m1, k_m2, k_noise = jax.random.split(key, 5)

    B = 256  # -> 2 grid steps with tb=128 (pipelining + v7x dual-core)
    params = init_params(k_param)
    z = jax.random.normal(k_z, (B, LATENT_DIM), jnp.float32)

    # Dropout keep-masks (training-mode semantics, p=0.2), streamed as int8.
    # TODO(synk): masks/noise are generated host-side with jax.random to keep a
    # checkable reference; in-kernel pltpu.prng_* would remove this stream
    # entirely but changes the random stream.
    keep1 = jax.random.bernoulli(k_m1, 1.0 - DROP_P, (B, HIDDEN)).astype(jnp.int8)
    keep2 = jax.random.bernoulli(k_m2, 1.0 - DROP_P, (B, HIDDEN)).astype(jnp.int8)
    # Output noise, unscaled N(0,1) in bf16 (scaled by 0.05 inside the kernel).
    noise = jax.random.normal(k_noise, (B, INPUT_BITS), jnp.float32).astype(jnp.bfloat16)

    out = generator_forward(z, params, keep1, keep2, noise)
    out = jax.block_until_ready(out)

    # Mixed-precision pure-JAX reference with the exact same casts (tight check).
    w1, b1, w2, b2, w3, b3 = params
    m1f = keep1.astype(jnp.float32) * INV_KEEP
    m2f = keep2.astype(jnp.float32) * INV_KEEP
    h1 = jnp.maximum(jnp.dot(z.astype(jnp.bfloat16), w1,
                             preferred_element_type=jnp.float32) + b1, 0.0) * m1f
    h2 = jnp.maximum(jnp.dot(h1.astype(jnp.bfloat16), w2,
                             preferred_element_type=jnp.float32) + b2, 0.0) * m2f
    h3 = jnp.dot(h2.astype(jnp.bfloat16), w3,
                 preferred_element_type=jnp.float32) + b3
    ref = jnp.clip(h3, -1.0, 1.0) + noise.astype(jnp.float32) * NOISE_STD

    assert out.shape == (B, INPUT_BITS) and out.dtype == jnp.float32
    assert jnp.allclose(out, ref, atol=2e-2, rtol=2e-2), \
        float(jnp.max(jnp.abs(out - ref)))

    # Coarse sanity check against full-f32 math (bf16 weights introduce ~1e-2
    # level differences by design, hence the loose tolerance).
    w1f, w2f, w3f = (w1.astype(jnp.float32), w2.astype(jnp.float32),
                     w3.astype(jnp.float32))
    g1 = jnp.maximum(z @ w1f + b1, 0.0) * m1f
    g2 = jnp.maximum(g1 @ w2f + b2, 0.0) * m2f
    ref32 = jnp.clip(g2 @ w3f + b3, -1.0, 1.0) + noise.astype(jnp.float32) * NOISE_STD
    assert jnp.allclose(out, ref32, atol=0.25)

    print("KERNEL_OK")
</pallas_src>

<mosaic_0001>
module attributes {stable_mosaic.version = 11 : i64} {
  func.func @_generator_kernel(%arg0: i32, %arg1: memref<128x256xf32, #tpu.memory_space<vmem>>, %arg2: memref<256x512xbf16, #tpu.memory_space<vmem>>, %arg3: memref<1x512xf32, #tpu.memory_space<vmem>>, %arg4: memref<512x512xbf16, #tpu.memory_space<vmem>>, %arg5: memref<1x512xf32, #tpu.memory_space<vmem>>, %arg6: memref<512x256xbf16, #tpu.memory_space<vmem>>, %arg7: memref<1x256xf32, #tpu.memory_space<vmem>>, %arg8: memref<128x512xi8, #tpu.memory_space<vmem>>, %arg9: memref<128x512xi8, #tpu.memory_space<vmem>>, %arg10: memref<128x256xbf16, #tpu.memory_space<vmem>>, %arg11: memref<128x256xf32, #tpu.memory_space<vmem>>) attributes {dimension_semantics = [#tpu.dimension_semantics<parallel>], iteration_bounds = array<i64: 2>, scalar_prefetch = 0 : i64, scratch_operands = 0 : i64, tpu.core_type = #tpu.core_type<tc>, window_params = [{transform_indices = @transform_0, window_bounds = array<i64: 128, 256>}, {pipeline_mode = #tpu.pipeline_mode<synchronous>, transform_indices = @transform_1, window_bounds = array<i64: 256, 512>}, {pipeline_mode = #tpu.pipeline_mode<synchronous>, transform_indices = @transform_2, window_bounds = array<i64: 1, 512>}, {pipeline_mode = #tpu.pipeline_mode<synchronous>, transform_indices = @transform_3, window_bounds = array<i64: 512, 512>}, {pipeline_mode = #tpu.pipeline_mode<synchronous>, transform_indices = @transform_4, window_bounds = array<i64: 1, 512>}, {pipeline_mode = #tpu.pipeline_mode<synchronous>, transform_indices = @transform_5, window_bounds = array<i64: 512, 256>}, {pipeline_mode = #tpu.pipeline_mode<synchronous>, transform_indices = @transform_6, window_bounds = array<i64: 1, 256>}, {transform_indices = @transform_7, window_bounds = array<i64: 128, 512>}, {transform_indices = @transform_8, window_bounds = array<i64: 128, 512>}, {transform_indices = @transform_9, window_bounds = array<i64: 128, 256>}, {transform_indices = @transform_10, window_bounds = array<i64: 128, 256>}]} {
    %c0 = arith.constant 0 : index
    %c0_0 = arith.constant 0 : index
    %0 = vector.load %arg1[%c0, %c0_0] : memref<128x256xf32, #tpu.memory_space<vmem>>, vector<128x256xf32>
    %1 = arith.truncf %0 : vector<128x256xf32> to vector<128x256xbf16>
    %c0_1 = arith.constant 0 : index
    %c0_2 = arith.constant 0 : index
    %2 = vector.load %arg2[%c0_1, %c0_2] : memref<256x512xbf16, #tpu.memory_space<vmem>>, vector<256x512xbf16>
    %cst = arith.constant dense<0.000000e+00> : vector<128x512xf32>
    %3 = tpu.matmul %1, %2, %cst {dimension_numbers = #tpu.dot_dimension_numbers<[1], [0], [0], [1], [0, 0, 1, 1], [], []>} : vector<128x256xbf16>, vector<256x512xbf16>, vector<128x512xf32> -> vector<128x512xf32>
    %c0_3 = arith.constant 0 : index
    %c0_4 = arith.constant 0 : index
    %4 = vector.load %arg3[%c0_3, %c0_4] : memref<1x512xf32, #tpu.memory_space<vmem>>, vector<1x512xf32>
    %5 = vector.broadcast %4 : vector<1x512xf32> to vector<128x512xf32>
    %6 = arith.addf %3, %5 : vector<128x512xf32>
    %cst_5 = arith.constant 0.000000e+00 : f32
    %7 = vector.broadcast %cst_5 : f32 to vector<128x512xf32>
    %8 = arith.maximumf %6, %7 : vector<128x512xf32>
    %c0_6 = arith.constant 0 : index
    %c0_7 = arith.constant 0 : index
    %9 = vector.load %arg8[%c0_6, %c0_7] : memref<128x512xi8, #tpu.memory_space<vmem>>, vector<128x512xi8>
    %10 = arith.sitofp %9 : vector<128x512xi8> to vector<128x512xf32>
    %cst_8 = arith.constant 1.250000e+00 : f32
    %11 = vector.broadcast %cst_8 : f32 to vector<128x512xf32>
    %12 = arith.mulf %10, %11 : vector<128x512xf32>
    %13 = arith.mulf %8, %12 : vector<128x512xf32>
    %14 = arith.truncf %13 : vector<128x512xf32> to vector<128x512xbf16>
    %c0_9 = arith.constant 0 : index
    %c0_10 = arith.constant 0 : index
    %15 = vector.load %arg4[%c0_9, %c0_10] : memref<512x512xbf16, #tpu.memory_space<vmem>>, vector<512x512xbf16>
    %cst_11 = arith.constant dense<0.000000e+00> : vector<128x512xf32>
    %16 = tpu.matmul %14, %15, %cst_11 {dimension_numbers = #tpu.dot_dimension_numbers<[1], [0], [0], [1], [0, 0, 1, 1], [], []>} : vector<128x512xbf16>, vector<512x512xbf16>, vector<128x512xf32> -> vector<128x512xf32>
    %c0_12 = arith.constant 0 : index
    %c0_13 = arith.constant 0 : index
    %17 = vector.load %arg5[%c0_12, %c0_13] : memref<1x512xf32, #tpu.memory_space<vmem>>, vector<1x512xf32>
    %18 = vector.broadcast %17 : vector<1x512xf32> to vector<128x512xf32>
    %19 = arith.addf %16, %18 : vector<128x512xf32>
    %cst_14 = arith.constant 0.000000e+00 : f32
    %20 = vector.broadcast %cst_14 : f32 to vector<128x512xf32>
    %21 = arith.maximumf %19, %20 : vector<128x512xf32>
    %c0_15 = arith.constant 0 : index
    %c0_16 = arith.constant 0 : index
    %22 = vector.load %arg9[%c0_15, %c0_16] : memref<128x512xi8, #tpu.memory_space<vmem>>, vector<128x512xi8>
    %23 = arith.sitofp %22 : vector<128x512xi8> to vector<128x512xf32>
    %cst_17 = arith.constant 1.250000e+00 : f32
    %24 = vector.broadcast %cst_17 : f32 to vector<128x512xf32>
    %25 = arith.mulf %23, %24 : vector<128x512xf32>
    %26 = arith.mulf %21, %25 : vector<128x512xf32>
    %27 = arith.truncf %26 : vector<128x512xf32> to vector<128x512xbf16>
    %c0_18 = arith.constant 0 : index
    %c0_19 = arith.constant 0 : index
    %28 = vector.load %arg6[%c0_18, %c0_19] : memref<512x256xbf16, #tpu.memory_space<vmem>>, vector<512x256xbf16>
    %cst_20 = arith.constant dense<0.000000e+00> : vector<128x256xf32>
    %29 = tpu.matmul %27, %28, %cst_20 {dimension_numbers = #tpu.dot_dimension_numbers<[1], [0], [0], [1], [0, 0, 1, 1], [], []>} : vector<128x512xbf16>, vector<512x256xbf16>, vector<128x256xf32> -> vector<128x256xf32>
    %c0_21 = arith.constant 0 : index
    %c0_22 = arith.constant 0 : index
    %30 = vector.load %arg7[%c0_21, %c0_22] : memref<1x256xf32, #tpu.memory_space<vmem>>, vector<1x256xf32>
    %31 = vector.broadcast %30 : vector<1x256xf32> to vector<128x256xf32>
    %32 = arith.addf %29, %31 : vector<128x256xf32>
    %cst_23 = arith.constant -1.000000e+00 : f32
    %cst_24 = arith.constant 1.000000e+00 : f32
    %33 = vector.broadcast %cst_23 : f32 to vector<128x256xf32>
    %34 = arith.maximumf %33, %32 : vector<128x256xf32>
    %35 = vector.broadcast %cst_24 : f32 to vector<128x256xf32>
    %36 = arith.minimumf %35, %34 : vector<128x256xf32>
    %c0_25 = arith.constant 0 : index
    %c0_26 = arith.constant 0 : index
    %37 = vector.load %arg10[%c0_25, %c0_26] : memref<128x256xbf16, #tpu.memory_space<vmem>>, vector<128x256xbf16>
    %38 = arith.extf %37 : vector<128x256xbf16> to vector<128x256xf32>
    %cst_27 = arith.constant 5.000000e-02 : f32
    %39 = vector.broadcast %cst_27 : f32 to vector<128x256xf32>
    %40 = arith.mulf %38, %39 : vector<128x256xf32>
    %41 = arith.addf %36, %40 : vector<128x256xf32>
    %c0_28 = arith.constant 0 : index
    %c0_29 = arith.constant 0 : index
    %42 = vector.load %arg11[%c0_28, %c0_29] : memref<128x256xf32, #tpu.memory_space<vmem>>, vector<128x256xf32>
    tpu.vector_store %arg11[%c0_28, %c0_29], %41 {strides = array<i32>} : memref<128x256xf32, #tpu.memory_space<vmem>>, vector<128x256xf32>,
    return
  }
  func.func @transform_0(%arg0: i32) -> (i32, i32) {
    %c0_i32 = arith.constant 0 : i32
    %c0_i32_0 = arith.constant 0 : i32
    return %arg0, %c0_i32 : i32, i32
  }
  func.func @transform_1(%arg0: i32) -> (i32, i32) {
    %c0_i32 = arith.constant 0 : i32
    %c0_i32_0 = arith.constant 0 : i32
    %c0_i32_1 = arith.constant 0 : i32
    return %c0_i32, %c0_i32_0 : i32, i32
  }
  func.func @transform_2(%arg0: i32) -> (i32, i32) {
    %c0_i32 = arith.constant 0 : i32
    %c0_i32_0 = arith.constant 0 : i32
    %c0_i32_1 = arith.constant 0 : i32
    return %c0_i32, %c0_i32_0 : i32, i32
  }
  func.func @transform_3(%arg0: i32) -> (i32, i32) {
    %c0_i32 = arith.constant 0 : i32
    %c0_i32_0 = arith.constant 0 : i32
    %c0_i32_1 = arith.constant 0 : i32
    return %c0_i32, %c0_i32_0 : i32, i32
  }
  func.func @transform_4(%arg0: i32) -> (i32, i32) {
    %c0_i32 = arith.constant 0 : i32
    %c0_i32_0 = arith.constant 0 : i32
    %c0_i32_1 = arith.constant 0 : i32
    return %c0_i32, %c0_i32_0 : i32, i32
  }
  func.func @transform_5(%arg0: i32) -> (i32, i32) {
    %c0_i32 = arith.constant 0 : i32
    %c0_i32_0 = arith.constant 0 : i32
    %c0_i32_1 = arith.constant 0 : i32
    return %c0_i32, %c0_i32_0 : i32, i32
  }
  func.func @transform_6(%arg0: i32) -> (i32, i32) {
    %c0_i32 = arith.constant 0 : i32
    %c0_i32_0 = arith.constant 0 : i32
    %c0_i32_1 = arith.constant 0 : i32
    return %c0_i32, %c0_i32_0 : i32, i32
  }
  func.func @transform_7(%arg0: i32) -> (i32, i32) {
    %c0_i32 = arith.constant 0 : i32
    %c0_i32_0 = arith.constant 0 : i32
    return %arg0, %c0_i32 : i32, i32
  }
  func.func @transform_8(%arg0: i32) -> (i32, i32) {
    %c0_i32 = arith.constant 0 : i32
    %c0_i32_0 = arith.constant 0 : i32
    return %arg0, %c0_i32 : i32, i32
  }
  func.func @transform_9(%arg0: i32) -> (i32, i32) {
    %c0_i32 = arith.constant 0 : i32
    %c0_i32_0 = arith.constant 0 : i32
    return %arg0, %c0_i32 : i32, i32
  }
  func.func @transform_10(%arg0: i32) -> (i32, i32) {
    %c0_i32 = arith.constant 0 : i32
    %c0_i32_0 = arith.constant 0 : i32
    return %arg0, %c0_i32 : i32, i32
  }
}

</mosaic_0001>

<llo_original>
// kernel: tpu_custom_call.1
$region0: #{tpu_custom_call.1}
  #allocation0 [shape = 'u32[]', space=smem, size = 0x4, offset = 0x4, fixed_abs, tag = 'smem constant byte address 0x4 - core index']
  #allocation1 [shape = 'u32[144,128]{1,0:T(1,128)}', space=vmem, size = 0x12000, scoped, tag = 'internal scratch']
  %s0 = inlined_call_operand.hbm [shape: f32[256,256], index: 0, kind: input, shape index: {}]
  %s1 = inlined_call_operand.hbm [shape: bf16[256,512], index: 1, kind: input, shape index: {}]
  %s2 = inlined_call_operand.hbm [shape: f32[1,512], index: 2, kind: input, shape index: {}]
  %s3 = inlined_call_operand.hbm [shape: bf16[512,512], index: 3, kind: input, shape index: {}]
  %s4 = inlined_call_operand.vmem [shape: f32[1,512], index: 4, kind: input, shape index: {}]
  %s5 = inlined_call_operand.hbm [shape: bf16[512,256], index: 5, kind: input, shape index: {}]
  %s6 = inlined_call_operand.vmem [shape: f32[1,256], index: 6, kind: input, shape index: {}]
  %s7 = inlined_call_operand.hbm [shape: s8[256,512], index: 7, kind: input, shape index: {}]
  %s8 = inlined_call_operand.hbm [shape: s8[256,512], index: 8, kind: input, shape index: {}]
  %s9 = inlined_call_operand.hbm [shape: bf16[256,256], index: 9, kind: input, shape index: {}]
  %s10 = inlined_call_operand.hbm [shape: f32[256,256], index: 10, kind: output, shape index: {}]
  %s11 = sld [smem:[#allocation0]]
  $region105: #{tpu_custom_call.1} parent=0
    _
  %s13 = ssub.s32 1, %s11
  %s14 = scalar_select 0, %s13, %s11
  $region1: #{tpu_custom_call.1} parent=0
    #allocation2 [shape = 'u8[262144]{0}', space=vmem, size = 0x40000, scoped, tag = 'input window, operand 0']
    #allocation3 [shape = 's32[2]{0}', space=sflag, size = 0x8, scoped, tag = 'scoped memory for tpu_custom_call.1']
    #allocation4 [shape = 's32[2]{0}', space=sflag, size = 0x8, scoped, tag = 'scoped memory for tpu_custom_call.1']
    #allocation5 [shape = 'u8[262144]{0}', space=vmem, size = 0x40000, scoped, tag = 'input window, operand 1, single buffered']
    #allocation6 [shape = 's32[1]{0}', space=sflag, size = 0x4, scoped, tag = 'scoped memory for tpu_custom_call.1']
    #allocation7 [shape = 'u8[2048]{0}', space=vmem, size = 0x800, scoped, tag = 'input window, operand 2, single buffered']
    #allocation8 [shape = 'u8[524288]{0}', space=vmem, size = 0x80000, scoped, tag = 'input window, operand 3, single buffered']
    #allocation9 [shape = 's32[1]{0}', space=sflag, size = 0x4, scoped, tag = 'scoped memory for tpu_custom_call.1']
    #allocation10 [shape = 'u8[262144]{0}', space=vmem, size = 0x40000, scoped, tag = 'input window, operand 5, single buffered']
    #allocation11 [shape = 'u8[131072]{0}', space=vmem, size = 0x20000, scoped, tag = 'input window, operand 7']
    #allocation12 [shape = 's32[2]{0}', space=sflag, size = 0x8, scoped, tag = 'scoped memory for tpu_custom_call.1']
    #allocation13 [shape = 'u8[131072]{0}', space=vmem, size = 0x20000, scoped, tag = 'input window, operand 8']
    #allocation14 [shape = 'u8[131072]{0}', space=vmem, size = 0x20000, scoped, tag = 'input window, operand 9']
    #allocation15 [shape = 's32[2]{0}', space=sflag, size = 0x8, scoped, tag = 'scoped memory for tpu_custom_call.1']
    #allocation16 [shape = 'u8[262144]{0}', space=vmem, size = 0x40000, scoped, tag = 'output window, operand 0']
    %15 = vsyncpa [#allocation3], 0
    %s16 = scalar_lea.sflag [#allocation3], 1
    %17 = vsyncpa %s16, 0
    %18 = vsyncpa [#allocation6], 0
    %19 = vsyncpa [#allocation9], 0
    %20 = vsyncpa [#allocation12], 0
    %s21 = scalar_lea.sflag [#allocation12], 1
    %22 = vsyncpa %s21, 0
    %23 = vsyncpa [#allocation15], 0
    %s24 = scalar_lea.sflag [#allocation15], 1
    %25 = vsyncpa %s24, 0
    %26 = vsyncpa [#allocation4], 0
    %s27 = scalar_lea.sflag [#allocation4], 1
    %28 = vsyncpa %s27, 0
    loop: start=0, step=1, limit=4
    $region2: #{tpu_custom_call.1} parent=1 // loop_pre_header
      _
    $region3: #{tpu_custom_call.1} parent=1 // loop_header
      %s30 = sphi 0, %s34
      %p31 = scmp.ge.s32.totalorder %s30, 4
      %s40 = sphi 0, %s42
      %s43 = sphi 0, %s40
      %s44 = sphi 0, %s43
      %s60 = sphi 0, %s44
      %s64 = sphi 0, %s64
      %s66 = sphi 0, %s64
      %s67 = sphi 0, %s66
      %s81 = sphi 0, %s67
      %s85 = sphi 0, %s85
      %s87 = sphi 0, %s85
      %s88 = sphi 0, %s87
      %s102 = sphi 0, %s88
      %s106 = sphi 0, %s106
      %s108 = sphi 0, %s106
      %s109 = sphi 0, %s108
      %s123 = sphi 0, %s109
      %s127 = sphi 0, %s127
      %s129 = sphi 0, %s127
      %s130 = sphi 0, %s129
      %s144 = sphi 0, %s130
      %s148 = sphi 0, %s148
      %s150 = sphi 0, %s148
      %s151 = sphi 0, %s150
      %s165 = sphi 0, %s151
      %s169 = sphi 0, %s169
      %s171 = sphi 0, %s169
      %s172 = sphi 0, %s171
      %s186 = sphi 0, %s172
      %s192 = sphi 0, %s194
      %s195 = sphi 0, %s192
      %s196 = sphi 0, %s195
      %s212 = sphi 0, %s196
      %s218 = sphi 0, %s220
      %s221 = sphi 0, %s218
      %s222 = sphi 0, %s221
      %s238 = sphi 0, %s222
      %s244 = sphi 0, %s246
      %s247 = sphi 0, %s244
      %s248 = sphi 0, %s247
      %s264 = sphi 0, %s248
      %s270 = sphi 0, %s272
      %s273 = sphi 0, %s270
      %s274 = sphi 0, %s273
      %s290 = sphi 0, %s274
    $region4: #{tpu_custom_call.1} parent=1 // loop_header_branch
      %33 = sbr.rel (%p31) target = $region8
    $region5: #{tpu_custom_call.1} parent=1 // loop_body
      %s35 = ssub.s32 %s30, 1
      %s36 = ssub.s32 %s30, 2
      %s37 = sadd.s32 %s30, 1
      %s38 = ssub.s32 %s30, %s37
      %p39 = scmp.eq.s32.totalorder %s38, 0
      %s41 = sadd.s32 %s40, 1
      %s42 = scalar_select %p39, %s40, %s41
      %p45 = pneg %p39
      %p46 = scmp.eq.s32.totalorder %s30, 1
      %p47 = por %p45, %p46
      %p48 = scmp.ne.s32.totalorder %s40, %s43
      %p49 = scmp.eq.s32.totalorder %s30, 0
      %p50 = por %p48, %p49
      %p51 = scmp.ne.s32.totalorder %s40, %s43
      %p52 = scmp.eq.s32.totalorder %s35, 1
      %p53 = por %p51, %p52
      %p54 = scmp.ne.s32.totalorder %s43, %s44
      %p55 = scmp.eq.s32.totalorder %s35, 0
      %p56 = por %p54, %p55
      %p57 = scmp.ne.s32.totalorder %s43, %s44
      %p58 = scmp.eq.s32.totalorder %s36, 1
      %p59 = por %p57, %p58
      %p61 = scmp.ne.s32.totalorder %s44, %s60
      %p62 = scmp.eq.s32.totalorder %s36, 0
      %p63 = por %p61, %p62
      %s65 = sadd.s32 %s64, 1
      %p68 = scmp.eq.s32.totalorder %s30, 1
      %p69 = scmp.ne.s32.totalorder %s64, %s66
      %p70 = scmp.eq.s32.totalorder %s30, 0
      %p71 = por %p69, %p70
      %p72 = scmp.ne.s32.totalorder %s64, %s66
      %p73 = scmp.eq.s32.totalorder %s35, 1
      %p74 = por %p72, %p73
      %p75 = scmp.ne.s32.totalorder %s66, %s67
      %p76 = scmp.eq.s32.totalorder %s35, 0
      %p77 = por %p75, %p76
      %p78 = scmp.ne.s32.totalorder %s66, %s67
      %p79 = scmp.eq.s32.totalorder %s36, 1
      %p80 = por %p78, %p79
      %p82 = scmp.ne.s32.totalorder %s67, %s81
      %p83 = scmp.eq.s32.totalorder %s36, 0
      %p84 = por %p82, %p83
      %s86 = sadd.s32 %s85, 1
      %p89 = scmp.eq.s32.totalorder %s30, 1
      %p90 = scmp.ne.s32.totalorder %s85, %s87
      %p91 = scmp.eq.s32.totalorder %s30, 0
      %p92 = por %p90, %p91
      %p93 = scmp.ne.s32.totalorder %s85, %s87
      %p94 = scmp.eq.s32.totalorder %s35, 1
      %p95 = por %p93, %p94
      %p96 = scmp.ne.s32.totalorder %s87, %s88
      %p97 = scmp.eq.s32.totalorder %s35, 0
      %p98 = por %p96, %p97
      %p99 = scmp.ne.s32.totalorder %s87, %s88
      %p100 = scmp.eq.s32.totalorder %s36, 1
      %p101 = por %p99, %p100
      %p103 = scmp.ne.s32.totalorder %s88, %s102
      %p104 = scmp.eq.s32.totalorder %s36, 0
      %p105 = por %p103, %p104
      %s107 = sadd.s32 %s106, 1
      %p110 = scmp.eq.s32.totalorder %s30, 1
      %p111 = scmp.ne.s32.totalorder %s106, %s108
      %p112 = scmp.eq.s32.totalorder %s30, 0
      %p113 = por %p111, %p112
      %p114 = scmp.ne.s32.totalorder %s106, %s108
      %p115 = scmp.eq.s32.totalorder %s35, 1
      %p116 = por %p114, %p115
      %p117 = scmp.ne.s32.totalorder %s108, %s109
      %p118 = scmp.eq.s32.totalorder %s35, 0
      %p119 = por %p117, %p118
      %p120 = scmp.ne.s32.totalorder %s108, %s109
      %p121 = scmp.eq.s32.totalorder %s36, 1
      %p122 = por %p120, %p121
      %p124 = scmp.ne.s32.totalorder %s109, %s123
      %p125 = scmp.eq.s32.totalorder %s36, 0
      %p126 = por %p124, %p125
      %s128 = sadd.s32 %s127, 1
      %p131 = scmp.eq.s32.totalorder %s30, 1
      %p132 = scmp.ne.s32.totalorder %s127, %s129
      %p133 = scmp.eq.s32.totalorder %s30, 0
      %p134 = por %p132, %p133
      %p135 = scmp.ne.s32.totalorder %s127, %s129
      %p136 = scmp.eq.s32.totalorder %s35, 1
      %p137 = por %p135, %p136
      %p138 = scmp.ne.s32.totalorder %s129, %s130
      %p139 = scmp.eq.s32.totalorder %s35, 0
      %p140 = por %p138, %p139
      %p141 = scmp.ne.s32.totalorder %s129, %s130
      %p142 = scmp.eq.s32.totalorder %s36, 1
      %p143 = por %p141, %p142
      %p145 = scmp.ne.s32.totalorder %s130, %s144
      %p146 = scmp.eq.s32.totalorder %s36, 0
      %p147 = por %p145, %p146
      %s149 = sadd.s32 %s148, 1
      %p152 = scmp.eq.s32.totalorder %s30, 1
      %p153 = scmp.ne.s32.totalorder %s148, %s150
      %p154 = scmp.eq.s32.totalorder %s30, 0
      %p155 = por %p153, %p154
      %p156 = scmp.ne.s32.totalorder %s148, %s150
      %p157 = scmp.eq.s32.totalorder %s35, 1
      %p158 = por %p156, %p157
      %p159 = scmp.ne.s32.totalorder %s150, %s151
      %p160 = scmp.eq.s32.totalorder %s35, 0
      %p161 = por %p159, %p160
      %p162 = scmp.ne.s32.totalorder %s150, %s151
      %p163 = scmp.eq.s32.totalorder %s36, 1
      %p164 = por %p162, %p163
      %p166 = scmp.ne.s32.totalorder %s151, %s165
      %p167 = scmp.eq.s32.totalorder %s36, 0
      %p168 = por %p166, %p167
      %s170 = sadd.s32 %s169, 1
      %p173 = scmp.eq.s32.totalorder %s30, 1
      %p174 = scmp.ne.s32.totalorder %s169, %s171
      %p175 = scmp.eq.s32.totalorder %s30, 0
      %p176 = por %p174, %p175
      %p177 = scmp.ne.s32.totalorder %s169, %s171
      %p178 = scmp.eq.s32.totalorder %s35, 1
      %p179 = por %p177, %p178
      %p180 = scmp.ne.s32.totalorder %s171, %s172
      %p181 = scmp.eq.s32.totalorder %s35, 0
      %p182 = por %p180, %p181
      %p183 = scmp.ne.s32.totalorder %s171, %s172
      %p184 = scmp.eq.s32.totalorder %s36, 1
      %p185 = por %p183, %p184
      %p187 = scmp.ne.s32.totalorder %s172, %s186
      %p188 = scmp.eq.s32.totalorder %s36, 0
      %p189 = por %p187, %p188
      %s190 = ssub.s32 %s30, %s37
      %p191 = scmp.eq.s32.totalorder %s190, 0
      %s193 = sadd.s32 %s192, 1
      %s194 = scalar_select %p191, %s192, %s193
      %p197 = pneg %p191
      %p198 = scmp.eq.s32.totalorder %s30, 1
      %p199 = por %p197, %p198
      %p200 = scmp.ne.s32.totalorder %s192, %s195
      %p201 = scmp.eq.s32.totalorder %s30, 0
      %p202 = por %p200, %p201
      %p203 = scmp.ne.s32.totalorder %s192, %s195
      %p204 = scmp.eq.s32.totalorder %s35, 1
      %p205 = por %p203, %p204
      %p206 = scmp.ne.s32.totalorder %s195, %s196
      %p207 = scmp.eq.s32.totalorder %s35, 0
      %p208 = por %p206, %p207
      %p209 = scmp.ne.s32.totalorder %s195, %s196
      %p210 = scmp.eq.s32.totalorder %s36, 1
      %p211 = por %p209, %p210
      %p213 = scmp.ne.s32.totalorder %s196, %s212
      %p214 = scmp.eq.s32.totalorder %s36, 0
      %p215 = por %p213, %p214
      %s216 = ssub.s32 %s30, %s37
      %p217 = scmp.eq.s32.totalorder %s216, 0
      %s219 = sadd.s32 %s218, 1
      %s220 = scalar_select %p217, %s218, %s219
      %p223 = pneg %p217
      %p224 = scmp.eq.s32.totalorder %s30, 1
      %p225 = por %p223, %p224
      %p226 = scmp.ne.s32.totalorder %s218, %s221
      %p227 = scmp.eq.s32.totalorder %s30, 0
      %p228 = por %p226, %p227
      %p229 = scmp.ne.s32.totalorder %s218, %s221
      %p230 = scmp.eq.s32.totalorder %s35, 1
      %p231 = por %p229, %p230
      %p232 = scmp.ne.s32.totalorder %s221, %s222
      %p233 = scmp.eq.s32.totalorder %s35, 0
      %p234 = por %p232, %p233
      %p235 = scmp.ne.s32.totalorder %s221, %s222
      %p236 = scmp.eq.s32.totalorder %s36, 1
      %p237 = por %p235, %p236
      %p239 = scmp.ne.s32.totalorder %s222, %s238
      %p240 = scmp.eq.s32.totalorder %s36, 0
      %p241 = por %p239, %p240
      %s242 = ssub.s32 %s30, %s37
      %p243 = scmp.eq.s32.totalorder %s242, 0
      %s245 = sadd.s32 %s244, 1
      %s246 = scalar_select %p243, %s244, %s245
      %p249 = pneg %p243
      %p250 = scmp.eq.s32.totalorder %s30, 1
      %p251 = por %p249, %p250
      %p252 = scmp.ne.s32.totalorder %s244, %s247
      %p253 = scmp.eq.s32.totalorder %s30, 0
      %p254 = por %p252, %p253
      %p255 = scmp.ne.s32.totalorder %s244, %s247
      %p256 = scmp.eq.s32.totalorder %s35, 1
      %p257 = por %p255, %p256
      %p258 = scmp.ne.s32.totalorder %s247, %s248
      %p259 = scmp.eq.s32.totalorder %s35, 0
      %p260 = por %p258, %p259
      %p261 = scmp.ne.s32.totalorder %s247, %s248
      %p262 = scmp.eq.s32.totalorder %s36, 1
      %p263 = por %p261, %p262
      %p265 = scmp.ne.s32.totalorder %s248, %s264
      %p266 = scmp.eq.s32.totalorder %s36, 0
      %p267 = por %p265, %p266
      %s268 = ssub.s32 %s30, %s37
      %p269 = scmp.eq.s32.totalorder %s268, 0
      %s271 = sadd.s32 %s270, 1
      %s272 = scalar_select %p269, %s270, %s271
      %p275 = pneg %p269
      %p276 = scmp.eq.s32.totalorder %s30, 1
      %p277 = por %p275, %p276
      %p278 = scmp.ne.s32.totalorder %s270, %s273
      %p279 = scmp.eq.s32.totalorder %s30, 0
      %p280 = por %p278, %p279
      %p281 = scmp.ne.s32.totalorder %s270, %s273
      %p282 = scmp.eq.s32.totalorder %s35, 1
      %p283 = por %p281, %p282
      %p284 = scmp.ne.s32.totalorder %s273, %s274
      %p285 = scmp.eq.s32.totalorder %s35, 0
      %p286 = por %p284, %p285
      %p287 = scmp.ne.s32.totalorder %s273, %s274
      %p288 = scmp.eq.s32.totalorder %s36, 1
      %p289 = por %p287, %p288
      %p291 = scmp.ne.s32.totalorder %s274, %s290
      %p292 = scmp.eq.s32.totalorder %s36, 0
      %p293 = por %p291, %p292
      %p294 = scmp.le.s32.totalorder 1, %s30
      %p295 = scmp.lt.s32.totalorder %s30, 3
      %p296 = pnand %p294, %p295
      %p297 = pneg %p296
      // Predicated region
      $region9: #{tpu_custom_call.1} parent=5 // pred_check
        _
      $region10: #{tpu_custom_call.1} parent=5 // pred_check_branch
        %299 = sbr.rel (%p296) target = $region12
      $region11: #{tpu_custom_call.1} parent=5 // pred_region
        %s300 = ssub.s32 %s30, 1
        // Predicated region
        $region13: #{tpu_custom_call.1} parent=11 // pred_check
          %p301 = pneg %p77
        $region14: #{tpu_custom_call.1} parent=11 // pred_check_branch
          %303 = sbr.rel (%p301) target = $region16
        $region15: #{tpu_custom_call.1} parent=11 // pred_region
          %s305 = ssub.s32 8192, 8192
          %306 = vsyncadd [#allocation6], %s305
          %s307 = sshll.u32 [#allocation5], 4
          %s308 = int_to_ptr.vmem [resolvable:$true] %s307
          %313 = dma.hbm_to_vmem [thread:$0]  %s1, 8192, %s308, [#allocation6], 256, 256, 16
        $region16: #{tpu_custom_call.1} parent=11 // pred_fallthru
          _
        // Predicated region
        $region17: #{tpu_custom_call.1} parent=11 // pred_check
          %p314 = pneg %p98
        $region18: #{tpu_custom_call.1} parent=11 // pred_check_branch
          %316 = sbr.rel (%p314) target = $region20
        $region19: #{tpu_custom_call.1} parent=11 // pred_region
          %s318 = ssub.s32 64, 64
          %319 = vsyncadd [#allocation6], %s318
          %s321 = sshll.u32 [#allocation7], 4
          %s322 = int_to_ptr.vmem [resolvable:$true] %s321
          %324 = dma.hbm_to_vmem [thread:$0]  %s2, 64, %s322, [#allocation6]
        $region20: #{tpu_custom_call.1} parent=11 // pred_fallthru
          _
        // Predicated region
        $region21: #{tpu_custom_call.1} parent=11 // pred_check
          %p325 = pneg %p119
        $region22: #{tpu_custom_call.1} parent=11 // pred_check_branch
          %327 = sbr.rel (%p325) target = $region24
        $region23: #{tpu_custom_call.1} parent=11 // pred_region
          %s329 = ssub.s32 16384, 16384
          %330 = vsyncadd [#allocation9], %s329
          %s331 = sshll.u32 [#allocation8], 4
          %s332 = int_to_ptr.vmem [resolvable:$true] %s331
          %337 = dma.hbm_to_vmem [thread:$0]  %s3, 16384, %s332, [#allocation9], 256, 256, 16
        $region24: #{tpu_custom_call.1} parent=11 // pred_fallthru
          _
        // Predicated region
        $region25: #{tpu_custom_call.1} parent=11 // pred_check
          %p338 = pneg %p140
        $region26: #{tpu_custom_call.1} parent=11 // pred_check_branch
          %340 = sbr.rel (%p338) target = $region28
        $region27: #{tpu_custom_call.1} parent=11 // pred_region
          _
        $region28: #{tpu_custom_call.1} parent=11 // pred_fallthru
          _
        // Predicated region
        $region29: #{tpu_custom_call.1} parent=11 // pred_check
          %p341 = pneg %p161
        $region30: #{tpu_custom_call.1} parent=11 // pred_check_branch
          %343 = sbr.rel (%p341) target = $region32
        $region31: #{tpu_custom_call.1} parent=11 // pred_region
          %s345 = ssub.s32 8192, 8192
          %346 = vsyncadd [#allocation9], %s345
          %s347 = sshll.u32 [#allocation10], 4
          %s348 = int_to_ptr.vmem [resolvable:$true] %s347
          %353 = dma.hbm_to_vmem [thread:$0]  %s5, 8192, %s348, [#allocation9], 128, 128, 8
        $region32: #{tpu_custom_call.1} parent=11 // pred_fallthru
          _
        // Predicated region
        $region33: #{tpu_custom_call.1} parent=11 // pred_check
          %p354 = pneg %p182
        $region34: #{tpu_custom_call.1} parent=11 // pred_check_branch
          %356 = sbr.rel (%p354) target = $region36
        $region35: #{tpu_custom_call.1} parent=11 // pred_region
          _
        $region36: #{tpu_custom_call.1} parent=11 // pred_fallthru
          _
      $region12: #{tpu_custom_call.1} parent=5 // pred_fallthru
        _
      %p357 = scmp.lt.s32.totalorder %s30, 2
      // Predicated region
      $region37: #{tpu_custom_call.1} parent=5 // pred_check
        %p358 = pneg %p357
      $region38: #{tpu_custom_call.1} parent=5 // pred_check_branch
        %360 = sbr.rel (%p358) target = $region40
      $region39: #{tpu_custom_call.1} parent=5 // pred_region
        // Predicated region
        $region41: #{tpu_custom_call.1} parent=39 // pred_check
          %p361 = pneg %p50
        $region42: #{tpu_custom_call.1} parent=39 // pred_check_branch
          %363 = sbr.rel (%p361) target = $region44
        $region43: #{tpu_custom_call.1} parent=39 // pred_region
          %s364 = sand.u32 %s40, 1
          %s365 = scalar_lea.sflag [#allocation3], %s364
          %s366 = sand.u32 %s40, 1
          %s367 = smul.addr %s366, 256
          %s368 = scalar_lea.vmem [#allocation2], %s367
          %s369 = smul.u32 16, %s30
          %s371 = ssub.s32 4096, 4096
          %372 = vsyncadd %s365, %s371
          %s373 = smul.addr %s369, 2
          %s374 = smul.addr %s373, 128
          %s375 = scalar_lea.hbm %s0, %s374
          %s376 = sshll.u32 %s368, 4
          %s377 = int_to_ptr.vmem [resolvable:$true] %s376
          %382 = dma.hbm_to_vmem [thread:$0]  %s375, 4096, %s377, %s365, 256, 256, 16
        $region44: #{tpu_custom_call.1} parent=39 // pred_fallthru
          _
        // Predicated region
        $region45: #{tpu_custom_call.1} parent=39 // pred_check
          %p383 = pneg %p202
        $region46: #{tpu_custom_call.1} parent=39 // pred_check_branch
          %385 = sbr.rel (%p383) target = $region48
        $region47: #{tpu_custom_call.1} parent=39 // pred_region
          %s386 = sand.u32 %s30, 1
          %s387 = scalar_lea.sflag [#allocation12], %s386
          %s388 = sand.u32 %s192, 1
          %s389 = smul.addr %s388, 128
          %s390 = scalar_lea.vmem [#allocation11], %s389
          %s391 = smul.u32 4, %s30
          %s393 = ssub.s32 2048, 2048
          %394 = vsyncadd %s387, %s393
          %s395 = smul.addr %s391, 4
          %s396 = smul.addr %s395, 128
          %s397 = scalar_lea.hbm %s7, %s396
          %s398 = sshll.u32 %s390, 4
          %s399 = int_to_ptr.vmem [resolvable:$true] %s398
          %404 = dma.hbm_to_vmem [thread:$0]  %s397, 2048, %s399, %s387, 512, 512, 32
        $region48: #{tpu_custom_call.1} parent=39 // pred_fallthru
          _
        // Predicated region
        $region49: #{tpu_custom_call.1} parent=39 // pred_check
          %p405 = pneg %p228
        $region50: #{tpu_custom_call.1} parent=39 // pred_check_branch
          %407 = sbr.rel (%p405) target = $region52
        $region51: #{tpu_custom_call.1} parent=39 // pred_region
          %s408 = sand.u32 %s30, 1
          %s409 = scalar_lea.sflag [#allocation12], %s408
          %s410 = sand.u32 %s218, 1
          %s411 = smul.addr %s410, 128
          %s412 = scalar_lea.vmem [#allocation13], %s411
          %s413 = smul.u32 4, %s30
          %s415 = ssub.s32 2048, 2048
          %416 = vsyncadd %s409, %s415
          %s417 = smul.addr %s413, 4
          %s418 = smul.addr %s417, 128
          %s419 = scalar_lea.hbm %s8, %s418
          %s420 = sshll.u32 %s412, 4
          %s421 = int_to_ptr.vmem [resolvable:$true] %s420
          %426 = dma.hbm_to_vmem [thread:$0]  %s419, 2048, %s421, %s409, 512, 512, 32
        $region52: #{tpu_custom_call.1} parent=39 // pred_fallthru
          _
        // Predicated region
        $region53: #{tpu_custom_call.1} parent=39 // pred_check
          %p427 = pneg %p254
        $region54: #{tpu_custom_call.1} parent=39 // pred_check_branch
          %429 = sbr.rel (%p427) target = $region56
        $region55: #{tpu_custom_call.1} parent=39 // pred_region
          %s430 = sand.u32 %s244, 1
          %s431 = scalar_lea.sflag [#allocation15], %s430
          %s432 = sand.u32 %s244, 1
          %s433 = smul.addr %s432, 128
          %s434 = scalar_lea.vmem [#allocation14], %s433
          %s435 = smul.u32 16, %s30
          %s437 = ssub.s32 2048, 2048
          %438 = vsyncadd %s431, %s437
          %s439 = smul.addr %s435, 2
          %s440 = smul.addr %s439, 64
          %s441 = scalar_lea.hbm %s9, %s440
          %s442 = sshll.u32 %s434, 4
          %s443 = int_to_ptr.vmem [resolvable:$true] %s442
          %448 = dma.hbm_to_vmem [thread:$0]  %s441, 2048, %s443, %s431, 128, 128, 8
        $region56: #{tpu_custom_call.1} parent=39 // pred_fallthru
          _
      $region40: #{tpu_custom_call.1} parent=5 // pred_fallthru
        _
      %p449 = scmp.le.s32.totalorder 1, %s30
      %p450 = scmp.lt.s32.totalorder %s30, 3
      %p451 = pnand %p449, %p450
      %p452 = pneg %p451
      // Predicated region
      $region57: #{tpu_custom_call.1} parent=5 // pred_check
        _
      $region58: #{tpu_custom_call.1} parent=5 // pred_check_branch
        %454 = sbr.rel (%p451) target = $region60
      $region59: #{tpu_custom_call.1} parent=5 // pred_region
        %s455 = ssub.s32 %s30, 1
        %s456 = sand.u32 %s43, 1
        %s457 = scalar_lea.sflag [#allocation3], %s456
        %s458 = sand.u32 %s43, 1
        %s459 = smul.addr %s458, 256
        %s460 = scalar_lea.vmem [#allocation2], %s459
        // Predicated region
        $region61: #{tpu_custom_call.1} parent=59 // pred_check
          %p461 = pneg %p56
        $region62: #{tpu_custom_call.1} parent=59 // pred_check_branch
          %463 = sbr.rel (%p461) target = $region64
        $region63: #{tpu_custom_call.1} parent=59 // pred_region
          %464 = dma.done %s457, 4096
        $region64: #{tpu_custom_call.1} parent=59 // pred_fallthru
          _
        // Predicated region
        $region65: #{tpu_custom_call.1} parent=59 // pred_check
          %p465 = pneg %p77
        $region66: #{tpu_custom_call.1} parent=59 // pred_check_branch
          %467 = sbr.rel (%p465) target = $region68
        $region67: #{tpu_custom_call.1} parent=59 // pred_region
          %468 = dma.done [#allocation6], 8192
        $region68: #{tpu_custom_call.1} parent=59 // pred_fallthru
          _
        // Predicated region
        $region69: #{tpu_custom_call.1} parent=59 // pred_check
          %p469 = pneg %p98
        $region70: #{tpu_custom_call.1} parent=59 // pred_check_branch
          %471 = sbr.rel (%p469) target = $region72
        $region71: #{tpu_custom_call.1} parent=59 // pred_region
          %472 = dma.done [#allocation6], 64
        $region72: #{tpu_custom_call.1} parent=59 // pred_fallthru
          _
        // Predicated region
        $region73: #{tpu_custom_call.1} parent=59 // pred_check
          %p473 = pneg %p119
        $region74: #{tpu_custom_call.1} parent=59 // pred_check_branch
          %475 = sbr.rel (%p473) target = $region76
        $region75: #{tpu_custom_call.1} parent=59 // pred_region
          %476 = dma.done [#allocation9], 16384
        $region76: #{tpu_custom_call.1} parent=59 // pred_fallthru
          _
        // Predicated region
        $region77: #{tpu_custom_call.1} parent=59 // pred_check
          %p477 = pneg %p161
        $region78: #{tpu_custom_call.1} parent=59 // pred_check_branch
          %479 = sbr.rel (%p477) target = $region80
        $region79: #{tpu_custom_call.1} parent=59 // pred_region
          %480 = dma.done [#allocation9], 8192
        $region80: #{tpu_custom_call.1} parent=59 // pred_fallthru
          _
        %s481 = sand.u32 %s35, 1
        %s482 = scalar_lea.sflag [#allocation12], %s481
        %s483 = sand.u32 %s195, 1
        %s484 = smul.addr %s483, 128
        %s485 = scalar_lea.vmem [#allocation11], %s484
        // Predicated region
        $region81: #{tpu_custom_call.1} parent=59 // pred_check
          %p486 = pneg %p208
        $region82: #{tpu_custom_call.1} parent=59 // pred_check_branch
          %488 = sbr.rel (%p486) target = $region84
        $region83: #{tpu_custom_call.1} parent=59 // pred_region
          %489 = dma.done %s482, 2048
        $region84: #{tpu_custom_call.1} parent=59 // pred_fallthru
          _
        %s490 = sand.u32 %s35, 1
        %s491 = scalar_lea.sflag [#allocation12], %s490
        %s492 = sand.u32 %s221, 1
        %s493 = smul.addr %s492, 128
        %s494 = scalar_lea.vmem [#allocation13], %s493
        // Predicated region
        $region85: #{tpu_custom_call.1} parent=59 // pred_check
          %p495 = pneg %p234
        $region86: #{tpu_custom_call.1} parent=59 // pred_check_branch
          %497 = sbr.rel (%p495) target = $region88
        $region87: #{tpu_custom_call.1} parent=59 // pred_region
          %498 = dma.done %s491, 2048
        $region88: #{tpu_custom_call.1} parent=59 // pred_fallthru
          _
        %s499 = sand.u32 %s247, 1
        %s500 = scalar_lea.sflag [#allocation15], %s499
        %s501 = sand.u32 %s247, 1
        %s502 = smul.addr %s501, 128
        %s503 = scalar_lea.vmem [#allocation14], %s502
        // Predicated region
        $region89: #{tpu_custom_call.1} parent=59 // pred_check
          %p504 = pneg %p260
        $region90: #{tpu_custom_call.1} parent=59 // pred_check_branch
          %506 = sbr.rel (%p504) target = $region92
        $region91: #{tpu_custom_call.1} parent=59 // pred_region
          %507 = dma.done %s500, 2048
        $region92: #{tpu_custom_call.1} parent=59 // pred_fallthru
          _
        %s508 = sand.u32 %s43, 1
        %s509 = scalar_lea.sflag [#allocation3], %s508
        %s510 = sand.u32 %s43, 1
        %s511 = smul.addr %s510, 256
        %s512 = scalar_lea.vmem [#allocation2], %s511
        %p513 = pneg %p56
        %p514 = pneg %p53
        %p515 = pneg %p77
        %p516 = pneg %p74
        %p517 = pneg %p98
        %p518 = pneg %p95
        %p519 = pneg %p119
        %p520 = pneg %p116
        %p521 = pneg %p140
        %p522 = pneg %p137
        %p523 = pneg %p161
        %p524 = pneg %p158
        %p525 = pneg %p182
        %p526 = pneg %p179
        %s527 = sand.u32 %s35, 1
        %s528 = scalar_lea.sflag [#allocation12], %s527
        %s529 = sand.u32 %s195, 1
        %s530 = smul.addr %s529, 128
        %s531 = scalar_lea.vmem [#allocation11], %s530
        %p532 = pneg %p208
        %p533 = pneg %p205
        %s534 = sand.u32 %s35, 1
        %s535 = scalar_lea.sflag [#allocation12], %s534
        %s536 = sand.u32 %s221, 1
        %s537 = smul.addr %s536, 128
        %s538 = scalar_lea.vmem [#allocation13], %s537
        %p539 = pneg %p234
        %p540 = pneg %p231
        %s541 = sand.u32 %s247, 1
        %s542 = scalar_lea.sflag [#allocation15], %s541
        %s543 = sand.u32 %s247, 1
        %s544 = smul.addr %s543, 128
        %s545 = scalar_lea.vmem [#allocation14], %s544
        %p546 = pneg %p260
        %p547 = pneg %p257
        %p548 = pneg %p286
        %p549 = pneg %p283
        %s550 = sand.u32 %s273, 1
        %s551 = scalar_lea.sflag [#allocation4], %s550
        %s552 = sand.u32 %s273, 1
        %s553 = smul.addr %s552, 256
        %s554 = scalar_lea.vmem [#allocation16], %s553
        %s555 = smul.u32 16, %s35
        %s556 = smul.u32 4, %s35
        %s557 = smul.u32 4, %s35
        %s558 = smul.u32 16, %s35
        %s559 = smul.u32 16, %s35
        %v560 = vld [vmem:[%s460] sm:$0xff]
        %v561 = vld [vmem:[%s460 + $0x8] sm:$0xff]
        %v562 = vld [vmem:[%s460 + $0x10] sm:$0xff]
        %v563 = vld [vmem:[%s460 + $0x18] sm:$0xff]
        %v564 = vld [vmem:[%s460 + $0x20] sm:$0xff]
        %v565 = vld [vmem:[%s460 + $0x28] sm:$0xff]
        %v566 = vld [vmem:[%s460 + $0x30] sm:$0xff]
        %v567 = vld [vmem:[%s460 + $0x38] sm:$0xff]
        %v568 = vld [vmem:[%s460 + $0x40] sm:$0xff]
        %v569 = vld [vmem:[%s460 + $0x48] sm:$0xff]
        %v570 = vld [vmem:[%s460 + $0x50] sm:$0xff]
        %v571 = vld [vmem:[%s460 + $0x58] sm:$0xff]
        %v572 = vld [vmem:[%s460 + $0x60] sm:$0xff]
        %v573 = vld [vmem:[%s460 + $0x68] sm:$0xff]
        %v574 = vld [vmem:[%s460 + $0x70] sm:$0xff]
        %v575 = vld [vmem:[%s460 + $0x78] sm:$0xff]
        %v576 = vld [vmem:[%s460 + $0x80] sm:$0xff]
        %v577 = vld [vmem:[%s460 + $0x88] sm:$0xff]
        %v578 = vld [vmem:[%s460 + $0x90] sm:$0xff]
        %v579 = vld [vmem:[%s460 + $0x98] sm:$0xff]
        %v580 = vld [vmem:[%s460 + $0xa0] sm:$0xff]
        %v581 = vld [vmem:[%s460 + $0xa8] sm:$0xff]
        %v582 = vld [vmem:[%s460 + $0xb0] sm:$0xff]
        %v583 = vld [vmem:[%s460 + $0xb8] sm:$0xff]
        %v584 = vld [vmem:[%s460 + $0xc0] sm:$0xff]
        %v585 = vld [vmem:[%s460 + $0xc8] sm:$0xff]
        %v586 = vld [vmem:[%s460 + $0xd0] sm:$0xff]
        %v587 = vld [vmem:[%s460 + $0xd8] sm:$0xff]
        %v588 = vld [vmem:[%s460 + $0xe0] sm:$0xff]
        %v589 = vld [vmem:[%s460 + $0xe8] sm:$0xff]
        %v590 = vld [vmem:[%s460 + $0xf0] sm:$0xff]
        %v591 = vld [vmem:[%s460 + $0xf8] sm:$0xff]
        %v592 = vpack.c.bf16 %v562, %v560
        %v593 = vpack.c.bf16 %v563, %v561
        %v594 = vpack.c.bf16 %v566, %v564
        %v595 = vpack.c.bf16 %v567, %v565
        %v596 = vpack.c.bf16 %v570, %v568
        %v597 = vpack.c.bf16 %v571, %v569
        %v598 = vpack.c.bf16 %v574, %v572
        %v599 = vpack.c.bf16 %v575, %v573
        %v600 = vpack.c.bf16 %v578, %v576
        %v601 = vpack.c.bf16 %v579, %v577
        %v602 = vpack.c.bf16 %v582, %v580
        %v603 = vpack.c.bf16 %v583, %v581
        %v604 = vpack.c.bf16 %v586, %v584
        %v605 = vpack.c.bf16 %v587, %v585
        %v606 = vpack.c.bf16 %v590, %v588
        %v607 = vpack.c.bf16 %v591, %v589
        %v608 = vld [vmem:[#allocation5] sm:$0xff]
        %v609 = vld [vmem:[#allocation5 + $0x8] sm:$0xff]
        %v610 = vld [vmem:[#allocation5 + $0x10] sm:$0xff]
        %v611 = vld [vmem:[#allocation5 + $0x18] sm:$0xff]
        %v612 = vld [vmem:[#allocation5 + $0x20] sm:$0xff]
        %v613 = vld [vmem:[#allocation5 + $0x28] sm:$0xff]
        %v614 = vld [vmem:[#allocation5 + $0x30] sm:$0xff]
        %v615 = vld [vmem:[#allocation5 + $0x38] sm:$0xff]
        %v616 = vld [vmem:[#allocation5 + $0x40] sm:$0xff]
        %v617 = vld [vmem:[#allocation5 + $0x48] sm:$0xff]
        %v618 = vld [vmem:[#allocation5 + $0x50] sm:$0xff]
        %v619 = vld [vmem:[#allocation5 + $0x58] sm:$0xff]
        %v620 = vld [vmem:[#allocation5 + $0x60] sm:$0xff]
        %v621 = vld [vmem:[#allocation5 + $0x68] sm:$0xff]
        %v622 = vld [vmem:[#allocation5 + $0x70] sm:$0xff]
        %v623 = vld [vmem:[#allocation5 + $0x78] sm:$0xff]
        %v624 = vld [vmem:[#allocation5 + $0x80] sm:$0xff]
        %v625 = vld [vmem:[#allocation5 + $0x88] sm:$0xff]
        %v626 = vld [vmem:[#allocation5 + $0x90] sm:$0xff]
        %v627 = vld [vmem:[#allocation5 + $0x98] sm:$0xff]
        %v628 = vld [vmem:[#allocation5 + $0xa0] sm:$0xff]
        %v629 = vld [vmem:[#allocation5 + $0xa8] sm:$0xff]
        %v630 = vld [vmem:[#allocation5 + $0xb0] sm:$0xff]
        %v631 = vld [vmem:[#allocation5 + $0xb8] sm:$0xff]
        %v632 = vld [vmem:[#allocation5 + $0xc0] sm:$0xff]
        %v633 = vld [vmem:[#allocation5 + $0xc8] sm:$0xff]
        %v634 = vld [vmem:[#allocation5 + $0xd0] sm:$0xff]
        %v635 = vld [vmem:[#allocation5 + $0xd8] sm:$0xff]
        %v636 = vld [vmem:[#allocation5 + $0xe0] sm:$0xff]
        %v637 = vld [vmem:[#allocation5 + $0xe8] sm:$0xff]
        %v638 = vld [vmem:[#allocation5 + $0xf0] sm:$0xff]
        %v639 = vld [vmem:[#allocation5 + $0xf8] sm:$0xff]
        %v640 = vld [vmem:[#allocation5 + $0x100] sm:$0xff]
        %v641 = vld [vmem:[#allocation5 + $0x108] sm:$0xff]
        %v642 = vld [vmem:[#allocation5 + $0x110] sm:$0xff]
        %v643 = vld [vmem:[#allocation5 + $0x118] sm:$0xff]
        %v644 = vld [vmem:[#allocation5 + $0x120] sm:$0xff]
        %v645 = vld [vmem:[#allocation5 + $0x128] sm:$0xff]
        %v646 = vld [vmem:[#allocation5 + $0x130] sm:$0xff]
        %v647 = vld [vmem:[#allocation5 + $0x138] sm:$0xff]
        %v648 = vld [vmem:[#allocation5 + $0x140] sm:$0xff]
        %v649 = vld [vmem:[#allocation5 + $0x148] sm:$0xff]
        %v650 = vld [vmem:[#allocation5 + $0x150] sm:$0xff]
        %v651 = vld [vmem:[#allocation5 + $0x158] sm:$0xff]
        %v652 = vld [vmem:[#allocation5 + $0x160] sm:$0xff]
        %v653 = vld [vmem:[#allocation5 + $0x168] sm:$0xff]
        %v654 = vld [vmem:[#allocation5 + $0x170] sm:$0xff]
        %v655 = vld [vmem:[#allocation5 + $0x178] sm:$0xff]
        %v656 = vld [vmem:[#allocation5 + $0x180] sm:$0xff]
        %v657 = vld [vmem:[#allocation5 + $0x188] sm:$0xff]
        %v658 = vld [vmem:[#allocation5 + $0x190] sm:$0xff]
        %v659 = vld [vmem:[#allocation5 + $0x198] sm:$0xff]
        %v660 = vld [vmem:[#allocation5 + $0x1a0] sm:$0xff]
        %v661 = vld [vmem:[#allocation5 + $0x1a8] sm:$0xff]
        %v662 = vld [vmem:[#allocation5 + $0x1b0] sm:$0xff]
        %v663 = vld [vmem:[#allocation5 + $0x1b8] sm:$0xff]
        %v664 = vld [vmem:[#allocation5 + $0x1c0] sm:$0xff]
        %v665 = vld [vmem:[#allocation5 + $0x1c8] sm:$0xff]
        %v666 = vld [vmem:[#allocation5 + $0x1d0] sm:$0xff]
        %v667 = vld [vmem:[#allocation5 + $0x1d8] sm:$0xff]
        %v668 = vld [vmem:[#allocation5 + $0x1e0] sm:$0xff]
        %v669 = vld [vmem:[#allocation5 + $0x1e8] sm:$0xff]
        %v670 = vld [vmem:[#allocation5 + $0x1f0] sm:$0xff]
        %v671 = vld [vmem:[#allocation5 + $0x1f8] sm:$0xff]
        %v672 = vld [vmem:[#allocation7] sm:$0xf]
        %v674 = vlaneseq
        %v675 = vshrl.u32 %v674, 7
        %v676 = vsub.s32 0, %v675
        %v677 = vrot.slane %v672, %v676
        %v678 = vlaneseq
        %v679 = vshrl.u32 %v678, 7
        %v680 = vsub.s32 1, %v679
        %v681 = vrot.slane %v672, %v680
        %v682 = vlaneseq
        %v683 = vshrl.u32 %v682, 7
        %v684 = vsub.s32 2, %v683
        %v685 = vrot.slane %v672, %v684
        %v686 = vlaneseq
        %v687 = vshrl.u32 %v686, 7
        %v688 = vsub.s32 3, %v687
        %v689 = vrot.slane %v672, %v688
        %v758 = vunpack.c.l.b16 %v608
        %v759 = vunpack.c.h.b16 %v608
        %v760 = vunpack.c.l.b16 %v609
        %v761 = vunpack.c.h.b16 %v609
        %v762 = vunpack.c.l.b16 %v610
        %v763 = vunpack.c.h.b16 %v610
        %v764 = vunpack.c.l.b16 %v611
        %v765 = vunpack.c.h.b16 %v611
        %v766 = vunpack.c.l.b16 %v612
        %v767 = vunpack.c.h.b16 %v612
        %v768 = vunpack.c.l.b16 %v613
        %v769 = vunpack.c.h.b16 %v613
        %v770 = vunpack.c.l.b16 %v614
        %v771 = vunpack.c.h.b16 %v614
        %v772 = vunpack.c.l.b16 %v615
        %v773 = vunpack.c.h.b16 %v615
        %v774 = vunpack.c.l.b16 %v616
        %v775 = vunpack.c.h.b16 %v616
        %v776 = vunpack.c.l.b16 %v617
        %v777 = vunpack.c.h.b16 %v617
        %v778 = vunpack.c.l.b16 %v618
        %v779 = vunpack.c.h.b16 %v618
        %v780 = vunpack.c.l.b16 %v619
        %v781 = vunpack.c.h.b16 %v619
        %v782 = vunpack.c.l.b16 %v620
        %v783 = vunpack.c.h.b16 %v620
        %v784 = vunpack.c.l.b16 %v621
        %v785 = vunpack.c.h.b16 %v621
        %v786 = vunpack.c.l.b16 %v622
        %v787 = vunpack.c.h.b16 %v622
        %v788 = vunpack.c.l.b16 %v623
        %v789 = vunpack.c.h.b16 %v623
        %v790 = vunpack.c.l.b16 %v624
        %v791 = vunpack.c.h.b16 %v624
        %v792 = vunpack.c.l.b16 %v625
        %v793 = vunpack.c.h.b16 %v625
        %v794 = vunpack.c.l.b16 %v626
        %v795 = vunpack.c.h.b16 %v626
        %v796 = vunpack.c.l.b16 %v627
        %v797 = vunpack.c.h.b16 %v627
        %v798 = vunpack.c.l.b16 %v628
        %v799 = vunpack.c.h.b16 %v628
        %v800 = vunpack.c.l.b16 %v629
        %v801 = vunpack.c.h.b16 %v629
        %v802 = vunpack.c.l.b16 %v630
        %v803 = vunpack.c.h.b16 %v630
        %v804 = vunpack.c.l.b16 %v631
        %v805 = vunpack.c.h.b16 %v631
        %v806 = vunpack.c.l.b16 %v632
        %v807 = vunpack.c.h.b16 %v632
        %v808 = vunpack.c.l.b16 %v633
        %v809 = vunpack.c.h.b16 %v633
        %v810 = vunpack.c.l.b16 %v634
        %v811 = vunpack.c.h.b16 %v634
        %v812 = vunpack.c.l.b16 %v635
        %v813 = vunpack.c.h.b16 %v635
        %v814 = vunpack.c.l.b16 %v636
        %v815 = vunpack.c.h.b16 %v636
        %v816 = vunpack.c.l.b16 %v637
        %v817 = vunpack.c.h.b16 %v637
        %v818 = vunpack.c.l.b16 %v638
        %v819 = vunpack.c.h.b16 %v638
        %v820 = vunpack.c.l.b16 %v639
        %v821 = vunpack.c.h.b16 %v639
        %v822 = vunpack.c.l.b16 %v640
        %v823 = vunpack.c.h.b16 %v640
        %v824 = vunpack.c.l.b16 %v641
        %v825 = vunpack.c.h.b16 %v641
        %v826 = vunpack.c.l.b16 %v642
        %v827 = vunpack.c.h.b16 %v642
        %v828 = vunpack.c.l.b16 %v643
        %v829 = vunpack.c.h.b16 %v643
        %v830 = vunpack.c.l.b16 %v644
        %v831 = vunpack.c.h.b16 %v644
        %v832 = vunpack.c.l.b16 %v645
        %v833 = vunpack.c.h.b16 %v645
        %v834 = vunpack.c.l.b16 %v646
        %v835 = vunpack.c.h.b16 %v646
        %v836 = vunpack.c.l.b16 %v647
        %v837 = vunpack.c.h.b16 %v647
        %v838 = vunpack.c.l.b16 %v648
        %v839 = vunpack.c.h.b16 %v648
        %v840 = vunpack.c.l.b16 %v649
        %v841 = vunpack.c.h.b16 %v649
        %v842 = vunpack.c.l.b16 %v650
        %v843 = vunpack.c.h.b16 %v650
        %v844 = vunpack.c.l.b16 %v651
        %v845 = vunpack.c.h.b16 %v651
        %v846 = vunpack.c.l.b16 %v652
        %v847 = vunpack.c.h.b16 %v652
        %v848 = vunpack.c.l.b16 %v653
        %v849 = vunpack.c.h.b16 %v653
        %v850 = vunpack.c.l.b16 %v654
        %v851 = vunpack.c.h.b16 %v654
        %v852 = vunpack.c.l.b16 %v655
        %v853 = vunpack.c.h.b16 %v655
        %v854 = vunpack.c.l.b16 %v656
        %v855 = vunpack.c.h.b16 %v656
        %v856 = vunpack.c.l.b16 %v657
        %v857 = vunpack.c.h.b16 %v657
        %v858 = vunpack.c.l.b16 %v658
        %v859 = vunpack.c.h.b16 %v658
        %v860 = vunpack.c.l.b16 %v659
        %v861 = vunpack.c.h.b16 %v659
        %v862 = vunpack.c.l.b16 %v660
        %v863 = vunpack.c.h.b16 %v660
        %v864 = vunpack.c.l.b16 %v661
        %v865 = vunpack.c.h.b16 %v661
        %v866 = vunpack.c.l.b16 %v662
        %v867 = vunpack.c.h.b16 %v662
        %v868 = vunpack.c.l.b16 %v663
        %v869 = vunpack.c.h.b16 %v663
        %v870 = vunpack.c.l.b16 %v664
        %v871 = vunpack.c.h.b16 %v664
        %v872 = vunpack.c.l.b16 %v665
        %v873 = vunpack.c.h.b16 %v665
        %v874 = vunpack.c.l.b16 %v666
        %v875 = vunpack.c.h.b16 %v666
        %v876 = vunpack.c.l.b16 %v667
        %v877 = vunpack.c.h.b16 %v667
        %v878 = vunpack.c.l.b16 %v668
        %v879 = vunpack.c.h.b16 %v668
        %v880 = vunpack.c.l.b16 %v669
        %v881 = vunpack.c.h.b16 %v669
        %v882 = vunpack.c.l.b16 %v670
        %v883 = vunpack.c.h.b16 %v670
        %v884 = vunpack.c.l.b16 %v671
        %v885 = vunpack.c.h.b16 %v671
        %v886 = vpack.c.b16 %v762, %v758
        %v887 = vpack.c.b16 %v763, %v759
        %v888 = vpack.c.b16 %v764, %v760
        %v889 = vpack.c.b16 %v765, %v761
        %v890 = vpack.c.b16 %v770, %v766
        %v891 = vpack.c.b16 %v771, %v767
        %v892 = vpack.c.b16 %v772, %v768
        %v893 = vpack.c.b16 %v773, %v769
        %v894 = vpack.c.b16 %v778, %v774
        %v895 = vpack.c.b16 %v779, %v775
        %v896 = vpack.c.b16 %v780, %v776
        %v897 = vpack.c.b16 %v781, %v777
        %v898 = vpack.c.b16 %v786, %v782
        %v899 = vpack.c.b16 %v787, %v783
        %v900 = vpack.c.b16 %v788, %v784
        %v901 = vpack.c.b16 %v789, %v785
        %v902 = vpack.c.b16 %v794, %v790
        %v903 = vpack.c.b16 %v795, %v791
        %v904 = vpack.c.b16 %v796, %v792
        %v905 = vpack.c.b16 %v797, %v793
        %v906 = vpack.c.b16 %v802, %v798
        %v907 = vpack.c.b16 %v803, %v799
        %v908 = vpack.c.b16 %v804, %v800
        %v909 = vpack.c.b16 %v805, %v801
        %v910 = vpack.c.b16 %v810, %v806
        %v911 = vpack.c.b16 %v811, %v807
        %v912 = vpack.c.b16 %v812, %v808
        %v913 = vpack.c.b16 %v813, %v809
        %v914 = vpack.c.b16 %v818, %v814
        %v915 = vpack.c.b16 %v819, %v815
        %v916 = vpack.c.b16 %v820, %v816
        %v917 = vpack.c.b16 %v821, %v817
        %v918 = vpack.c.b16 %v826, %v822
        %v919 = vpack.c.b16 %v827, %v823
        %v920 = vpack.c.b16 %v828, %v824
        %v921 = vpack.c.b16 %v829, %v825
        %v922 = vpack.c.b16 %v834, %v830
        %v923 = vpack.c.b16 %v835, %v831
        %v924 = vpack.c.b16 %v836, %v832
        %v925 = vpack.c.b16 %v837, %v833
        %v926 = vpack.c.b16 %v842, %v838
        %v927 = vpack.c.b16 %v843, %v839
        %v928 = vpack.c.b16 %v844, %v840
        %v929 = vpack.c.b16 %v845, %v841
        %v930 = vpack.c.b16 %v850, %v846
        %v931 = vpack.c.b16 %v851, %v847
        %v932 = vpack.c.b16 %v852, %v848
        %v933 = vpack.c.b16 %v853, %v849
        %v934 = vpack.c.b16 %v858, %v854
        %v935 = vpack.c.b16 %v859, %v855
        %v936 = vpack.c.b16 %v860, %v856
        %v937 = vpack.c.b16 %v861, %v857
        %v938 = vpack.c.b16 %v866, %v862
        %v939 = vpack.c.b16 %v867, %v863
        %v940 = vpack.c.b16 %v868, %v864
        %v941 = vpack.c.b16 %v869, %v865
        %v942 = vpack.c.b16 %v874, %v870
        %v943 = vpack.c.b16 %v875, %v871
        %v944 = vpack.c.b16 %v876, %v872
        %v945 = vpack.c.b16 %v877, %v873
        %v946 = vpack.c.b16 %v882, %v878
        %v947 = vpack.c.b16 %v883, %v879
        %v948 = vpack.c.b16 %v884, %v880
        %v949 = vpack.c.b16 %v885, %v881
        %1014 = vmatprep.subr.bf16.mxu0 %v915
        %1015 = vmatpush1.bf16.msra.mxu0 %v914
        %1016 = vmatprep.subr.bf16.mxu0 %v911
        %1017 = vmatpush1.bf16.msra.mxu0 %v910
        %1018 = vmatprep.subr.bf16.mxu0 %v907
        %1019 = vmatpush1.bf16.msra.mxu0 %v906
        %1020 = vmatprep.subr.bf16.mxu0 %v903
        %1021 = vmatpush1.bf16.msra.mxu0 %v902
        %1022 = vmatprep.subr.bf16.mxu0 %v899
        %1023 = vmatpush1.bf16.msra.mxu0 %v898
        %1024 = vmatprep.subr.bf16.mxu0 %v895
        %1025 = vmatpush1.bf16.msra.mxu0 %v894
        %1026 = vmatprep.subr.bf16.mxu0 %v891
        %1027 = vmatpush1.bf16.msra.mxu0 %v890
        %1028 = vmatprep.subr.bf16.mxu0 %v887
        %1029 = vmatpush1.bf16.msra.mxu0 %v886
        %1030 = vmatprep.subr.bf16.mxu0 %v947
        %1031 = vmatpush2.bf16.msra.mxu0 %v946
        %1032 = vmatprep.subr.bf16.mxu0 %v943
        %1033 = vmatpush2.bf16.msra.mxu0 %v942
        %1034 = vmatprep.subr.bf16.mxu0 %v939
        %1035 = vmatpush2.bf16.msra.mxu0 %v938
        %1036 = vmatprep.subr.bf16.mxu0 %v935
        %1037 = vmatpush2.bf16.msra.mxu0 %v934
        %1038 = vmatprep.subr.bf16.mxu0 %v931
        %1039 = vmatpush2.bf16.msra.mxu0 %v930
        %1040 = vmatprep.subr.bf16.mxu0 %v927
        %1041 = vmatpush2.bf16.msra.mxu0 %v926
        %1042 = vmatprep.subr.bf16.mxu0 %v923
        %1043 = vmatpush2.bf16.msra.mxu0 %v922
        %1044 = vmatprep.subr.bf16.mxu0 %v919
        %1045 = vmatpush2.bf16.msra.mxu0 %v918
        %1046 = vmatprep.mubr.bf16.mxu0 %v593
        %1047 = vmatmul.mubr.bf16.gmra.mxu0 %v592
        %v1048 = vpop.f32.mrf.mxu0
        %v1049 = vadd.f32 %v677, %v1048
        %v1050 = vpop.f32.mrf.mxu0
        %v1051 = vadd.f32 %v681, %v1050
        %v1052 = vpop.f32.mrf.mxu0
        %v1053 = vadd.f32 %v677, %v1052
        %v1054 = vpop.f32.mrf.mxu0
        %v1055 = vadd.f32 %v681, %v1054
        %1056 = vmatprep.mubr.bf16.mxu0 %v595
        %1057 = vmatmul.mubr.bf16.gmra.mxu0 %v594
        %v1058 = vpop.f32.mrf.mxu0
        %v1059 = vadd.f32 %v677, %v1058
        %v1060 = vpop.f32.mrf.mxu0
        %v1061 = vadd.f32 %v681, %v1060
        %v1062 = vpop.f32.mrf.mxu0
        %v1063 = vadd.f32 %v677, %v1062
        %v1064 = vpop.f32.mrf.mxu0
        %v1065 = vadd.f32 %v681, %v1064
        %1066 = vmatprep.mubr.bf16.mxu0 %v597
        %1067 = vmatmul.mubr.bf16.gmra.mxu0 %v596
        %v1068 = vpop.f32.mrf.mxu0
        %v1069 = vadd.f32 %v677, %v1068
        %v1070 = vpop.f32.mrf.mxu0
        %v1071 = vadd.f32 %v681, %v1070
        %v1072 = vpop.f32.mrf.mxu0
        %v1073 = vadd.f32 %v677, %v1072
        %v1074 = vpop.f32.mrf.mxu0
        %v1075 = vadd.f32 %v681, %v1074
        %1076 = vmatprep.mubr.bf16.mxu0 %v599
        %1077 = vmatmul.mubr.bf16.gmra.mxu0 %v598
        %v1078 = vpop.f32.mrf.mxu0
        %v1079 = vadd.f32 %v677, %v1078
        %v1080 = vpop.f32.mrf.mxu0
        %v1081 = vadd.f32 %v681, %v1080
        %v1082 = vpop.f32.mrf.mxu0
        %v1083 = vadd.f32 %v677, %v1082
        %v1084 = vpop.f32.mrf.mxu0
        %v1085 = vadd.f32 %v681, %v1084
        %1086 = vmatprep.mubr.bf16.mxu0 %v601
        %1087 = vmatmul.mubr.bf16.gmra.mxu0 %v600
        %v1088 = vpop.f32.mrf.mxu0
        %v1089 = vadd.f32 %v677, %v1088
        %v1090 = vpop.f32.mrf.mxu0
        %v1091 = vadd.f32 %v681, %v1090
        %v1092 = vpop.f32.mrf.mxu0
        %v1093 = vadd.f32 %v677, %v1092
        %v1094 = vpop.f32.mrf.mxu0
        %v1095 = vadd.f32 %v681, %v1094
        %1096 = vmatprep.mubr.bf16.mxu0 %v603
        %1097 = vmatmul.mubr.bf16.gmra.mxu0 %v602
        %v1098 = vpop.f32.mrf.mxu0
        %v1099 = vadd.f32 %v677, %v1098
        %v1100 = vpop.f32.mrf.mxu0
        %v1101 = vadd.f32 %v681, %v1100
        %v1102 = vpop.f32.mrf.mxu0
        %v1103 = vadd.f32 %v677, %v1102
        %v1104 = vpop.f32.mrf.mxu0
        %v1105 = vadd.f32 %v681, %v1104
        %1106 = vmatprep.mubr.bf16.mxu0 %v605
        %1107 = vmatmul.mubr.bf16.gmra.mxu0 %v604
        %v1108 = vpop.f32.mrf.mxu0
        %v1109 = vadd.f32 %v677, %v1108
        %v1110 = vpop.f32.mrf.mxu0
        %v1111 = vadd.f32 %v681, %v1110
        %v1112 = vpop.f32.mrf.mxu0
        %v1113 = vadd.f32 %v677, %v1112
        %v1114 = vpop.f32.mrf.mxu0
        %v1115 = vadd.f32 %v681, %v1114
        %1116 = vmatprep.mubr.bf16.mxu0 %v607
        %1117 = vmatmul.mubr.bf16.gmra.mxu0 %v606
        %v1118 = vpop.f32.mrf.mxu0
        %v1119 = vadd.f32 %v677, %v1118
        %v1120 = vpop.f32.mrf.mxu0
        %v1121 = vadd.f32 %v681, %v1120
        %v1122 = vpop.f32.mrf.mxu0
        %v1123 = vadd.f32 %v677, %v1122
        %v1124 = vpop.f32.mrf.mxu0
        %v1125 = vadd.f32 %v681, %v1124
        %1126 = vdwg.mxu0
        %1127 = vmatprep.subr.bf16.mxu0 %v917
        %1128 = vmatpush1.bf16.msra.mxu0 %v916
        %1129 = vmatprep.subr.bf16.mxu0 %v913
        %1130 = vmatpush1.bf16.msra.mxu0 %v912
        %1131 = vmatprep.subr.bf16.mxu0 %v909
        %1132 = vmatpush1.bf16.msra.mxu0 %v908
        %1133 = vmatprep.subr.bf16.mxu0 %v905
        %1134 = vmatpush1.bf16.msra.mxu0 %v904
        %1135 = vmatprep.subr.bf16.mxu0 %v901
        %1136 = vmatpush1.bf16.msra.mxu0 %v900
        %1137 = vmatprep.subr.bf16.mxu0 %v897
        %1138 = vmatpush1.bf16.msra.mxu0 %v896
        %1139 = vmatprep.subr.bf16.mxu0 %v893
        %1140 = vmatpush1.bf16.msra.mxu0 %v892
        %1141 = vmatprep.subr.bf16.mxu0 %v889
        %1142 = vmatpush1.bf16.msra.mxu0 %v888
        %1143 = vmatprep.subr.bf16.mxu0 %v949
        %1144 = vmatpush2.bf16.msra.mxu0 %v948
        %1145 = vmatprep.subr.bf16.mxu0 %v945
        %1146 = vmatpush2.bf16.msra.mxu0 %v944
        %1147 = vmatprep.subr.bf16.mxu0 %v941
        %1148 = vmatpush2.bf16.msra.mxu0 %v940
        %1149 = vmatprep.subr.bf16.mxu0 %v937
        %1150 = vmatpush2.bf16.msra.mxu0 %v936
        %1151 = vmatprep.subr.bf16.mxu0 %v933
        %1152 = vmatpush2.bf16.msra.mxu0 %v932
        %1153 = vmatprep.subr.bf16.mxu0 %v929
        %1154 = vmatpush2.bf16.msra.mxu0 %v928
        %1155 = vmatprep.subr.bf16.mxu0 %v925
        %1156 = vmatpush2.bf16.msra.mxu0 %v924
        %1157 = vmatprep.subr.bf16.mxu0 %v921
        %1158 = vmatpush2.bf16.msra.mxu0 %v920
        %1159 = vmatprep.mubr.bf16.mxu0 %v593
        %1160 = vmatmul.mubr.bf16.gmra.mxu0 %v592
        %v1161 = vpop.f32.mrf.mxu0
        %v1162 = vadd.f32 %v685, %v1161
        %v1163 = vpop.f32.mrf.mxu0
        %v1164 = vadd.f32 %v689, %v1163
        %v1165 = vpop.f32.mrf.mxu0
        %v1166 = vadd.f32 %v685, %v1165
        %v1167 = vpop.f32.mrf.mxu0
        %v1168 = vadd.f32 %v689, %v1167
        %1169 = vmatprep.mubr.bf16.mxu0 %v595
        %1170 = vmatmul.mubr.bf16.gmra.mxu0 %v594
        %v1171 = vpop.f32.mrf.mxu0
        %v1172 = vadd.f32 %v685, %v1171
        %v1173 = vpop.f32.mrf.mxu0
        %v1174 = vadd.f32 %v689, %v1173
        %v1175 = vpop.f32.mrf.mxu0
        %v1176 = vadd.f32 %v685, %v1175
        %v1177 = vpop.f32.mrf.mxu0
        %v1178 = vadd.f32 %v689, %v1177
        %1179 = vmatprep.mubr.bf16.mxu0 %v597
        %1180 = vmatmul.mubr.bf16.gmra.mxu0 %v596
        %v1181 = vpop.f32.mrf.mxu0
        %v1182 = vadd.f32 %v685, %v1181
        %v1183 = vpop.f32.mrf.mxu0
        %v1184 = vadd.f32 %v689, %v1183
        %v1185 = vpop.f32.mrf.mxu0
        %v1186 = vadd.f32 %v685, %v1185
        %v1187 = vpop.f32.mrf.mxu0
        %v1188 = vadd.f32 %v689, %v1187
        %1189 = vmatprep.mubr.bf16.mxu0 %v599
        %1190 = vmatmul.mubr.bf16.gmra.mxu0 %v598
        %v1191 = vpop.f32.mrf.mxu0
        %v1192 = vadd.f32 %v685, %v1191
        %v1193 = vpop.f32.mrf.mxu0
        %v1194 = vadd.f32 %v689, %v1193
        %v1195 = vpop.f32.mrf.mxu0
        %v1196 = vadd.f32 %v685, %v1195
        %v1197 = vpop.f32.mrf.mxu0
        %v1198 = vadd.f32 %v689, %v1197
        %1199 = vmatprep.mubr.bf16.mxu0 %v601
        %1200 = vmatmul.mubr.bf16.gmra.mxu0 %v600
        %v1201 = vpop.f32.mrf.mxu0
        %v1202 = vadd.f32 %v685, %v1201
        %v1203 = vpop.f32.mrf.mxu0
        %v1204 = vadd.f32 %v689, %v1203
        %v1205 = vpop.f32.mrf.mxu0
        %v1206 = vadd.f32 %v685, %v1205
        %v1207 = vpop.f32.mrf.mxu0
        %v1208 = vadd.f32 %v689, %v1207
        %1209 = vmatprep.mubr.bf16.mxu0 %v603
        %1210 = vmatmul.mubr.bf16.gmra.mxu0 %v602
        %v1211 = vpop.f32.mrf.mxu0
        %v1212 = vadd.f32 %v685, %v1211
        %v1213 = vpop.f32.mrf.mxu0
        %v1214 = vadd.f32 %v689, %v1213
        %v1215 = vpop.f32.mrf.mxu0
        %v1216 = vadd.f32 %v685, %v1215
        %v1217 = vpop.f32.mrf.mxu0
        %v1218 = vadd.f32 %v689, %v1217
        %1219 = vmatprep.mubr.bf16.mxu0 %v605
        %1220 = vmatmul.mubr.bf16.gmra.mxu0 %v604
        %v1221 = vpop.f32.mrf.mxu0
        %v1222 = vadd.f32 %v685, %v1221
        %v1223 = vpop.f32.mrf.mxu0
        %v1224 = vadd.f32 %v689, %v1223
        %v1225 = vpop.f32.mrf.mxu0
        %v1226 = vadd.f32 %v685, %v1225
        %v1227 = vpop.f32.mrf.mxu0
        %v1228 = vadd.f32 %v689, %v1227
        %1229 = vmatprep.mubr.bf16.mxu0 %v607
        %1230 = vmatmul.mubr.bf16.gmra.mxu0 %v606
        %v1231 = vpop.f32.mrf.mxu0
        %v1232 = vadd.f32 %v685, %v1231
        %v1233 = vpop.f32.mrf.mxu0
        %v1234 = vadd.f32 %v689, %v1233
        %v1235 = vpop.f32.mrf.mxu0
        %v1236 = vadd.f32 %v685, %v1235
        %v1237 = vpop.f32.mrf.mxu0
        %v1238 = vadd.f32 %v689, %v1237
        %1239 = vdwg.mxu0
        %v1240 = vmax.f32 %v1049, 0.0
        %v1241 = vmax.f32 %v1051, 0.0
        %v1242 = vmax.f32 %v1162, 0.0
        %v1243 = vmax.f32 %v1164, 0.0
        %v1244 = vmax.f32 %v1053, 0.0
        %v1245 = vmax.f32 %v1055, 0.0
        %v1246 = vmax.f32 %v1166, 0.0
        %v1247 = vmax.f32 %v1168, 0.0
        %v1248 = vmax.f32 %v1059, 0.0
        %v1249 = vmax.f32 %v1061, 0.0
        %v1250 = vmax.f32 %v1172, 0.0
        %v1251 = vmax.f32 %v1174, 0.0
        %v1252 = vmax.f32 %v1063, 0.0
        %v1253 = vmax.f32 %v1065, 0.0
        %v1254 = vmax.f32 %v1176, 0.0
        %v1255 = vmax.f32 %v1178, 0.0
        %v1256 = vmax.f32 %v1069, 0.0
        %v1257 = vmax.f32 %v1071, 0.0
        %v1258 = vmax.f32 %v1182, 0.0
        %v1259 = vmax.f32 %v1184, 0.0
        %v1260 = vmax.f32 %v1073, 0.0
        %v1261 = vmax.f32 %v1075, 0.0
        %v1262 = vmax.f32 %v1186, 0.0
        %v1263 = vmax.f32 %v1188, 0.0
        %v1264 = vmax.f32 %v1079, 0.0
        %v1265 = vmax.f32 %v1081, 0.0
        %v1266 = vmax.f32 %v1192, 0.0
        %v1267 = vmax.f32 %v1194, 0.0
        %v1268 = vmax.f32 %v1083, 0.0
        %v1269 = vmax.f32 %v1085, 0.0
        %v1270 = vmax.f32 %v1196, 0.0
        %v1271 = vmax.f32 %v1198, 0.0
        %v1272 = vmax.f32 %v1089, 0.0
        %v1273 = vmax.f32 %v1091, 0.0
        %v1274 = vmax.f32 %v1202, 0.0
        %v1275 = vmax.f32 %v1204, 0.0
        %v1276 = vmax.f32 %v1093, 0.0
        %v1277 = vmax.f32 %v1095, 0.0
        %v1278 = vmax.f32 %v1206, 0.0
        %v1279 = vmax.f32 %v1208, 0.0
        %v1280 = vmax.f32 %v1099, 0.0
        %v1281 = vmax.f32 %v1101, 0.0
        %v1282 = vmax.f32 %v1212, 0.0
        %v1283 = vmax.f32 %v1214, 0.0
        %v1284 = vmax.f32 %v1103, 0.0
        %v1285 = vmax.f32 %v1105, 0.0
        %v1286 = vmax.f32 %v1216, 0.0
        %v1287 = vmax.f32 %v1218, 0.0
        %v1288 = vmax.f32 %v1109, 0.0
        %v1289 = vmax.f32 %v1111, 0.0
        %v1290 = vmax.f32 %v1222, 0.0
        %v1291 = vmax.f32 %v1224, 0.0
        %v1292 = vmax.f32 %v1113, 0.0
        %v1293 = vmax.f32 %v1115, 0.0
        %v1294 = vmax.f32 %v1226, 0.0
        %v1295 = vmax.f32 %v1228, 0.0
        %v1296 = vmax.f32 %v1119, 0.0
        %v1297 = vmax.f32 %v1121, 0.0
        %v1298 = vmax.f32 %v1232, 0.0
        %v1299 = vmax.f32 %v1234, 0.0
        %v1300 = vmax.f32 %v1123, 0.0
        %v1301 = vmax.f32 %v1125, 0.0
        %v1302 = vmax.f32 %v1236, 0.0
        %v1303 = vmax.f32 %v1238, 0.0
        %v1304 = vld [vmem:[%s485] sm:$0xff]
        %v1305 = vld [vmem:[%s485 + $0x8] sm:$0xff]
        %v1306 = vld [vmem:[%s485 + $0x10] sm:$0xff]
        %v1307 = vld [vmem:[%s485 + $0x18] sm:$0xff]
        %v1308 = vld [vmem:[%s485 + $0x20] sm:$0xff]
        %v1309 = vld [vmem:[%s485 + $0x28] sm:$0xff]
        %v1310 = vld [vmem:[%s485 + $0x30] sm:$0xff]
        %v1311 = vld [vmem:[%s485 + $0x38] sm:$0xff]
        %v1312 = vld [vmem:[%s485 + $0x40] sm:$0xff]
        %v1313 = vld [vmem:[%s485 + $0x48] sm:$0xff]
        %v1314 = vld [vmem:[%s485 + $0x50] sm:$0xff]
        %v1315 = vld [vmem:[%s485 + $0x58] sm:$0xff]
        %v1316 = vld [vmem:[%s485 + $0x60] sm:$0xff]
        %v1317 = vld [vmem:[%s485 + $0x68] sm:$0xff]
        %v1318 = vld [vmem:[%s485 + $0x70] sm:$0xff]
        %v1319 = vld [vmem:[%s485 + $0x78] sm:$0xff]
        %v1320 = vunpack.c.0.s8 %v1304
        %v1321 = vunpack.c.0.s8 %v1305
        %v1322 = vunpack.c.0.s8 %v1306
        %v1323 = vunpack.c.0.s8 %v1307
        %v1324 = vunpack.c.1.s8 %v1304
        %v1325 = vunpack.c.1.s8 %v1305
        %v1326 = vunpack.c.1.s8 %v1306
        %v1327 = vunpack.c.1.s8 %v1307
        %v1328 = vunpack.c.2.s8 %v1304
        %v1329 = vunpack.c.2.s8 %v1305
        %v1330 = vunpack.c.2.s8 %v1306
        %v1331 = vunpack.c.2.s8 %v1307
        %v1332 = vunpack.c.3.s8 %v1304
        %v1333 = vunpack.c.3.s8 %v1305
        %v1334 = vunpack.c.3.s8 %v1306
        %v1335 = vunpack.c.3.s8 %v1307
        %v1336 = vunpack.c.0.s8 %v1308
        %v1337 = vunpack.c.0.s8 %v1309
        %v1338 = vunpack.c.0.s8 %v1310
        %v1339 = vunpack.c.0.s8 %v1311
        %v1340 = vunpack.c.1.s8 %v1308
        %v1341 = vunpack.c.1.s8 %v1309
        %v1342 = vunpack.c.1.s8 %v1310
        %v1343 = vunpack.c.1.s8 %v1311
        %v1344 = vunpack.c.2.s8 %v1308
        %v1345 = vunpack.c.2.s8 %v1309
        %v1346 = vunpack.c.2.s8 %v1310
        %v1347 = vunpack.c.2.s8 %v1311
        %v1348 = vunpack.c.3.s8 %v1308
        %v1349 = vunpack.c.3.s8 %v1309
        %v1350 = vunpack.c.3.s8 %v1310
        %v1351 = vunpack.c.3.s8 %v1311
        %v1352 = vunpack.c.0.s8 %v1312
        %v1353 = vunpack.c.0.s8 %v1313
        %v1354 = vunpack.c.0.s8 %v1314
        %v1355 = vunpack.c.0.s8 %v1315
        %v1356 = vunpack.c.1.s8 %v1312
        %v1357 = vunpack.c.1.s8 %v1313
        %v1358 = vunpack.c.1.s8 %v1314
        %v1359 = vunpack.c.1.s8 %v1315
        %v1360 = vunpack.c.2.s8 %v1312
        %v1361 = vunpack.c.2.s8 %v1313
        %v1362 = vunpack.c.2.s8 %v1314
        %v1363 = vunpack.c.2.s8 %v1315
        %v1364 = vunpack.c.3.s8 %v1312
        %v1365 = vunpack.c.3.s8 %v1313
        %v1366 = vunpack.c.3.s8 %v1314
        %v1367 = vunpack.c.3.s8 %v1315
        %v1368 = vunpack.c.0.s8 %v1316
        %v1369 = vunpack.c.0.s8 %v1317
        %v1370 = vunpack.c.0.s8 %v1318
        %v1371 = vunpack.c.0.s8 %v1319
        %v1372 = vunpack.c.1.s8 %v1316
        %v1373 = vunpack.c.1.s8 %v1317
        %v1374 = vunpack.c.1.s8 %v1318
        %v1375 = vunpack.c.1.s8 %v1319
        %v1376 = vunpack.c.2.s8 %v1316
        %v1377 = vunpack.c.2.s8 %v1317
        %v1378 = vunpack.c.2.s8 %v1318
        %v1379 = vunpack.c.2.s8 %v1319
        %v1380 = vunpack.c.3.s8 %v1316
        %v1381 = vunpack.c.3.s8 %v1317
        %v1382 = vunpack.c.3.s8 %v1318
        %v1383 = vunpack.c.3.s8 %v1319
        %v1384 = vcvt.s32.f32 %v1320
        %v1385 = vcvt.s32.f32 %v1321
        %v1386 = vcvt.s32.f32 %v1322
        %v1387 = vcvt.s32.f32 %v1323
        %v1388 = vcvt.s32.f32 %v1324
        %v1389 = vcvt.s32.f32 %v1325
        %v1390 = vcvt.s32.f32 %v1326
        %v1391 = vcvt.s32.f32 %v1327
        %v1392 = vcvt.s32.f32 %v1328
        %v1393 = vcvt.s32.f32 %v1329
        %v1394 = vcvt.s32.f32 %v1330
        %v1395 = vcvt.s32.f32 %v1331
        %v1396 = vcvt.s32.f32 %v1332
        %v1397 = vcvt.s32.f32 %v1333
        %v1398 = vcvt.s32.f32 %v1334
        %v1399 = vcvt.s32.f32 %v1335
        %v1400 = vcvt.s32.f32 %v1336
        %v1401 = vcvt.s32.f32 %v1337
        %v1402 = vcvt.s32.f32 %v1338
        %v1403 = vcvt.s32.f32 %v1339
        %v1404 = vcvt.s32.f32 %v1340
        %v1405 = vcvt.s32.f32 %v1341
        %v1406 = vcvt.s32.f32 %v1342
        %v1407 = vcvt.s32.f32 %v1343
        %v1408 = vcvt.s32.f32 %v1344
        %v1409 = vcvt.s32.f32 %v1345
        %v1410 = vcvt.s32.f32 %v1346
        %v1411 = vcvt.s32.f32 %v1347
        %v1412 = vcvt.s32.f32 %v1348
        %v1413 = vcvt.s32.f32 %v1349
        %v1414 = vcvt.s32.f32 %v1350
        %v1415 = vcvt.s32.f32 %v1351
        %v1416 = vcvt.s32.f32 %v1352
        %v1417 = vcvt.s32.f32 %v1353
        %v1418 = vcvt.s32.f32 %v1354
        %v1419 = vcvt.s32.f32 %v1355
        %v1420 = vcvt.s32.f32 %v1356
        %v1421 = vcvt.s32.f32 %v1357
        %v1422 = vcvt.s32.f32 %v1358
        %v1423 = vcvt.s32.f32 %v1359
        %v1424 = vcvt.s32.f32 %v1360
        %v1425 = vcvt.s32.f32 %v1361
        %v1426 = vcvt.s32.f32 %v1362
        %v1427 = vcvt.s32.f32 %v1363
        %v1428 = vcvt.s32.f32 %v1364
        %v1429 = vcvt.s32.f32 %v1365
        %v1430 = vcvt.s32.f32 %v1366
        %v1431 = vcvt.s32.f32 %v1367
        %v1432 = vcvt.s32.f32 %v1368
        %v1433 = vcvt.s32.f32 %v1369
        %v1434 = vcvt.s32.f32 %v1370
        %v1435 = vcvt.s32.f32 %v1371
        %v1436 = vcvt.s32.f32 %v1372
        %v1437 = vcvt.s32.f32 %v1373
        %v1438 = vcvt.s32.f32 %v1374
        %v1439 = vcvt.s32.f32 %v1375
        %v1440 = vcvt.s32.f32 %v1376
        %v1441 = vcvt.s32.f32 %v1377
        %v1442 = vcvt.s32.f32 %v1378
        %v1443 = vcvt.s32.f32 %v1379
        %v1444 = vcvt.s32.f32 %v1380
        %v1445 = vcvt.s32.f32 %v1381
        %v1446 = vcvt.s32.f32 %v1382
        %v1447 = vcvt.s32.f32 %v1383
        %v1448 = vmul.f32 %v1384, 1.25
        %v1449 = vmul.f32 %v1385, 1.25
        %v1450 = vmul.f32 %v1386, 1.25
        %v1451 = vmul.f32 %v1387, 1.25
        %v1452 = vmul.f32 %v1388, 1.25
        %v1453 = vmul.f32 %v1389, 1.25
        %v1454 = vmul.f32 %v1390, 1.25
        %v1455 = vmul.f32 %v1391, 1.25
        %v1456 = vmul.f32 %v1392, 1.25
        %v1457 = vmul.f32 %v1393, 1.25
        %v1458 = vmul.f32 %v1394, 1.25
        %v1459 = vmul.f32 %v1395, 1.25
        %v1460 = vmul.f32 %v1396, 1.25
        %v1461 = vmul.f32 %v1397, 1.25
        %v1462 = vmul.f32 %v1398, 1.25
        %v1463 = vmul.f32 %v1399, 1.25
        %v1464 = vmul.f32 %v1400, 1.25
        %v1465 = vmul.f32 %v1401, 1.25
        %v1466 = vmul.f32 %v1402, 1.25
        %v1467 = vmul.f32 %v1403, 1.25
        %v1468 = vmul.f32 %v1404, 1.25
        %v1469 = vmul.f32 %v1405, 1.25
        %v1470 = vmul.f32 %v1406, 1.25
        %v1471 = vmul.f32 %v1407, 1.25
        %v1472 = vmul.f32 %v1408, 1.25
        %v1473 = vmul.f32 %v1409, 1.25
        %v1474 = vmul.f32 %v1410, 1.25
        %v1475 = vmul.f32 %v1411, 1.25
        %v1476 = vmul.f32 %v1412, 1.25
        %v1477 = vmul.f32 %v1413, 1.25
        %v1478 = vmul.f32 %v1414, 1.25
        %v1479 = vmul.f32 %v1415, 1.25
        %v1480 = vmul.f32 %v1416, 1.25
        %v1481 = vmul.f32 %v1417, 1.25
        %v1482 = vmul.f32 %v1418, 1.25
        %v1483 = vmul.f32 %v1419, 1.25
        %v1484 = vmul.f32 %v1420, 1.25
        %v1485 = vmul.f32 %v1421, 1.25
        %v1486 = vmul.f32 %v1422, 1.25
        %v1487 = vmul.f32 %v1423, 1.25
        %v1488 = vmul.f32 %v1424, 1.25
        %v1489 = vmul.f32 %v1425, 1.25
        %v1490 = vmul.f32 %v1426, 1.25
        %v1491 = vmul.f32 %v1427, 1.25
        %v1492 = vmul.f32 %v1428, 1.25
        %v1493 = vmul.f32 %v1429, 1.25
        %v1494 = vmul.f32 %v1430, 1.25
        %v1495 = vmul.f32 %v1431, 1.25
        %v1496 = vmul.f32 %v1432, 1.25
        %v1497 = vmul.f32 %v1433, 1.25
        %v1498 = vmul.f32 %v1434, 1.25
        %v1499 = vmul.f32 %v1435, 1.25
        %v1500 = vmul.f32 %v1436, 1.25
        %v1501 = vmul.f32 %v1437, 1.25
        %v1502 = vmul.f32 %v1438, 1.25
        %v1503 = vmul.f32 %v1439, 1.25
        %v1504 = vmul.f32 %v1440, 1.25
        %v1505 = vmul.f32 %v1441, 1.25
        %v1506 = vmul.f32 %v1442, 1.25
        %v1507 = vmul.f32 %v1443, 1.25
        %v1508 = vmul.f32 %v1444, 1.25
        %v1509 = vmul.f32 %v1445, 1.25
        %v1510 = vmul.f32 %v1446, 1.25
        %v1511 = vmul.f32 %v1447, 1.25
        %v1512 = vmul.f32 %v1240, %v1448
        %v1513 = vmul.f32 %v1241, %v1449
        %v1514 = vmul.f32 %v1242, %v1450
        %v1515 = vmul.f32 %v1243, %v1451
        %v1516 = vmul.f32 %v1244, %v1452
        %v1517 = vmul.f32 %v1245, %v1453
        %v1518 = vmul.f32 %v1246, %v1454
        %v1519 = vmul.f32 %v1247, %v1455
        %v1520 = vmul.f32 %v1248, %v1456
        %v1521 = vmul.f32 %v1249, %v1457
        %v1522 = vmul.f32 %v1250, %v1458
        %v1523 = vmul.f32 %v1251, %v1459
        %v1524 = vmul.f32 %v1252, %v1460
        %v1525 = vmul.f32 %v1253, %v1461
        %v1526 = vmul.f32 %v1254, %v1462
        %v1527 = vmul.f32 %v1255, %v1463
        %v1528 = vmul.f32 %v1256, %v1464
        %v1529 = vmul.f32 %v1257, %v1465
        %v1530 = vmul.f32 %v1258, %v1466
        %v1531 = vmul.f32 %v1259, %v1467
        %v1532 = vmul.f32 %v1260, %v1468
        %v1533 = vmul.f32 %v1261, %v1469
        %v1534 = vmul.f32 %v1262, %v1470
        %v1535 = vmul.f32 %v1263, %v1471
        %v1536 = vmul.f32 %v1264, %v1472
        %v1537 = vmul.f32 %v1265, %v1473
        %v1538 = vmul.f32 %v1266, %v1474
        %v1539 = vmul.f32 %v1267, %v1475
        %v1540 = vmul.f32 %v1268, %v1476
        %v1541 = vmul.f32 %v1269, %v1477
        %v1542 = vmul.f32 %v1270, %v1478
        %v1543 = vmul.f32 %v1271, %v1479
        %v1544 = vmul.f32 %v1272, %v1480
        %v1545 = vmul.f32 %v1273, %v1481
        %v1546 = vmul.f32 %v1274, %v1482
        %v1547 = vmul.f32 %v1275, %v1483
        %v1548 = vmul.f32 %v1276, %v1484
        %v1549 = vmul.f32 %v1277, %v1485
        %v1550 = vmul.f32 %v1278, %v1486
        %v1551 = vmul.f32 %v1279, %v1487
        %v1552 = vmul.f32 %v1280, %v1488
        %v1553 = vmul.f32 %v1281, %v1489
        %v1554 = vmul.f32 %v1282, %v1490
        %v1555 = vmul.f32 %v1283, %v1491
        %v1556 = vmul.f32 %v1284, %v1492
        %v1557 = vmul.f32 %v1285, %v1493
        %v1558 = vmul.f32 %v1286, %v1494
        %v1559 = vmul.f32 %v1287, %v1495
        %v1560 = vmul.f32 %v1288, %v1496
        %v1561 = vmul.f32 %v1289, %v1497
        %v1562 = vmul.f32 %v1290, %v1498
        %v1563 = vmul.f32 %v1291, %v1499
        %v1564 = vmul.f32 %v1292, %v1500
        %v1565 = vmul.f32 %v1293, %v1501
        %v1566 = vmul.f32 %v1294, %v1502
        %v1567 = vmul.f32 %v1295, %v1503
        %v1568 = vmul.f32 %v1296, %v1504
        %v1569 = vmul.f32 %v1297, %v1505
        %v1570 = vmul.f32 %v1298, %v1506
        %v1571 = vmul.f32 %v1299, %v1507
        %v1572 = vmul.f32 %v1300, %v1508
        %v1573 = vmul.f32 %v1301, %v1509
        %v1574 = vmul.f32 %v1302, %v1510
        %v1575 = vmul.f32 %v1303, %v1511
        %v1576 = vpack.c.bf16 %v1516, %v1512
        %v1577 = vpack.c.bf16 %v1517, %v1513
        %v1578 = vpack.c.bf16 %v1518, %v1514
        %v1579 = vpack.c.bf16 %v1519, %v1515
        %v1580 = vpack.c.bf16 %v1524, %v1520
        %v1581 = vpack.c.bf16 %v1525, %v1521
        %v1582 = vpack.c.bf16 %v1526, %v1522
        %v1583 = vpack.c.bf16 %v1527, %v1523
        %v1584 = vpack.c.bf16 %v1532, %v1528
        %v1585 = vpack.c.bf16 %v1533, %v1529
        %v1586 = vpack.c.bf16 %v1534, %v1530
        %v1587 = vpack.c.bf16 %v1535, %v1531
        %v1588 = vpack.c.bf16 %v1540, %v1536
        %v1589 = vpack.c.bf16 %v1541, %v1537
        %v1590 = vpack.c.bf16 %v1542, %v1538
        %v1591 = vpack.c.bf16 %v1543, %v1539
        %v1592 = vpack.c.bf16 %v1548, %v1544
        %v1593 = vpack.c.bf16 %v1549, %v1545
        %v1594 = vpack.c.bf16 %v1550, %v1546
        %v1595 = vpack.c.bf16 %v1551, %v1547
        %v1596 = vpack.c.bf16 %v1556, %v1552
        %v1597 = vpack.c.bf16 %v1557, %v1553
        %v1598 = vpack.c.bf16 %v1558, %v1554
        %v1599 = vpack.c.bf16 %v1559, %v1555
        %v1600 = vpack.c.bf16 %v1564, %v1560
        %v1601 = vpack.c.bf16 %v1565, %v1561
        %v1602 = vpack.c.bf16 %v1566, %v1562
        %v1603 = vpack.c.bf16 %v1567, %v1563
        %v1604 = vpack.c.bf16 %v1572, %v1568
        %v1605 = vpack.c.bf16 %v1573, %v1569
        %v1606 = vpack.c.bf16 %v1574, %v1570
        %v1607 = vpack.c.bf16 %v1575, %v1571
        %v1608 = vld [vmem:[#allocation8] sm:$0xff]
        %v1609 = vld [vmem:[#allocation8 + $0x8] sm:$0xff]
        %v1610 = vld [vmem:[#allocation8 + $0x10] sm:$0xff]
        %v1611 = vld [vmem:[#allocation8 + $0x18] sm:$0xff]
        %v1612 = vld [vmem:[#allocation8 + $0x20] sm:$0xff]
        %v1613 = vld [vmem:[#allocation8 + $0x28] sm:$0xff]
        %v1614 = vld [vmem:[#allocation8 + $0x30] sm:$0xff]
        %v1615 = vld [vmem:[#allocation8 + $0x38] sm:$0xff]
        %v1616 = vld [vmem:[#allocation8 + $0x40] sm:$0xff]
        %v1617 = vld [vmem:[#allocation8 + $0x48] sm:$0xff]
        %v1618 = vld [vmem:[#allocation8 + $0x50] sm:$0xff]
        %v1619 = vld [vmem:[#allocation8 + $0x58] sm:$0xff]
        %v1620 = vld [vmem:[#allocation8 + $0x60] sm:$0xff]
        %v1621 = vld [vmem:[#allocation8 + $0x68] sm:$0xff]
        %v1622 = vld [vmem:[#allocation8 + $0x70] sm:$0xff]
        %v1623 = vld [vmem:[#allocation8 + $0x78] sm:$0xff]
        %v1624 = vld [vmem:[#allocation8 + $0x80] sm:$0xff]
        %v1625 = vld [vmem:[#allocation8 + $0x88] sm:$0xff]
        %v1626 = vld [vmem:[#allocation8 + $0x90] sm:$0xff]
        %v1627 = vld [vmem:[#allocation8 + $0x98] sm:$0xff]
        %v1628 = vld [vmem:[#allocation8 + $0xa0] sm:$0xff]
        %v1629 = vld [vmem:[#allocation8 + $0xa8] sm:$0xff]
        %v1630 = vld [vmem:[#allocation8 + $0xb0] sm:$0xff]
        %v1631 = vld [vmem:[#allocation8 + $0xb8] sm:$0xff]
        %v1632 = vld [vmem:[#allocation8 + $0xc0] sm:$0xff]
        %v1633 = vld [vmem:[#allocation8 + $0xc8] sm:$0xff]
        %v1634 = vld [vmem:[#allocation8 + $0xd0] sm:$0xff]
        %v1635 = vld [vmem:[#allocation8 + $0xd8] sm:$0xff]
        %v1636 = vld [vmem:[#allocation8 + $0xe0] sm:$0xff]
        %v1637 = vld [vmem:[#allocation8 + $0xe8] sm:$0xff]
        %v1638 = vld [vmem:[#allocation8 + $0xf0] sm:$0xff]
        %v1639 = vld [vmem:[#allocation8 + $0xf8] sm:$0xff]
        %v1640 = vld [vmem:[#allocation8 + $0x100] sm:$0xff]
        %v1641 = vld [vmem:[#allocation8 + $0x108] sm:$0xff]
        %v1642 = vld [vmem:[#allocation8 + $0x110] sm:$0xff]
        %v1643 = vld [vmem:[#allocation8 + $0x118] sm:$0xff]
        %v1644 = vld [vmem:[#allocation8 + $0x120] sm:$0xff]
        %v1645 = vld [vmem:[#allocation8 + $0x128] sm:$0xff]
        %v1646 = vld [vmem:[#allocation8 + $0x130] sm:$0xff]
        %v1647 = vld [vmem:[#allocation8 + $0x138] sm:$0xff]
        %v1648 = vld [vmem:[#allocation8 + $0x140] sm:$0xff]
        %v1649 = vld [vmem:[#allocation8 + $0x148] sm:$0xff]
        %v1650 = vld [vmem:[#allocation8 + $0x150] sm:$0xff]
        %v1651 = vld [vmem:[#allocation8 + $0x158] sm:$0xff]
        %v1652 = vld [vmem:[#allocation8 + $0x160] sm:$0xff]
        %v1653 = vld [vmem:[#allocation8 + $0x168] sm:$0xff]
        %v1654 = vld [vmem:[#allocation8 + $0x170] sm:$0xff]
        %v1655 = vld [vmem:[#allocation8 + $0x178] sm:$0xff]
        %v1656 = vld [vmem:[#allocation8 + $0x180] sm:$0xff]
        %v1657 = vld [vmem:[#allocation8 + $0x188] sm:$0xff]
        %v1658 = vld [vmem:[#allocation8 + $0x190] sm:$0xff]
        %v1659 = vld [vmem:[#allocation8 + $0x198] sm:$0xff]
        %v1660 = vld [vmem:[#allocation8 + $0x1a0] sm:$0xff]
        %v1661 = vld [vmem:[#allocation8 + $0x1a8] sm:$0xff]
        %v1662 = vld [vmem:[#allocation8 + $0x1b0] sm:$0xff]
        %v1663 = vld [vmem:[#allocation8 + $0x1b8] sm:$0xff]
        %v1664 = vld [vmem:[#allocation8 + $0x1c0] sm:$0xff]
        %v1665 = vld [vmem:[#allocation8 + $0x1c8] sm:$0xff]
        %v1666 = vld [vmem:[#allocation8 + $0x1d0] sm:$0xff]
        %v1667 = vld [vmem:[#allocation8 + $0x1d8] sm:$0xff]
        %v1668 = vld [vmem:[#allocation8 + $0x1e0] sm:$0xff]
        %v1669 = vld [vmem:[#allocation8 + $0x1e8] sm:$0xff]
        %v1670 = vld [vmem:[#allocation8 + $0x1f0] sm:$0xff]
        %v1671 = vld [vmem:[#allocation8 + $0x1f8] sm:$0xff]
        %v1672 = vld [vmem:[#allocation8 + $0x200] sm:$0xff]
        %v1673 = vld [vmem:[#allocation8 + $0x208] sm:$0xff]
        %v1674 = vld [vmem:[#allocation8 + $0x210] sm:$0xff]
        %v1675 = vld [vmem:[#allocation8 + $0x218] sm:$0xff]
        %v1676 = vld [vmem:[#allocation8 + $0x220] sm:$0xff]
        %v1677 = vld [vmem:[#allocation8 + $0x228] sm:$0xff]
        %v1678 = vld [vmem:[#allocation8 + $0x230] sm:$0xff]
        %v1679 = vld [vmem:[#allocation8 + $0x238] sm:$0xff]
        %v1680 = vld [vmem:[#allocation8 + $0x240] sm:$0xff]
        %v1681 = vld [vmem:[#allocation8 + $0x248] sm:$0xff]
        %v1682 = vld [vmem:[#allocation8 + $0x250] sm:$0xff]
        %v1683 = vld [vmem:[#allocation8 + $0x258] sm:$0xff]
        %v1684 = vld [vmem:[#allocation8 + $0x260] sm:$0xff]
        %v1685 = vld [vmem:[#allocation8 + $0x268] sm:$0xff]
        %v1686 = vld [vmem:[#allocation8 + $0x270] sm:$0xff]
        %v1687 = vld [vmem:[#allocation8 + $0x278] sm:$0xff]
        %v1688 = vld [vmem:[#allocation8 + $0x280] sm:$0xff]
        %v1689 = vld [vmem:[#allocation8 + $0x288] sm:$0xff]
        %v1690 = vld [vmem:[#allocation8 + $0x290] sm:$0xff]
        %v1691 = vld [vmem:[#allocation8 + $0x298] sm:$0xff]
        %v1692 = vld [vmem:[#allocation8 + $0x2a0] sm:$0xff]
        %v1693 = vld [vmem:[#allocation8 + $0x2a8] sm:$0xff]
        %v1694 = vld [vmem:[#allocation8 + $0x2b0] sm:$0xff]
        %v1695 = vld [vmem:[#allocation8 + $0x2b8] sm:$0xff]
        %v1696 = vld [vmem:[#allocation8 + $0x2c0] sm:$0xff]
        %v1697 = vld [vmem:[#allocation8 + $0x2c8] sm:$0xff]
        %v1698 = vld [vmem:[#allocation8 + $0x2d0] sm:$0xff]
        %v1699 = vld [vmem:[#allocation8 + $0x2d8] sm:$0xff]
        %v1700 = vld [vmem:[#allocation8 + $0x2e0] sm:$0xff]
        %v1701 = vld [vmem:[#allocation8 + $0x2e8] sm:$0xff]
        %v1702 = vld [vmem:[#allocation8 + $0x2f0] sm:$0xff]
        %v1703 = vld [vmem:[#allocation8 + $0x2f8] sm:$0xff]
        %v1704 = vld [vmem:[#allocation8 + $0x300] sm:$0xff]
        %v1705 = vld [vmem:[#allocation8 + $0x308] sm:$0xff]
        %v1706 = vld [vmem:[#allocation8 + $0x310] sm:$0xff]
        %v1707 = vld [vmem:[#allocation8 + $0x318] sm:$0xff]
        %v1708 = vld [vmem:[#allocation8 + $0x320] sm:$0xff]
        %v1709 = vld [vmem:[#allocation8 + $0x328] sm:$0xff]
        %v1710 = vld [vmem:[#allocation8 + $0x330] sm:$0xff]
        %v1711 = vld [vmem:[#allocation8 + $0x338] sm:$0xff]
        %v1712 = vld [vmem:[#allocation8 + $0x340] sm:$0xff]
        %v1713 = vld [vmem:[#allocation8 + $0x348] sm:$0xff]
        %v1714 = vld [vmem:[#allocation8 + $0x350] sm:$0xff]
        %v1715 = vld [vmem:[#allocation8 + $0x358] sm:$0xff]
        %v1716 = vld [vmem:[#allocation8 + $0x360] sm:$0xff]
        %v1717 = vld [vmem:[#allocation8 + $0x368] sm:$0xff]
        %v1718 = vld [vmem:[#allocation8 + $0x370] sm:$0xff]
        %v1719 = vld [vmem:[#allocation8 + $0x378] sm:$0xff]
        %v1720 = vld [vmem:[#allocation8 + $0x380] sm:$0xff]
        %v1721 = vld [vmem:[#allocation8 + $0x388] sm:$0xff]
        %v1722 = vld [vmem:[#allocation8 + $0x390] sm:$0xff]
        %v1723 = vld [vmem:[#allocation8 + $0x398] sm:$0xff]
        %v1724 = vld [vmem:[#allocation8 + $0x3a0] sm:$0xff]
        %v1725 = vld [vmem:[#allocation8 + $0x3a8] sm:$0xff]
        %v1726 = vld [vmem:[#allocation8 + $0x3b0] sm:$0xff]
        %v1727 = vld [vmem:[#allocation8 + $0x3b8] sm:$0xff]
        %v1728 = vld [vmem:[#allocation8 + $0x3c0] sm:$0xff]
        %v1729 = vld [vmem:[#allocation8 + $0x3c8] sm:$0xff]
        %v1730 = vld [vmem:[#allocation8 + $0x3d0] sm:$0xff]
        %v1731 = vld [vmem:[#allocation8 + $0x3d8] sm:$0xff]
        %v1732 = vld [vmem:[#allocation8 + $0x3e0] sm:$0xff]
        %v1733 = vld [vmem:[#allocation8 + $0x3e8] sm:$0xff]
        %v1734 = vld [vmem:[#allocation8 + $0x3f0] sm:$0xff]
        %v1735 = vld [vmem:[#allocation8 + $0x3f8] sm:$0xff]
        %v1736 = vld [vmem:[%s4] sm:$0xf]
        %v1738 = vlaneseq
        %v1739 = vshrl.u32 %v1738, 7
        %v1740 = vsub.s32 0, %v1739
        %v1741 = vrot.slane %v1736, %v1740
        %v1742 = vlaneseq
        %v1743 = vshrl.u32 %v1742, 7
        %v1744 = vsub.s32 1, %v1743
        %v1745 = vrot.slane %v1736, %v1744
        %v1746 = vlaneseq
        %v1747 = vshrl.u32 %v1746, 7
        %v1748 = vsub.s32 2, %v1747
        %v1749 = vrot.slane %v1736, %v1748
        %v1750 = vlaneseq
        %v1751 = vshrl.u32 %v1750, 7
        %v1752 = vsub.s32 3, %v1751
        %v1753 = vrot.slane %v1736, %v1752
        %v1886 = vunpack.c.l.b16 %v1608
        %v1887 = vunpack.c.h.b16 %v1608
        %v1888 = vunpack.c.l.b16 %v1609
        %v1889 = vunpack.c.h.b16 %v1609
        %v1890 = vunpack.c.l.b16 %v1610
        %v1891 = vunpack.c.h.b16 %v1610
        %v1892 = vunpack.c.l.b16 %v1611
        %v1893 = vunpack.c.h.b16 %v1611
        %v1894 = vunpack.c.l.b16 %v1612
        %v1895 = vunpack.c.h.b16 %v1612
        %v1896 = vunpack.c.l.b16 %v1613
        %v1897 = vunpack.c.h.b16 %v1613
        %v1898 = vunpack.c.l.b16 %v1614
        %v1899 = vunpack.c.h.b16 %v1614
        %v1900 = vunpack.c.l.b16 %v1615
        %v1901 = vunpack.c.h.b16 %v1615
        %v1902 = vunpack.c.l.b16 %v1616
        %v1903 = vunpack.c.h.b16 %v1616
        %v1904 = vunpack.c.l.b16 %v1617
        %v1905 = vunpack.c.h.b16 %v1617
        %v1906 = vunpack.c.l.b16 %v1618
        %v1907 = vunpack.c.h.b16 %v1618
        %v1908 = vunpack.c.l.b16 %v1619
        %v1909 = vunpack.c.h.b16 %v1619
        %v1910 = vunpack.c.l.b16 %v1620
        %v1911 = vunpack.c.h.b16 %v1620
        %v1912 = vunpack.c.l.b16 %v1621
        %v1913 = vunpack.c.h.b16 %v1621
        %v1914 = vunpack.c.l.b16 %v1622
        %v1915 = vunpack.c.h.b16 %v1622
        %v1916 = vunpack.c.l.b16 %v1623
        %v1917 = vunpack.c.h.b16 %v1623
        %v1918 = vunpack.c.l.b16 %v1624
        %v1919 = vunpack.c.h.b16 %v1624
        %v1920 = vunpack.c.l.b16 %v1625
        %v1921 = vunpack.c.h.b16 %v1625
        %v1922 = vunpack.c.l.b16 %v1626
        %v1923 = vunpack.c.h.b16 %v1626
        %v1924 = vunpack.c.l.b16 %v1627
        %v1925 = vunpack.c.h.b16 %v1627
        %v1926 = vunpack.c.l.b16 %v1628
        %v1927 = vunpack.c.h.b16 %v1628
        %v1928 = vunpack.c.l.b16 %v1629
        %v1929 = vunpack.c.h.b16 %v1629
        %v1930 = vunpack.c.l.b16 %v1630
        %v1931 = vunpack.c.h.b16 %v1630
        %v1932 = vunpack.c.l.b16 %v1631
        %v1933 = vunpack.c.h.b16 %v1631
        %v1934 = vunpack.c.l.b16 %v1632
        %v1935 = vunpack.c.h.b16 %v1632
        %v1936 = vunpack.c.l.b16 %v1633
        %v1937 = vunpack.c.h.b16 %v1633
        %v1938 = vunpack.c.l.b16 %v1634
        %v1939 = vunpack.c.h.b16 %v1634
        %v1940 = vunpack.c.l.b16 %v1635
        %v1941 = vunpack.c.h.b16 %v1635
        %v1942 = vunpack.c.l.b16 %v1636
        %v1943 = vunpack.c.h.b16 %v1636
        %v1944 = vunpack.c.l.b16 %v1637
        %v1945 = vunpack.c.h.b16 %v1637
        %v1946 = vunpack.c.l.b16 %v1638
        %v1947 = vunpack.c.h.b16 %v1638
        %v1948 = vunpack.c.l.b16 %v1639
        %v1949 = vunpack.c.h.b16 %v1639
        %v1950 = vunpack.c.l.b16 %v1640
        %v1951 = vunpack.c.h.b16 %v1640
        %v1952 = vunpack.c.l.b16 %v1641
        %v1953 = vunpack.c.h.b16 %v1641
        %v1954 = vunpack.c.l.b16 %v1642
        %v1955 = vunpack.c.h.b16 %v1642
        %v1956 = vunpack.c.l.b16 %v1643
        %v1957 = vunpack.c.h.b16 %v1643
        %v1958 = vunpack.c.l.b16 %v1644
        %v1959 = vunpack.c.h.b16 %v1644
        %v1960 = vunpack.c.l.b16 %v1645
        %v1961 = vunpack.c.h.b16 %v1645
        %v1962 = vunpack.c.l.b16 %v1646
        %v1963 = vunpack.c.h.b16 %v1646
        %v1964 = vunpack.c.l.b16 %v1647
        %v1965 = vunpack.c.h.b16 %v1647
        %v1966 = vunpack.c.l.b16 %v1648
        %v1967 = vunpack.c.h.b16 %v1648
        %v1968 = vunpack.c.l.b16 %v1649
        %v1969 = vunpack.c.h.b16 %v1649
        %v1970 = vunpack.c.l.b16 %v1650
        %v1971 = vunpack.c.h.b16 %v1650
        %v1972 = vunpack.c.l.b16 %v1651
        %v1973 = vunpack.c.h.b16 %v1651
        %v1974 = vunpack.c.l.b16 %v1652
        %v1975 = vunpack.c.h.b16 %v1652
        %v1976 = vunpack.c.l.b16 %v1653
        %v1977 = vunpack.c.h.b16 %v1653
        %v1978 = vunpack.c.l.b16 %v1654
        %v1979 = vunpack.c.h.b16 %v1654
        %v1980 = vunpack.c.l.b16 %v1655
        %v1981 = vunpack.c.h.b16 %v1655
        %v1982 = vunpack.c.l.b16 %v1656
        %v1983 = vunpack.c.h.b16 %v1656
        %v1984 = vunpack.c.l.b16 %v1657
        %v1985 = vunpack.c.h.b16 %v1657
        %v1986 = vunpack.c.l.b16 %v1658
        %v1987 = vunpack.c.h.b16 %v1658
        %v1988 = vunpack.c.l.b16 %v1659
        %v1989 = vunpack.c.h.b16 %v1659
        %v1990 = vunpack.c.l.b16 %v1660
        %v1991 = vunpack.c.h.b16 %v1660
        %v1992 = vunpack.c.l.b16 %v1661
        %v1993 = vunpack.c.h.b16 %v1661
        %v1994 = vunpack.c.l.b16 %v1662
        %v1995 = vunpack.c.h.b16 %v1662
        %v1996 = vunpack.c.l.b16 %v1663
        %v1997 = vunpack.c.h.b16 %v1663
        %v1998 = vunpack.c.l.b16 %v1664
        %v1999 = vunpack.c.h.b16 %v1664
        %v2000 = vunpack.c.l.b16 %v1665
        %v2001 = vunpack.c.h.b16 %v1665
        %v2002 = vunpack.c.l.b16 %v1666
        %v2003 = vunpack.c.h.b16 %v1666
        %v2004 = vunpack.c.l.b16 %v1667
        %v2005 = vunpack.c.h.b16 %v1667
        %v2006 = vunpack.c.l.b16 %v1668
        %v2007 = vunpack.c.h.b16 %v1668
        %v2008 = vunpack.c.l.b16 %v1669
        %v2009 = vunpack.c.h.b16 %v1669
        %v2010 = vunpack.c.l.b16 %v1670
        %v2011 = vunpack.c.h.b16 %v1670
        %v2012 = vunpack.c.l.b16 %v1671
        %v2013 = vunpack.c.h.b16 %v1671
        %v2014 = vunpack.c.l.b16 %v1672
        %v2015 = vunpack.c.h.b16 %v1672
        %v2016 = vunpack.c.l.b16 %v1673
        %v2017 = vunpack.c.h.b16 %v1673
        %v2018 = vunpack.c.l.b16 %v1674
        %v2019 = vunpack.c.h.b16 %v1674
        %v2020 = vunpack.c.l.b16 %v1675
        %v2021 = vunpack.c.h.b16 %v1675
        %v2022 = vunpack.c.l.b16 %v1676
        %v2023 = vunpack.c.h.b16 %v1676
        %v2024 = vunpack.c.l.b16 %v1677
        %v2025 = vunpack.c.h.b16 %v1677
        %v2026 = vunpack.c.l.b16 %v1678
        %v2027 = vunpack.c.h.b16 %v1678
        %v2028 = vunpack.c.l.b16 %v1679
        %v2029 = vunpack.c.h.b16 %v1679
        %v2030 = vunpack.c.l.b16 %v1680
        %v2031 = vunpack.c.h.b16 %v1680
        %v2032 = vunpack.c.l.b16 %v1681
        %v2033 = vunpack.c.h.b16 %v1681
        %v2034 = vunpack.c.l.b16 %v1682
        %v2035 = vunpack.c.h.b16 %v1682
        %v2036 = vunpack.c.l.b16 %v1683
        %v2037 = vunpack.c.h.b16 %v1683
        %v2038 = vunpack.c.l.b16 %v1684
        %v2039 = vunpack.c.h.b16 %v1684
        %v2040 = vunpack.c.l.b16 %v1685
        %v2041 = vunpack.c.h.b16 %v1685
        %v2042 = vunpack.c.l.b16 %v1686
        %v2043 = vunpack.c.h.b16 %v1686
        %v2044 = vunpack.c.l.b16 %v1687
        %v2045 = vunpack.c.h.b16 %v1687
        %v2046 = vunpack.c.l.b16 %v1688
        %v2047 = vunpack.c.h.b16 %v1688
        %v2048 = vunpack.c.l.b16 %v1689
        %v2049 = vunpack.c.h.b16 %v1689
        %v2050 = vunpack.c.l.b16 %v1690
        %v2051 = vunpack.c.h.b16 %v1690
        %v2052 = vunpack.c.l.b16 %v1691
        %v2053 = vunpack.c.h.b16 %v1691
        %v2054 = vunpack.c.l.b16 %v1692
        %v2055 = vunpack.c.h.b16 %v1692
        %v2056 = vunpack.c.l.b16 %v1693
        %v2057 = vunpack.c.h.b16 %v1693
        %v2058 = vunpack.c.l.b16 %v1694
        %v2059 = vunpack.c.h.b16 %v1694
        %v2060 = vunpack.c.l.b16 %v1695
        %v2061 = vunpack.c.h.b16 %v1695
        %v2062 = vunpack.c.l.b16 %v1696
        %v2063 = vunpack.c.h.b16 %v1696
        %v2064 = vunpack.c.l.b16 %v1697
        %v2065 = vunpack.c.h.b16 %v1697
        %v2066 = vunpack.c.l.b16 %v1698
        %v2067 = vunpack.c.h.b16 %v1698
        %v2068 = vunpack.c.l.b16 %v1699
        %v2069 = vunpack.c.h.b16 %v1699
        %v2070 = vunpack.c.l.b16 %v1700
        %v2071 = vunpack.c.h.b16 %v1700
        %v2072 = vunpack.c.l.b16 %v1701
        %v2073 = vunpack.c.h.b16 %v1701
        %v2074 = vunpack.c.l.b16 %v1702
        %v2075 = vunpack.c.h.b16 %v1702
        %v2076 = vunpack.c.l.b16 %v1703
        %v2077 = vunpack.c.h.b16 %v1703
        %v2078 = vunpack.c.l.b16 %v1704
        %v2079 = vunpack.c.h.b16 %v1704
        %v2080 = vunpack.c.l.b16 %v1705
        %v2081 = vunpack.c.h.b16 %v1705
        %v2082 = vunpack.c.l.b16 %v1706
        %v2083 = vunpack.c.h.b16 %v1706
        %v2084 = vunpack.c.l.b16 %v1707
        %v2085 = vunpack.c.h.b16 %v1707
        %v2086 = vunpack.c.l.b16 %v1708
        %v2087 = vunpack.c.h.b16 %v1708
        %v2088 = vunpack.c.l.b16 %v1709
        %v2089 = vunpack.c.h.b16 %v1709
        %v2090 = vunpack.c.l.b16 %v1710
        %v2091 = vunpack.c.h.b16 %v1710
        %v2092 = vunpack.c.l.b16 %v1711
        %v2093 = vunpack.c.h.b16 %v1711
        %v2094 = vunpack.c.l.b16 %v1712
        %v2095 = vunpack.c.h.b16 %v1712
        %v2096 = vunpack.c.l.b16 %v1713
        %v2097 = vunpack.c.h.b16 %v1713
        %v2098 = vunpack.c.l.b16 %v1714
        %v2099 = vunpack.c.h.b16 %v1714
        %v2100 = vunpack.c.l.b16 %v1715
        %v2101 = vunpack.c.h.b16 %v1715
        %v2102 = vunpack.c.l.b16 %v1716
        %v2103 = vunpack.c.h.b16 %v1716
        %v2104 = vunpack.c.l.b16 %v1717
        %v2105 = vunpack.c.h.b16 %v1717
        %v2106 = vunpack.c.l.b16 %v1718
        %v2107 = vunpack.c.h.b16 %v1718
        %v2108 = vunpack.c.l.b16 %v1719
        %v2109 = vunpack.c.h.b16 %v1719
        %v2110 = vunpack.c.l.b16 %v1720
        %v2111 = vunpack.c.h.b16 %v1720
        %v2112 = vunpack.c.l.b16 %v1721
        %v2113 = vunpack.c.h.b16 %v1721
        %v2114 = vunpack.c.l.b16 %v1722
        %v2115 = vunpack.c.h.b16 %v1722
        %v2116 = vunpack.c.l.b16 %v1723
        %v2117 = vunpack.c.h.b16 %v1723
        %v2118 = vunpack.c.l.b16 %v1724
        %v2119 = vunpack.c.h.b16 %v1724
        %v2120 = vunpack.c.l.b16 %v1725
        %v2121 = vunpack.c.h.b16 %v1725
        %v2122 = vunpack.c.l.b16 %v1726
        %v2123 = vunpack.c.h.b16 %v1726
        %v2124 = vunpack.c.l.b16 %v1727
        %v2125 = vunpack.c.h.b16 %v1727
        %v2126 = vunpack.c.l.b16 %v1728
        %v2127 = vunpack.c.h.b16 %v1728
        %v2128 = vunpack.c.l.b16 %v1729
        %v2129 = vunpack.c.h.b16 %v1729
        %v2130 = vunpack.c.l.b16 %v1730
        %v2131 = vunpack.c.h.b16 %v1730
        %v2132 = vunpack.c.l.b16 %v1731
        %v2133 = vunpack.c.h.b16 %v1731
        %v2134 = vunpack.c.l.b16 %v1732
        %v2135 = vunpack.c.h.b16 %v1732
        %v2136 = vunpack.c.l.b16 %v1733
        %v2137 = vunpack.c.h.b16 %v1733
        %v2138 = vunpack.c.l.b16 %v1734
        %v2139 = vunpack.c.h.b16 %v1734
        %v2140 = vunpack.c.l.b16 %v1735
        %v2141 = vunpack.c.h.b16 %v1735
        %v2142 = vpack.c.b16 %v1890, %v1886
        %v2143 = vpack.c.b16 %v1891, %v1887
        %v2144 = vpack.c.b16 %v1892, %v1888
        %v2145 = vpack.c.b16 %v1893, %v1889
        %v2146 = vpack.c.b16 %v1898, %v1894
        %v2147 = vpack.c.b16 %v1899, %v1895
        %v2148 = vpack.c.b16 %v1900, %v1896
        %v2149 = vpack.c.b16 %v1901, %v1897
        %v2150 = vpack.c.b16 %v1906, %v1902
        %v2151 = vpack.c.b16 %v1907, %v1903
        %v2152 = vpack.c.b16 %v1908, %v1904
        %v2153 = vpack.c.b16 %v1909, %v1905
        %v2154 = vpack.c.b16 %v1914, %v1910
        %v2155 = vpack.c.b16 %v1915, %v1911
        %v2156 = vpack.c.b16 %v1916, %v1912
        %v2157 = vpack.c.b16 %v1917, %v1913
        %v2158 = vpack.c.b16 %v1922, %v1918
        %v2159 = vpack.c.b16 %v1923, %v1919
        %v2160 = vpack.c.b16 %v1924, %v1920
        %v2161 = vpack.c.b16 %v1925, %v1921
        %v2162 = vpack.c.b16 %v1930, %v1926
        %v2163 = vpack.c.b16 %v1931, %v1927
        %v2164 = vpack.c.b16 %v1932, %v1928
        %v2165 = vpack.c.b16 %v1933, %v1929
        %v2166 = vpack.c.b16 %v1938, %v1934
        %v2167 = vpack.c.b16 %v1939, %v1935
        %v2168 = vpack.c.b16 %v1940, %v1936
        %v2169 = vpack.c.b16 %v1941, %v1937
        %v2170 = vpack.c.b16 %v1946, %v1942
        %v2171 = vpack.c.b16 %v1947, %v1943
        %v2172 = vpack.c.b16 %v1948, %v1944
        %v2173 = vpack.c.b16 %v1949, %v1945
        %v2174 = vpack.c.b16 %v1954, %v1950
        %v2175 = vpack.c.b16 %v1955, %v1951
        %v2176 = vpack.c.b16 %v1956, %v1952
        %v2177 = vpack.c.b16 %v1957, %v1953
        %v2178 = vpack.c.b16 %v1962, %v1958
        %v2179 = vpack.c.b16 %v1963, %v1959
        %v2180 = vpack.c.b16 %v1964, %v1960
        %v2181 = vpack.c.b16 %v1965, %v1961
        %v2182 = vpack.c.b16 %v1970, %v1966
        %v2183 = vpack.c.b16 %v1971, %v1967
        %v2184 = vpack.c.b16 %v1972, %v1968
        %v2185 = vpack.c.b16 %v1973, %v1969
        %v2186 = vpack.c.b16 %v1978, %v1974
        %v2187 = vpack.c.b16 %v1979, %v1975
        %v2188 = vpack.c.b16 %v1980, %v1976
        %v2189 = vpack.c.b16 %v1981, %v1977
        %v2190 = vpack.c.b16 %v1986, %v1982
        %v2191 = vpack.c.b16 %v1987, %v1983
        %v2192 = vpack.c.b16 %v1988, %v1984
        %v2193 = vpack.c.b16 %v1989, %v1985
        %v2194 = vpack.c.b16 %v1994, %v1990
        %v2195 = vpack.c.b16 %v1995, %v1991
        %v2196 = vpack.c.b16 %v1996, %v1992
        %v2197 = vpack.c.b16 %v1997, %v1993
        %v2198 = vpack.c.b16 %v2002, %v1998
        %v2199 = vpack.c.b16 %v2003, %v1999
        %v2200 = vpack.c.b16 %v2004, %v2000
        %v2201 = vpack.c.b16 %v2005, %v2001
        %v2202 = vpack.c.b16 %v2010, %v2006
        %v2203 = vpack.c.b16 %v2011, %v2007
        %v2204 = vpack.c.b16 %v2012, %v2008
        %v2205 = vpack.c.b16 %v2013, %v2009
        %v2206 = vpack.c.b16 %v2018, %v2014
        %v2207 = vpack.c.b16 %v2019, %v2015
        %v2208 = vpack.c.b16 %v2020, %v2016
        %v2209 = vpack.c.b16 %v2021, %v2017
        %v2210 = vpack.c.b16 %v2026, %v2022
        %v2211 = vpack.c.b16 %v2027, %v2023
        %v2212 = vpack.c.b16 %v2028, %v2024
        %v2213 = vpack.c.b16 %v2029, %v2025
        %v2214 = vpack.c.b16 %v2034, %v2030
        %v2215 = vpack.c.b16 %v2035, %v2031
        %v2216 = vpack.c.b16 %v2036, %v2032
        %v2217 = vpack.c.b16 %v2037, %v2033
        %v2218 = vpack.c.b16 %v2042, %v2038
        %v2219 = vpack.c.b16 %v2043, %v2039
        %v2220 = vpack.c.b16 %v2044, %v2040
        %v2221 = vpack.c.b16 %v2045, %v2041
        %v2222 = vpack.c.b16 %v2050, %v2046
        %v2223 = vpack.c.b16 %v2051, %v2047
        %v2224 = vpack.c.b16 %v2052, %v2048
        %v2225 = vpack.c.b16 %v2053, %v2049
        %v2226 = vpack.c.b16 %v2058, %v2054
        %v2227 = vpack.c.b16 %v2059, %v2055
        %v2228 = vpack.c.b16 %v2060, %v2056
        %v2229 = vpack.c.b16 %v2061, %v2057
        %v2230 = vpack.c.b16 %v2066, %v2062
        %v2231 = vpack.c.b16 %v2067, %v2063
        %v2232 = vpack.c.b16 %v2068, %v2064
        %v2233 = vpack.c.b16 %v2069, %v2065
        %v2234 = vpack.c.b16 %v2074, %v2070
        %v2235 = vpack.c.b16 %v2075, %v2071
        %v2236 = vpack.c.b16 %v2076, %v2072
        %v2237 = vpack.c.b16 %v2077, %v2073
        %v2238 = vpack.c.b16 %v2082, %v2078
        %v2239 = vpack.c.b16 %v2083, %v2079
        %v2240 = vpack.c.b16 %v2084, %v2080
        %v2241 = vpack.c.b16 %v2085, %v2081
        %v2242 = vpack.c.b16 %v2090, %v2086
        %v2243 = vpack.c.b16 %v2091, %v2087
        %v2244 = vpack.c.b16 %v2092, %v2088
        %v2245 = vpack.c.b16 %v2093, %v2089
        %v2246 = vpack.c.b16 %v2098, %v2094
        %v2247 = vpack.c.b16 %v2099, %v2095
        %v2248 = vpack.c.b16 %v2100, %v2096
        %v2249 = vpack.c.b16 %v2101, %v2097
        %v2250 = vpack.c.b16 %v2106, %v2102
        %v2251 = vpack.c.b16 %v2107, %v2103
        %v2252 = vpack.c.b16 %v2108, %v2104
        %v2253 = vpack.c.b16 %v2109, %v2105
        %v2254 = vpack.c.b16 %v2114, %v2110
        %v2255 = vpack.c.b16 %v2115, %v2111
        %v2256 = vpack.c.b16 %v2116, %v2112
        %v2257 = vpack.c.b16 %v2117, %v2113
        %v2258 = vpack.c.b16 %v2122, %v2118
        %v2259 = vpack.c.b16 %v2123, %v2119
        %v2260 = vpack.c.b16 %v2124, %v2120
        %v2261 = vpack.c.b16 %v2125, %v2121
        %v2262 = vpack.c.b16 %v2130, %v2126
        %v2263 = vpack.c.b16 %v2131, %v2127
        %v2264 = vpack.c.b16 %v2132, %v2128
        %v2265 = vpack.c.b16 %v2133, %v2129
        %v2266 = vpack.c.b16 %v2138, %v2134
        %v2267 = vpack.c.b16 %v2139, %v2135
        %v2268 = vpack.c.b16 %v2140, %v2136
        %v2269 = vpack.c.b16 %v2141, %v2137
        %2398 = vmatprep.subr.bf16.mxu0 %v2171
        %2399 = vmatpush1.bf16.msra.mxu0 %v2170
        %2400 = vmatprep.subr.bf16.mxu0 %v2167
        %2401 = vmatpush1.bf16.msra.mxu0 %v2166
        %2402 = vmatprep.subr.bf16.mxu0 %v2163
        %2403 = vmatpush1.bf16.msra.mxu0 %v2162
        %2404 = vmatprep.subr.bf16.mxu0 %v2159
        %2405 = vmatpush1.bf16.msra.mxu0 %v2158
        %2406 = vmatprep.subr.bf16.mxu0 %v2155
        %2407 = vmatpush1.bf16.msra.mxu0 %v2154
        %2408 = vmatprep.subr.bf16.mxu0 %v2151
        %2409 = vmatpush1.bf16.msra.mxu0 %v2150
        %2410 = vmatprep.subr.bf16.mxu0 %v2147
        %2411 = vmatpush1.bf16.msra.mxu0 %v2146
        %2412 = vmatprep.subr.bf16.mxu0 %v2143
        %2413 = vmatpush1.bf16.msra.mxu0 %v2142
        %2414 = vmatprep.subr.bf16.mxu0 %v2203
        %2415 = vmatpush2.bf16.msra.mxu0 %v2202
        %2416 = vmatprep.subr.bf16.mxu0 %v2199
        %2417 = vmatpush2.bf16.msra.mxu0 %v2198
        %2418 = vmatprep.subr.bf16.mxu0 %v2195
        %2419 = vmatpush2.bf16.msra.mxu0 %v2194
        %2420 = vmatprep.subr.bf16.mxu0 %v2191
        %2421 = vmatpush2.bf16.msra.mxu0 %v2190
        %2422 = vmatprep.subr.bf16.mxu0 %v2187
        %2423 = vmatpush2.bf16.msra.mxu0 %v2186
        %2424 = vmatprep.subr.bf16.mxu0 %v2183
        %2425 = vmatpush2.bf16.msra.mxu0 %v2182
        %2426 = vmatprep.subr.bf16.mxu0 %v2179
        %2427 = vmatpush2.bf16.msra.mxu0 %v2178
        %2428 = vmatprep.subr.bf16.mxu0 %v2175
        %2429 = vmatpush2.bf16.msra.mxu0 %v2174
        %2430 = vmatprep.mubr.bf16.mxu0 %v1577
        %2431 = vmatmul.mubr.bf16.gmra.mxu0 %v1576
        %v2432 = vpop.f32.mrf.mxu0
        %v2433 = vadd.f32 %v1741, %v2432
        %v2434 = vpop.f32.mrf.mxu0
        %v2435 = vadd.f32 %v1745, %v2434
        %v2436 = vpop.f32.mrf.mxu0
        %v2437 = vadd.f32 %v1741, %v2436
        %v2438 = vpop.f32.mrf.mxu0
        %v2439 = vadd.f32 %v1745, %v2438
        %2440 = vmatprep.mubr.bf16.mxu0 %v1581
        %2441 = vmatmul.mubr.bf16.gmra.mxu0 %v1580
        %v2442 = vpop.f32.mrf.mxu0
        %v2443 = vadd.f32 %v1741, %v2442
        %v2444 = vpop.f32.mrf.mxu0
        %v2445 = vadd.f32 %v1745, %v2444
        %v2446 = vpop.f32.mrf.mxu0
        %v2447 = vadd.f32 %v1741, %v2446
        %v2448 = vpop.f32.mrf.mxu0
        %v2449 = vadd.f32 %v1745, %v2448
        %2450 = vmatprep.mubr.bf16.mxu0 %v1585
        %2451 = vmatmul.mubr.bf16.gmra.mxu0 %v1584
        %v2452 = vpop.f32.mrf.mxu0
        %v2453 = vadd.f32 %v1741, %v2452
        %v2454 = vpop.f32.mrf.mxu0
        %v2455 = vadd.f32 %v1745, %v2454
        %v2456 = vpop.f32.mrf.mxu0
        %v2457 = vadd.f32 %v1741, %v2456
        %v2458 = vpop.f32.mrf.mxu0
        %v2459 = vadd.f32 %v1745, %v2458
        %2460 = vmatprep.mubr.bf16.mxu0 %v1589
        %2461 = vmatmul.mubr.bf16.gmra.mxu0 %v1588
        %v2462 = vpop.f32.mrf.mxu0
        %v2463 = vadd.f32 %v1741, %v2462
        %v2464 = vpop.f32.mrf.mxu0
        %v2465 = vadd.f32 %v1745, %v2464
        %v2466 = vpop.f32.mrf.mxu0
        %v2467 = vadd.f32 %v1741, %v2466
        %v2468 = vpop.f32.mrf.mxu0
        %v2469 = vadd.f32 %v1745, %v2468
        %2470 = vmatprep.mubr.bf16.mxu0 %v1593
        %2471 = vmatmul.mubr.bf16.gmra.mxu0 %v1592
        %v2472 = vpop.f32.mrf.mxu0
        %v2473 = vadd.f32 %v1741, %v2472
        %v2474 = vpop.f32.mrf.mxu0
        %v2475 = vadd.f32 %v1745, %v2474
        %v2476 = vpop.f32.mrf.mxu0
        %v2477 = vadd.f32 %v1741, %v2476
        %v2478 = vpop.f32.mrf.mxu0
        %v2479 = vadd.f32 %v1745, %v2478
        %2480 = vmatprep.mubr.bf16.mxu0 %v1597
        %2481 = vmatmul.mubr.bf16.gmra.mxu0 %v1596
        %v2482 = vpop.f32.mrf.mxu0
        %v2483 = vadd.f32 %v1741, %v2482
        %v2484 = vpop.f32.mrf.mxu0
        %v2485 = vadd.f32 %v1745, %v2484
        %v2486 = vpop.f32.mrf.mxu0
        %v2487 = vadd.f32 %v1741, %v2486
        %v2488 = vpop.f32.mrf.mxu0
        %v2489 = vadd.f32 %v1745, %v2488
        %2490 = vmatprep.mubr.bf16.mxu0 %v1601
        %2491 = vmatmul.mubr.bf16.gmra.mxu0 %v1600
        %v2492 = vpop.f32.mrf.mxu0
        %v2493 = vadd.f32 %v1741, %v2492
        %v2494 = vpop.f32.mrf.mxu0
        %v2495 = vadd.f32 %v1745, %v2494
        %v2496 = vpop.f32.mrf.mxu0
        %v2497 = vadd.f32 %v1741, %v2496
        %v2498 = vpop.f32.mrf.mxu0
        %v2499 = vadd.f32 %v1745, %v2498
        %2500 = vmatprep.mubr.bf16.mxu0 %v1605
        %2501 = vmatmul.mubr.bf16.gmra.mxu0 %v1604
        %v2502 = vpop.f32.mrf.mxu0
        %v2503 = vadd.f32 %v1741, %v2502
        %v2504 = vpop.f32.mrf.mxu0
        %v2505 = vadd.f32 %v1745, %v2504
        %v2506 = vpop.f32.mrf.mxu0
        %v2507 = vadd.f32 %v1741, %v2506
        %v2508 = vpop.f32.mrf.mxu0
        %v2509 = vadd.f32 %v1745, %v2508
        %2510 = vdwg.mxu0
        %2511 = vmatprep.subr.bf16.mxu0 %v2235
        %2512 = vmatpush1.bf16.msra.mxu0 %v2234
        %2513 = vmatprep.subr.bf16.mxu0 %v2231
        %2514 = vmatpush1.bf16.msra.mxu0 %v2230
        %2515 = vmatprep.subr.bf16.mxu0 %v2227
        %2516 = vmatpush1.bf16.msra.mxu0 %v2226
        %2517 = vmatprep.subr.bf16.mxu0 %v2223
        %2518 = vmatpush1.bf16.msra.mxu0 %v2222
        %2519 = vmatprep.subr.bf16.mxu0 %v2219
        %2520 = vmatpush1.bf16.msra.mxu0 %v2218
        %2521 = vmatprep.subr.bf16.mxu0 %v2215
        %2522 = vmatpush1.bf16.msra.mxu0 %v2214
        %2523 = vmatprep.subr.bf16.mxu0 %v2211
        %2524 = vmatpush1.bf16.msra.mxu0 %v2210
        %2525 = vmatprep.subr.bf16.mxu0 %v2207
        %2526 = vmatpush1.bf16.msra.mxu0 %v2206
        %2527 = vmatprep.subr.bf16.mxu0 %v2267
        %2528 = vmatpush2.bf16.msra.mxu0 %v2266
        %2529 = vmatprep.subr.bf16.mxu0 %v2263
        %2530 = vmatpush2.bf16.msra.mxu0 %v2262
        %2531 = vmatprep.subr.bf16.mxu0 %v2259
        %2532 = vmatpush2.bf16.msra.mxu0 %v2258
        %2533 = vmatprep.subr.bf16.mxu0 %v2255
        %2534 = vmatpush2.bf16.msra.mxu0 %v2254
        %2535 = vmatprep.subr.bf16.mxu0 %v2251
        %2536 = vmatpush2.bf16.msra.mxu0 %v2250
        %2537 = vmatprep.subr.bf16.mxu0 %v2247
        %2538 = vmatpush2.bf16.msra.mxu0 %v2246
        %2539 = vmatprep.subr.bf16.mxu0 %v2243
        %2540 = vmatpush2.bf16.msra.mxu0 %v2242
        %2541 = vmatprep.subr.bf16.mxu0 %v2239
        %2542 = vmatpush2.bf16.msra.mxu0 %v2238
        %2543 = vmatprep.mubr.bf16.mxu0 %v1579
        %2544 = vmatmul.mubr.bf16.gmra.mxu0 %v1578
        %v2545 = vpop.f32.mrf.mxu0
        %v2546 = vadd.f32 %v2433, %v2545
        %v2547 = vpop.f32.mrf.mxu0
        %v2548 = vadd.f32 %v2435, %v2547
        %v2549 = vpop.f32.mrf.mxu0
        %v2550 = vadd.f32 %v2437, %v2549
        %v2551 = vpop.f32.mrf.mxu0
        %v2552 = vadd.f32 %v2439, %v2551
        %2553 = vmatprep.mubr.bf16.mxu0 %v1583
        %2554 = vmatmul.mubr.bf16.gmra.mxu0 %v1582
        %v2555 = vpop.f32.mrf.mxu0
        %v2556 = vadd.f32 %v2443, %v2555
        %v2557 = vpop.f32.mrf.mxu0
        %v2558 = vadd.f32 %v2445, %v2557
        %v2559 = vpop.f32.mrf.mxu0
        %v2560 = vadd.f32 %v2447, %v2559
        %v2561 = vpop.f32.mrf.mxu0
        %v2562 = vadd.f32 %v2449, %v2561
        %2563 = vmatprep.mubr.bf16.mxu0 %v1587
        %2564 = vmatmul.mubr.bf16.gmra.mxu0 %v1586
        %v2565 = vpop.f32.mrf.mxu0
        %v2566 = vadd.f32 %v2453, %v2565
        %v2567 = vpop.f32.mrf.mxu0
        %v2568 = vadd.f32 %v2455, %v2567
        %v2569 = vpop.f32.mrf.mxu0
        %v2570 = vadd.f32 %v2457, %v2569
        %v2571 = vpop.f32.mrf.mxu0
        %v2572 = vadd.f32 %v2459, %v2571
        %2573 = vmatprep.mubr.bf16.mxu0 %v1591
        %2574 = vmatmul.mubr.bf16.gmra.mxu0 %v1590
        %v2575 = vpop.f32.mrf.mxu0
        %v2576 = vadd.f32 %v2463, %v2575
        %v2577 = vpop.f32.mrf.mxu0
        %v2578 = vadd.f32 %v2465, %v2577
        %v2579 = vpop.f32.mrf.mxu0
        %v2580 = vadd.f32 %v2467, %v2579
        %v2581 = vpop.f32.mrf.mxu0
        %v2582 = vadd.f32 %v2469, %v2581
        %2583 = vmatprep.mubr.bf16.mxu0 %v1595
        %2584 = vmatmul.mubr.bf16.gmra.mxu0 %v1594
        %v2585 = vpop.f32.mrf.mxu0
        %v2586 = vadd.f32 %v2473, %v2585
        %v2587 = vpop.f32.mrf.mxu0
        %v2588 = vadd.f32 %v2475, %v2587
        %v2589 = vpop.f32.mrf.mxu0
        %v2590 = vadd.f32 %v2477, %v2589
        %v2591 = vpop.f32.mrf.mxu0
        %v2592 = vadd.f32 %v2479, %v2591
        %2593 = vmatprep.mubr.bf16.mxu0 %v1599
        %2594 = vmatmul.mubr.bf16.gmra.mxu0 %v1598
        %v2595 = vpop.f32.mrf.mxu0
        %v2596 = vadd.f32 %v2483, %v2595
        %v2597 = vpop.f32.mrf.mxu0
        %v2598 = vadd.f32 %v2485, %v2597
        %v2599 = vpop.f32.mrf.mxu0
        %v2600 = vadd.f32 %v2487, %v2599
        %v2601 = vpop.f32.mrf.mxu0
        %v2602 = vadd.f32 %v2489, %v2601
        %2603 = vmatprep.mubr.bf16.mxu0 %v1603
        %2604 = vmatmul.mubr.bf16.gmra.mxu0 %v1602
        %v2605 = vpop.f32.mrf.mxu0
        %v2606 = vadd.f32 %v2493, %v2605
        %v2607 = vpop.f32.mrf.mxu0
        %v2608 = vadd.f32 %v2495, %v2607
        %v2609 = vpop.f32.mrf.mxu0
        %v2610 = vadd.f32 %v2497, %v2609
        %v2611 = vpop.f32.mrf.mxu0
        %v2612 = vadd.f32 %v2499, %v2611
        %2613 = vmatprep.mubr.bf16.mxu0 %v1607
        %2614 = vmatmul.mubr.bf16.gmra.mxu0 %v1606
        %v2615 = vpop.f32.mrf.mxu0
        %v2616 = vadd.f32 %v2503, %v2615
        %v2617 = vpop.f32.mrf.mxu0
        %v2618 = vadd.f32 %v2505, %v2617
        %v2619 = vpop.f32.mrf.mxu0
        %v2620 = vadd.f32 %v2507, %v2619
        %v2621 = vpop.f32.mrf.mxu0
        %v2622 = vadd.f32 %v2509, %v2621
        %2623 = vdwg.mxu0
        %2624 = vmatprep.subr.bf16.mxu0 %v2173
        %2625 = vmatpush1.bf16.msra.mxu0 %v2172
        %2626 = vmatprep.subr.bf16.mxu0 %v2169
        %2627 = vmatpush1.bf16.msra.mxu0 %v2168
        %2628 = vmatprep.subr.bf16.mxu0 %v2165
        %2629 = vmatpush1.bf16.msra.mxu0 %v2164
        %2630 = vmatprep.subr.bf16.mxu0 %v2161
        %2631 = vmatpush1.bf16.msra.mxu0 %v2160
        %2632 = vmatprep.subr.bf16.mxu0 %v2157
        %2633 = vmatpush1.bf16.msra.mxu0 %v2156
        %2634 = vmatprep.subr.bf16.mxu0 %v2153
        %2635 = vmatpush1.bf16.msra.mxu0 %v2152
        %2636 = vmatprep.subr.bf16.mxu0 %v2149
        %2637 = vmatpush1.bf16.msra.mxu0 %v2148
        %2638 = vmatprep.subr.bf16.mxu0 %v2145
        %2639 = vmatpush1.bf16.msra.mxu0 %v2144
        %2640 = vmatprep.subr.bf16.mxu0 %v2205
        %2641 = vmatpush2.bf16.msra.mxu0 %v2204
        %2642 = vmatprep.subr.bf16.mxu0 %v2201
        %2643 = vmatpush2.bf16.msra.mxu0 %v2200
        %2644 = vmatprep.subr.bf16.mxu0 %v2197
        %2645 = vmatpush2.bf16.msra.mxu0 %v2196
        %2646 = vmatprep.subr.bf16.mxu0 %v2193
        %2647 = vmatpush2.bf16.msra.mxu0 %v2192
        %2648 = vmatprep.subr.bf16.mxu0 %v2189
        %2649 = vmatpush2.bf16.msra.mxu0 %v2188
        %2650 = vmatprep.subr.bf16.mxu0 %v2185
        %2651 = vmatpush2.bf16.msra.mxu0 %v2184
        %2652 = vmatprep.subr.bf16.mxu0 %v2181
        %2653 = vmatpush2.bf16.msra.mxu0 %v2180
        %2654 = vmatprep.subr.bf16.mxu0 %v2177
        %2655 = vmatpush2.bf16.msra.mxu0 %v2176
        %2656 = vmatprep.mubr.bf16.mxu0 %v1577
        %2657 = vmatmul.mubr.bf16.gmra.mxu0 %v1576
        %v2658 = vpop.f32.mrf.mxu0
        %v2659 = vadd.f32 %v1749, %v2658
        %v2660 = vpop.f32.mrf.mxu0
        %v2661 = vadd.f32 %v1753, %v2660
        %v2662 = vpop.f32.mrf.mxu0
        %v2663 = vadd.f32 %v1749, %v2662
        %v2664 = vpop.f32.mrf.mxu0
        %v2665 = vadd.f32 %v1753, %v2664
        %2666 = vmatprep.mubr.bf16.mxu0 %v1581
        %2667 = vmatmul.mubr.bf16.gmra.mxu0 %v1580
        %v2668 = vpop.f32.mrf.mxu0
        %v2669 = vadd.f32 %v1749, %v2668
        %v2670 = vpop.f32.mrf.mxu0
        %v2671 = vadd.f32 %v1753, %v2670
        %v2672 = vpop.f32.mrf.mxu0
        %v2673 = vadd.f32 %v1749, %v2672
        %v2674 = vpop.f32.mrf.mxu0
        %v2675 = vadd.f32 %v1753, %v2674
        %2676 = vmatprep.mubr.bf16.mxu0 %v1585
        %2677 = vmatmul.mubr.bf16.gmra.mxu0 %v1584
        %v2678 = vpop.f32.mrf.mxu0
        %v2679 = vadd.f32 %v1749, %v2678
        %v2680 = vpop.f32.mrf.mxu0
        %v2681 = vadd.f32 %v1753, %v2680
        %v2682 = vpop.f32.mrf.mxu0
        %v2683 = vadd.f32 %v1749, %v2682
        %v2684 = vpop.f32.mrf.mxu0
        %v2685 = vadd.f32 %v1753, %v2684
        %2686 = vmatprep.mubr.bf16.mxu0 %v1589
        %2687 = vmatmul.mubr.bf16.gmra.mxu0 %v1588
        %v2688 = vpop.f32.mrf.mxu0
        %v2689 = vadd.f32 %v1749, %v2688
        %v2690 = vpop.f32.mrf.mxu0
        %v2691 = vadd.f32 %v1753, %v2690
        %v2692 = vpop.f32.mrf.mxu0
        %v2693 = vadd.f32 %v1749, %v2692
        %v2694 = vpop.f32.mrf.mxu0
        %v2695 = vadd.f32 %v1753, %v2694
        %2696 = vmatprep.mubr.bf16.mxu0 %v1593
        %2697 = vmatmul.mubr.bf16.gmra.mxu0 %v1592
        %v2698 = vpop.f32.mrf.mxu0
        %v2699 = vadd.f32 %v1749, %v2698
        %v2700 = vpop.f32.mrf.mxu0
        %v2701 = vadd.f32 %v1753, %v2700
        %v2702 = vpop.f32.mrf.mxu0
        %v2703 = vadd.f32 %v1749, %v2702
        %v2704 = vpop.f32.mrf.mxu0
        %v2705 = vadd.f32 %v1753, %v2704
        %2706 = vmatprep.mubr.bf16.mxu0 %v1597
        %2707 = vmatmul.mubr.bf16.gmra.mxu0 %v1596
        %v2708 = vpop.f32.mrf.mxu0
        %v2709 = vadd.f32 %v1749, %v2708
        %v2710 = vpop.f32.mrf.mxu0
        %v2711 = vadd.f32 %v1753, %v2710
        %v2712 = vpop.f32.mrf.mxu0
        %v2713 = vadd.f32 %v1749, %v2712
        %v2714 = vpop.f32.mrf.mxu0
        %v2715 = vadd.f32 %v1753, %v2714
        %2716 = vmatprep.mubr.bf16.mxu0 %v1601
        %2717 = vmatmul.mubr.bf16.gmra.mxu0 %v1600
        %v2718 = vpop.f32.mrf.mxu0
        %v2719 = vadd.f32 %v1749, %v2718
        %v2720 = vpop.f32.mrf.mxu0
        %v2721 = vadd.f32 %v1753, %v2720
        %v2722 = vpop.f32.mrf.mxu0
        %v2723 = vadd.f32 %v1749, %v2722
        %v2724 = vpop.f32.mrf.mxu0
        %v2725 = vadd.f32 %v1753, %v2724
        %2726 = vmatprep.mubr.bf16.mxu0 %v1605
        %2727 = vmatmul.mubr.bf16.gmra.mxu0 %v1604
        %v2728 = vpop.f32.mrf.mxu0
        %v2729 = vadd.f32 %v1749, %v2728
        %v2730 = vpop.f32.mrf.mxu0
        %v2731 = vadd.f32 %v1753, %v2730
        %v2732 = vpop.f32.mrf.mxu0
        %v2733 = vadd.f32 %v1749, %v2732
        %v2734 = vpop.f32.mrf.mxu0
        %v2735 = vadd.f32 %v1753, %v2734
        %2736 = vdwg.mxu0
        %2737 = vmatprep.subr.bf16.mxu0 %v2237
        %2738 = vmatpush1.bf16.msra.mxu0 %v2236
        %2739 = vmatprep.subr.bf16.mxu0 %v2233
        %2740 = vmatpush1.bf16.msra.mxu0 %v2232
        %2741 = vmatprep.subr.bf16.mxu0 %v2229
        %2742 = vmatpush1.bf16.msra.mxu0 %v2228
        %2743 = vmatprep.subr.bf16.mxu0 %v2225
        %2744 = vmatpush1.bf16.msra.mxu0 %v2224
        %2745 = vmatprep.subr.bf16.mxu0 %v2221
        %2746 = vmatpush1.bf16.msra.mxu0 %v2220
        %2747 = vmatprep.subr.bf16.mxu0 %v2217
        %2748 = vmatpush1.bf16.msra.mxu0 %v2216
        %2749 = vmatprep.subr.bf16.mxu0 %v2213
        %2750 = vmatpush1.bf16.msra.mxu0 %v2212
        %2751 = vmatprep.subr.bf16.mxu0 %v2209
        %2752 = vmatpush1.bf16.msra.mxu0 %v2208
        %2753 = vmatprep.subr.bf16.mxu0 %v2269
        %2754 = vmatpush2.bf16.msra.mxu0 %v2268
        %2755 = vmatprep.subr.bf16.mxu0 %v2265
        %2756 = vmatpush2.bf16.msra.mxu0 %v2264
        %2757 = vmatprep.subr.bf16.mxu0 %v2261
        %2758 = vmatpush2.bf16.msra.mxu0 %v2260
        %2759 = vmatprep.subr.bf16.mxu0 %v2257
        %2760 = vmatpush2.bf16.msra.mxu0 %v2256
        %2761 = vmatprep.subr.bf16.mxu0 %v2253
        %2762 = vmatpush2.bf16.msra.mxu0 %v2252
        %2763 = vmatprep.subr.bf16.mxu0 %v2249
        %2764 = vmatpush2.bf16.msra.mxu0 %v2248
        %2765 = vmatprep.subr.bf16.mxu0 %v2245
        %2766 = vmatpush2.bf16.msra.mxu0 %v2244
        %2767 = vmatprep.subr.bf16.mxu0 %v2241
        %2768 = vmatpush2.bf16.msra.mxu0 %v2240
        %2769 = vmatprep.mubr.bf16.mxu0 %v1579
        %2770 = vmatmul.mubr.bf16.gmra.mxu0 %v1578
        %v2771 = vpop.f32.mrf.mxu0
        %v2772 = vadd.f32 %v2659, %v2771
        %v2773 = vpop.f32.mrf.mxu0
        %v2774 = vadd.f32 %v2661, %v2773
        %v2775 = vpop.f32.mrf.mxu0
        %v2776 = vadd.f32 %v2663, %v2775
        %v2777 = vpop.f32.mrf.mxu0
        %v2778 = vadd.f32 %v2665, %v2777
        %2779 = vmatprep.mubr.bf16.mxu0 %v1583
        %2780 = vmatmul.mubr.bf16.gmra.mxu0 %v1582
        %v2781 = vpop.f32.mrf.mxu0
        %v2782 = vadd.f32 %v2669, %v2781
        %v2783 = vpop.f32.mrf.mxu0
        %v2784 = vadd.f32 %v2671, %v2783
        %v2785 = vpop.f32.mrf.mxu0
        %v2786 = vadd.f32 %v2673, %v2785
        %v2787 = vpop.f32.mrf.mxu0
        %v2788 = vadd.f32 %v2675, %v2787
        %2789 = vmatprep.mubr.bf16.mxu0 %v1587
        %2790 = vmatmul.mubr.bf16.gmra.mxu0 %v1586
        %v2791 = vpop.f32.mrf.mxu0
        %v2792 = vadd.f32 %v2679, %v2791
        %v2793 = vpop.f32.mrf.mxu0
        %v2794 = vadd.f32 %v2681, %v2793
        %v2795 = vpop.f32.mrf.mxu0
        %v2796 = vadd.f32 %v2683, %v2795
        %v2797 = vpop.f32.mrf.mxu0
        %v2798 = vadd.f32 %v2685, %v2797
        %2799 = vmatprep.mubr.bf16.mxu0 %v1591
        %2800 = vmatmul.mubr.bf16.gmra.mxu0 %v1590
        %v2801 = vpop.f32.mrf.mxu0
        %v2802 = vadd.f32 %v2689, %v2801
        %v2803 = vpop.f32.mrf.mxu0
        %v2804 = vadd.f32 %v2691, %v2803
        %v2805 = vpop.f32.mrf.mxu0
        %v2806 = vadd.f32 %v2693, %v2805
        %v2807 = vpop.f32.mrf.mxu0
        %v2808 = vadd.f32 %v2695, %v2807
        %2809 = vmatprep.mubr.bf16.mxu0 %v1595
        %2810 = vmatmul.mubr.bf16.gmra.mxu0 %v1594
        %v2811 = vpop.f32.mrf.mxu0
        %v2812 = vadd.f32 %v2699, %v2811
        %v2813 = vpop.f32.mrf.mxu0
        %v2814 = vadd.f32 %v2701, %v2813
        %v2815 = vpop.f32.mrf.mxu0
        %v2816 = vadd.f32 %v2703, %v2815
        %v2817 = vpop.f32.mrf.mxu0
        %v2818 = vadd.f32 %v2705, %v2817
        %2819 = vmatprep.mubr.bf16.mxu0 %v1599
        %2820 = vmatmul.mubr.bf16.gmra.mxu0 %v1598
        %v2821 = vpop.f32.mrf.mxu0
        %v2822 = vadd.f32 %v2709, %v2821
        %v2823 = vpop.f32.mrf.mxu0
        %v2824 = vadd.f32 %v2711, %v2823
        %v2825 = vpop.f32.mrf.mxu0
        %v2826 = vadd.f32 %v2713, %v2825
        %v2827 = vpop.f32.mrf.mxu0
        %v2828 = vadd.f32 %v2715, %v2827
        %2829 = vmatprep.mubr.bf16.mxu0 %v1603
        %2830 = vmatmul.mubr.bf16.gmra.mxu0 %v1602
        %v2831 = vpop.f32.mrf.mxu0
        %v2832 = vadd.f32 %v2719, %v2831
        %v2833 = vpop.f32.mrf.mxu0
        %v2834 = vadd.f32 %v2721, %v2833
        %v2835 = vpop.f32.mrf.mxu0
        %v2836 = vadd.f32 %v2723, %v2835
        %v2837 = vpop.f32.mrf.mxu0
        %v2838 = vadd.f32 %v2725, %v2837
        %2839 = vmatprep.mubr.bf16.mxu0 %v1607
        %2840 = vmatmul.mubr.bf16.gmra.mxu0 %v1606
        %v2841 = vpop.f32.mrf.mxu0
        %v2842 = vadd.f32 %v2729, %v2841
        %v2843 = vpop.f32.mrf.mxu0
        %v2844 = vadd.f32 %v2731, %v2843
        %v2845 = vpop.f32.mrf.mxu0
        %v2846 = vadd.f32 %v2733, %v2845
        %v2847 = vpop.f32.mrf.mxu0
        %v2848 = vadd.f32 %v2735, %v2847
        %2849 = vdwg.mxu0
        %v2850 = vmax.f32 %v2546, 0.0
        %v2851 = vmax.f32 %v2548, 0.0
        %v2852 = vmax.f32 %v2772, 0.0
        %v2853 = vmax.f32 %v2774, 0.0
        %v2854 = vmax.f32 %v2550, 0.0
        %v2855 = vmax.f32 %v2552, 0.0
        %v2856 = vmax.f32 %v2776, 0.0
        %v2857 = vmax.f32 %v2778, 0.0
        %v2858 = vmax.f32 %v2556, 0.0
        %v2859 = vmax.f32 %v2558, 0.0
        %v2860 = vmax.f32 %v2782, 0.0
        %v2861 = vmax.f32 %v2784, 0.0
        %v2862 = vmax.f32 %v2560, 0.0
        %v2863 = vmax.f32 %v2562, 0.0
        %v2864 = vmax.f32 %v2786, 0.0
        %v2865 = vmax.f32 %v2788, 0.0
        %v2866 = vmax.f32 %v2566, 0.0
        %v2867 = vmax.f32 %v2568, 0.0
        %v2868 = vmax.f32 %v2792, 0.0
        %v2869 = vmax.f32 %v2794, 0.0
        %v2870 = vmax.f32 %v2570, 0.0
        %v2871 = vmax.f32 %v2572, 0.0
        %v2872 = vmax.f32 %v2796, 0.0
        %v2873 = vmax.f32 %v2798, 0.0
        %v2874 = vmax.f32 %v2576, 0.0
        %v2875 = vmax.f32 %v2578, 0.0
        %v2876 = vmax.f32 %v2802, 0.0
        %v2877 = vmax.f32 %v2804, 0.0
        %v2878 = vmax.f32 %v2580, 0.0
        %v2879 = vmax.f32 %v2582, 0.0
        %v2880 = vmax.f32 %v2806, 0.0
        %v2881 = vmax.f32 %v2808, 0.0
        %v2882 = vmax.f32 %v2586, 0.0
        %v2883 = vmax.f32 %v2588, 0.0
        %v2884 = vmax.f32 %v2812, 0.0
        %v2885 = vmax.f32 %v2814, 0.0
        %v2886 = vmax.f32 %v2590, 0.0
        %v2887 = vmax.f32 %v2592, 0.0
        %v2888 = vmax.f32 %v2816, 0.0
        %v2889 = vmax.f32 %v2818, 0.0
        %v2890 = vmax.f32 %v2596, 0.0
        %v2891 = vmax.f32 %v2598, 0.0
        %v2892 = vmax.f32 %v2822, 0.0
        %v2893 = vmax.f32 %v2824, 0.0
        %v2894 = vmax.f32 %v2600, 0.0
        %v2895 = vmax.f32 %v2602, 0.0
        %v2896 = vmax.f32 %v2826, 0.0
        %v2897 = vmax.f32 %v2828, 0.0
        %v2898 = vmax.f32 %v2606, 0.0
        %v2899 = vmax.f32 %v2608, 0.0
        %v2900 = vmax.f32 %v2832, 0.0
        %v2901 = vmax.f32 %v2834, 0.0
        %v2902 = vmax.f32 %v2610, 0.0
        %v2903 = vmax.f32 %v2612, 0.0
        %v2904 = vmax.f32 %v2836, 0.0
        %v2905 = vmax.f32 %v2838, 0.0
        %v2906 = vmax.f32 %v2616, 0.0
        %v2907 = vmax.f32 %v2618, 0.0
        %v2908 = vmax.f32 %v2842, 0.0
        %v2909 = vmax.f32 %v2844, 0.0
        %v2910 = vmax.f32 %v2620, 0.0
        %v2911 = vmax.f32 %v2622, 0.0
        %v2912 = vmax.f32 %v2846, 0.0
        %v2913 = vmax.f32 %v2848, 0.0
        %v2914 = vld [vmem:[%s494] sm:$0xff]
        %v2915 = vld [vmem:[%s494 + $0x8] sm:$0xff]
        %v2916 = vld [vmem:[%s494 + $0x10] sm:$0xff]
        %v2917 = vld [vmem:[%s494 + $0x18] sm:$0xff]
        %v2918 = vld [vmem:[%s494 + $0x20] sm:$0xff]
        %v2919 = vld [vmem:[%s494 + $0x28] sm:$0xff]
        %v2920 = vld [vmem:[%s494 + $0x30] sm:$0xff]
        %v2921 = vld [vmem:[%s494 + $0x38] sm:$0xff]
        %v2922 = vld [vmem:[%s494 + $0x40] sm:$0xff]
        %v2923 = vld [vmem:[%s494 + $0x48] sm:$0xff]
        %v2924 = vld [vmem:[%s494 + $0x50] sm:$0xff]
        %v2925 = vld [vmem:[%s494 + $0x58] sm:$0xff]
        %v2926 = vld [vmem:[%s494 + $0x60] sm:$0xff]
        %v2927 = vld [vmem:[%s494 + $0x68] sm:$0xff]
        %v2928 = vld [vmem:[%s494 + $0x70] sm:$0xff]
        %v2929 = vld [vmem:[%s494 + $0x78] sm:$0xff]
        %v2930 = vunpack.c.0.s8 %v2914
        %v2931 = vunpack.c.0.s8 %v2915
        %v2932 = vunpack.c.0.s8 %v2916
        %v2933 = vunpack.c.0.s8 %v2917
        %v2934 = vunpack.c.1.s8 %v2914
        %v2935 = vunpack.c.1.s8 %v2915
        %v2936 = vunpack.c.1.s8 %v2916
        %v2937 = vunpack.c.1.s8 %v2917
        %v2938 = vunpack.c.2.s8 %v2914
        %v2939 = vunpack.c.2.s8 %v2915
        %v2940 = vunpack.c.2.s8 %v2916
        %v2941 = vunpack.c.2.s8 %v2917
        %v2942 = vunpack.c.3.s8 %v2914
        %v2943 = vunpack.c.3.s8 %v2915
        %v2944 = vunpack.c.3.s8 %v2916
        %v2945 = vunpack.c.3.s8 %v2917
        %v2946 = vunpack.c.0.s8 %v2918
        %v2947 = vunpack.c.0.s8 %v2919
        %v2948 = vunpack.c.0.s8 %v2920
        %v2949 = vunpack.c.0.s8 %v2921
        %v2950 = vunpack.c.1.s8 %v2918
        %v2951 = vunpack.c.1.s8 %v2919
        %v2952 = vunpack.c.1.s8 %v2920
        %v2953 = vunpack.c.1.s8 %v2921
        %v2954 = vunpack.c.2.s8 %v2918
        %v2955 = vunpack.c.2.s8 %v2919
        %v2956 = vunpack.c.2.s8 %v2920
        %v2957 = vunpack.c.2.s8 %v2921
        %v2958 = vunpack.c.3.s8 %v2918
        %v2959 = vunpack.c.3.s8 %v2919
        %v2960 = vunpack.c.3.s8 %v2920
        %v2961 = vunpack.c.3.s8 %v2921
        %v2962 = vunpack.c.0.s8 %v2922
        %v2963 = vunpack.c.0.s8 %v2923
        %v2964 = vunpack.c.0.s8 %v2924
        %v2965 = vunpack.c.0.s8 %v2925
        %v2966 = vunpack.c.1.s8 %v2922
        %v2967 = vunpack.c.1.s8 %v2923
        %v2968 = vunpack.c.1.s8 %v2924
        %v2969 = vunpack.c.1.s8 %v2925
        %v2970 = vunpack.c.2.s8 %v2922
        %v2971 = vunpack.c.2.s8 %v2923
        %v2972 = vunpack.c.2.s8 %v2924
        %v2973 = vunpack.c.2.s8 %v2925
        %v2974 = vunpack.c.3.s8 %v2922
        %v2975 = vunpack.c.3.s8 %v2923
        %v2976 = vunpack.c.3.s8 %v2924
        %v2977 = vunpack.c.3.s8 %v2925
        %v2978 = vunpack.c.0.s8 %v2926
        %v2979 = vunpack.c.0.s8 %v2927
        %v2980 = vunpack.c.0.s8 %v2928
        %v2981 = vunpack.c.0.s8 %v2929
        %v2982 = vunpack.c.1.s8 %v2926
        %v2983 = vunpack.c.1.s8 %v2927
        %v2984 = vunpack.c.1.s8 %v2928
        %v2985 = vunpack.c.1.s8 %v2929
        %v2986 = vunpack.c.2.s8 %v2926
        %v2987 = vunpack.c.2.s8 %v2927
        %v2988 = vunpack.c.2.s8 %v2928
        %v2989 = vunpack.c.2.s8 %v2929
        %v2990 = vunpack.c.3.s8 %v2926
        %v2991 = vunpack.c.3.s8 %v2927
        %v2992 = vunpack.c.3.s8 %v2928
        %v2993 = vunpack.c.3.s8 %v2929
        %v2994 = vcvt.s32.f32 %v2930
        %v2995 = vcvt.s32.f32 %v2931
        %v2996 = vcvt.s32.f32 %v2932
        %v2997 = vcvt.s32.f32 %v2933
        %v2998 = vcvt.s32.f32 %v2934
        %v2999 = vcvt.s32.f32 %v2935
        %v3000 = vcvt.s32.f32 %v2936
        %v3001 = vcvt.s32.f32 %v2937
        %v3002 = vcvt.s32.f32 %v2938
        %v3003 = vcvt.s32.f32 %v2939
        %v3004 = vcvt.s32.f32 %v2940
        %v3005 = vcvt.s32.f32 %v2941
        %v3006 = vcvt.s32.f32 %v2942
        %v3007 = vcvt.s32.f32 %v2943
        %v3008 = vcvt.s32.f32 %v2944
        %v3009 = vcvt.s32.f32 %v2945
        %v3010 = vcvt.s32.f32 %v2946
        %v3011 = vcvt.s32.f32 %v2947
        %v3012 = vcvt.s32.f32 %v2948
        %v3013 = vcvt.s32.f32 %v2949
        %v3014 = vcvt.s32.f32 %v2950
        %v3015 = vcvt.s32.f32 %v2951
        %v3016 = vcvt.s32.f32 %v2952
        %v3017 = vcvt.s32.f32 %v2953
        %v3018 = vcvt.s32.f32 %v2954
        %v3019 = vcvt.s32.f32 %v2955
        %v3020 = vcvt.s32.f32 %v2956
        %v3021 = vcvt.s32.f32 %v2957
        %v3022 = vcvt.s32.f32 %v2958
        %v3023 = vcvt.s32.f32 %v2959
        %v3024 = vcvt.s32.f32 %v2960
        %v3025 = vcvt.s32.f32 %v2961
        %v3026 = vcvt.s32.f32 %v2962
        %v3027 = vcvt.s32.f32 %v2963
        %v3028 = vcvt.s32.f32 %v2964
        %v3029 = vcvt.s32.f32 %v2965
        %v3030 = vcvt.s32.f32 %v2966
        %v3031 = vcvt.s32.f32 %v2967
        %v3032 = vcvt.s32.f32 %v2968
        %v3033 = vcvt.s32.f32 %v2969
        %v3034 = vcvt.s32.f32 %v2970
        %v3035 = vcvt.s32.f32 %v2971
        %v3036 = vcvt.s32.f32 %v2972
        %v3037 = vcvt.s32.f32 %v2973
        %v3038 = vcvt.s32.f32 %v2974
        %v3039 = vcvt.s32.f32 %v2975
        %v3040 = vcvt.s32.f32 %v2976
        %v3041 = vcvt.s32.f32 %v2977
        %v3042 = vcvt.s32.f32 %v2978
        %v3043 = vcvt.s32.f32 %v2979
        %v3044 = vcvt.s32.f32 %v2980
        %v3045 = vcvt.s32.f32 %v2981
        %v3046 = vcvt.s32.f32 %v2982
        %v3047 = vcvt.s32.f32 %v2983
        %v3048 = vcvt.s32.f32 %v2984
        %v3049 = vcvt.s32.f32 %v2985
        %v3050 = vcvt.s32.f32 %v2986
        %v3051 = vcvt.s32.f32 %v2987
        %v3052 = vcvt.s32.f32 %v2988
        %v3053 = vcvt.s32.f32 %v2989
        %v3054 = vcvt.s32.f32 %v2990
        %v3055 = vcvt.s32.f32 %v2991
        %v3056 = vcvt.s32.f32 %v2992
        %v3057 = vcvt.s32.f32 %v2993
        %v3058 = vmul.f32 %v2994, 1.25
        %v3059 = vmul.f32 %v2995, 1.25
        %v3060 = vmul.f32 %v2996, 1.25
        %v3061 = vmul.f32 %v2997, 1.25
        %v3062 = vmul.f32 %v2998, 1.25
        %v3063 = vmul.f32 %v2999, 1.25
        %v3064 = vmul.f32 %v3000, 1.25
        %v3065 = vmul.f32 %v3001, 1.25
        %v3066 = vmul.f32 %v3002, 1.25
        %v3067 = vmul.f32 %v3003, 1.25
        %v3068 = vmul.f32 %v3004, 1.25
        %v3069 = vmul.f32 %v3005, 1.25
        %v3070 = vmul.f32 %v3006, 1.25
        %v3071 = vmul.f32 %v3007, 1.25
        %v3072 = vmul.f32 %v3008, 1.25
        %v3073 = vmul.f32 %v3009, 1.25
        %v3074 = vmul.f32 %v3010, 1.25
        %v3075 = vmul.f32 %v3011, 1.25
        %v3076 = vmul.f32 %v3012, 1.25
        %v3077 = vmul.f32 %v3013, 1.25
        %v3078 = vmul.f32 %v3014, 1.25
        %v3079 = vmul.f32 %v3015, 1.25
        %v3080 = vmul.f32 %v3016, 1.25
        %v3081 = vmul.f32 %v3017, 1.25
        %v3082 = vmul.f32 %v3018, 1.25
        %v3083 = vmul.f32 %v3019, 1.25
        %v3084 = vmul.f32 %v3020, 1.25
        %v3085 = vmul.f32 %v3021, 1.25
        %v3086 = vmul.f32 %v3022, 1.25
        %v3087 = vmul.f32 %v3023, 1.25
        %v3088 = vmul.f32 %v3024, 1.25
        %v3089 = vmul.f32 %v3025, 1.25
        %v3090 = vmul.f32 %v3026, 1.25
        %v3091 = vmul.f32 %v3027, 1.25
        %v3092 = vmul.f32 %v3028, 1.25
        %v3093 = vmul.f32 %v3029, 1.25
        %v3094 = vmul.f32 %v3030, 1.25
        %v3095 = vmul.f32 %v3031, 1.25
        %v3096 = vmul.f32 %v3032, 1.25
        %v3097 = vmul.f32 %v3033, 1.25
        %v3098 = vmul.f32 %v3034, 1.25
        %v3099 = vmul.f32 %v3035, 1.25
        %v3100 = vmul.f32 %v3036, 1.25
        %v3101 = vmul.f32 %v3037, 1.25
        %v3102 = vmul.f32 %v3038, 1.25
        %v3103 = vmul.f32 %v3039, 1.25
        %v3104 = vmul.f32 %v3040, 1.25
        %v3105 = vmul.f32 %v3041, 1.25
        %v3106 = vmul.f32 %v3042, 1.25
        %v3107 = vmul.f32 %v3043, 1.25
        %v3108 = vmul.f32 %v3044, 1.25
        %v3109 = vmul.f32 %v3045, 1.25
        %v3110 = vmul.f32 %v3046, 1.25
        %v3111 = vmul.f32 %v3047, 1.25
        %v3112 = vmul.f32 %v3048, 1.25
        %v3113 = vmul.f32 %v3049, 1.25
        %v3114 = vmul.f32 %v3050, 1.25
        %v3115 = vmul.f32 %v3051, 1.25
        %v3116 = vmul.f32 %v3052, 1.25
        %v3117 = vmul.f32 %v3053, 1.25
        %v3118 = vmul.f32 %v3054, 1.25
        %v3119 = vmul.f32 %v3055, 1.25
        %v3120 = vmul.f32 %v3056, 1.25
        %v3121 = vmul.f32 %v3057, 1.25
        %v3122 = vmul.f32 %v2850, %v3058
        %v3123 = vmul.f32 %v2851, %v3059
        %v3124 = vmul.f32 %v2852, %v3060
        %v3125 = vmul.f32 %v2853, %v3061
        %v3126 = vmul.f32 %v2854, %v3062
        %v3127 = vmul.f32 %v2855, %v3063
        %v3128 = vmul.f32 %v2856, %v3064
        %v3129 = vmul.f32 %v2857, %v3065
        %v3130 = vmul.f32 %v2858, %v3066
        %v3131 = vmul.f32 %v2859, %v3067
        %v3132 = vmul.f32 %v2860, %v3068
        %v3133 = vmul.f32 %v2861, %v3069
        %v3134 = vmul.f32 %v2862, %v3070
        %v3135 = vmul.f32 %v2863, %v3071
        %v3136 = vmul.f32 %v2864, %v3072
        %v3137 = vmul.f32 %v2865, %v3073
        %v3138 = vmul.f32 %v2866, %v3074
        %v3139 = vmul.f32 %v2867, %v3075
        %v3140 = vmul.f32 %v2868, %v3076
        %v3141 = vmul.f32 %v2869, %v3077
        %v3142 = vmul.f32 %v2870, %v3078
        %v3143 = vmul.f32 %v2871, %v3079
        %v3144 = vmul.f32 %v2872, %v3080
        %v3145 = vmul.f32 %v2873, %v3081
        %v3146 = vmul.f32 %v2874, %v3082
        %v3147 = vmul.f32 %v2875, %v3083
        %v3148 = vmul.f32 %v2876, %v3084
        %v3149 = vmul.f32 %v2877, %v3085
        %v3150 = vmul.f32 %v2878, %v3086
        %v3151 = vmul.f32 %v2879, %v3087
        %v3152 = vmul.f32 %v2880, %v3088
        %v3153 = vmul.f32 %v2881, %v3089
        %v3154 = vmul.f32 %v2882, %v3090
        %v3155 = vmul.f32 %v2883, %v3091
        %v3156 = vmul.f32 %v2884, %v3092
        %v3157 = vmul.f32 %v2885, %v3093
        %v3158 = vmul.f32 %v2886, %v3094
        %v3159 = vmul.f32 %v2887, %v3095
        %v3160 = vmul.f32 %v2888, %v3096
        %v3161 = vmul.f32 %v2889, %v3097
        %v3162 = vmul.f32 %v2890, %v3098
        %v3163 = vmul.f32 %v2891, %v3099
        %v3164 = vmul.f32 %v2892, %v3100
        %v3165 = vmul.f32 %v2893, %v3101
        %v3166 = vmul.f32 %v2894, %v3102
        %v3167 = vmul.f32 %v2895, %v3103
        %v3168 = vmul.f32 %v2896, %v3104
        %v3169 = vmul.f32 %v2897, %v3105
        %v3170 = vmul.f32 %v2898, %v3106
        %v3171 = vmul.f32 %v2899, %v3107
        %v3172 = vmul.f32 %v2900, %v3108
        %v3173 = vmul.f32 %v2901, %v3109
        %v3174 = vmul.f32 %v2902, %v3110
        %v3175 = vmul.f32 %v2903, %v3111
        %v3176 = vmul.f32 %v2904, %v3112
        %v3177 = vmul.f32 %v2905, %v3113
        %v3178 = vmul.f32 %v2906, %v3114
        %v3179 = vmul.f32 %v2907, %v3115
        %v3180 = vmul.f32 %v2908, %v3116
        %v3181 = vmul.f32 %v2909, %v3117
        %v3182 = vmul.f32 %v2910, %v3118
        %v3183 = vmul.f32 %v2911, %v3119
        %v3184 = vmul.f32 %v2912, %v3120
        %v3185 = vmul.f32 %v2913, %v3121
        %v3186 = vpack.c.bf16 %v3126, %v3122
        %v3187 = vpack.c.bf16 %v3127, %v3123
        %v3188 = vpack.c.bf16 %v3128, %v3124
        %v3189 = vpack.c.bf16 %v3129, %v3125
        %v3190 = vpack.c.bf16 %v3134, %v3130
        %v3191 = vpack.c.bf16 %v3135, %v3131
        %v3192 = vpack.c.bf16 %v3136, %v3132
        %v3193 = vpack.c.bf16 %v3137, %v3133
        %v3194 = vpack.c.bf16 %v3142, %v3138
        %v3195 = vpack.c.bf16 %v3143, %v3139
        %v3196 = vpack.c.bf16 %v3144, %v3140
        %v3197 = vpack.c.bf16 %v3145, %v3141
        %v3198 = vpack.c.bf16 %v3150, %v3146
        %v3199 = vpack.c.bf16 %v3151, %v3147
        %v3200 = vpack.c.bf16 %v3152, %v3148
        %v3201 = vpack.c.bf16 %v3153, %v3149
        %v3202 = vpack.c.bf16 %v3158, %v3154
        %v3203 = vpack.c.bf16 %v3159, %v3155
        %v3204 = vpack.c.bf16 %v3160, %v3156
        %v3205 = vpack.c.bf16 %v3161, %v3157
        %v3206 = vpack.c.bf16 %v3166, %v3162
        %v3207 = vpack.c.bf16 %v3167, %v3163
        %v3208 = vpack.c.bf16 %v3168, %v3164
        %v3209 = vpack.c.bf16 %v3169, %v3165
        %v3210 = vpack.c.bf16 %v3174, %v3170
        %v3211 = vpack.c.bf16 %v3175, %v3171
        %v3212 = vpack.c.bf16 %v3176, %v3172
        %v3213 = vpack.c.bf16 %v3177, %v3173
        %v3214 = vpack.c.bf16 %v3182, %v3178
        %v3215 = vpack.c.bf16 %v3183, %v3179
        %v3216 = vpack.c.bf16 %v3184, %v3180
        %v3217 = vpack.c.bf16 %v3185, %v3181
        %v3218 = vld [vmem:[#allocation10] sm:$0xff]
        %v3219 = vld [vmem:[#allocation10 + $0x8] sm:$0xff]
        %v3220 = vld [vmem:[#allocation10 + $0x10] sm:$0xff]
        %v3221 = vld [vmem:[#allocation10 + $0x18] sm:$0xff]
        %v3222 = vld [vmem:[#allocation10 + $0x20] sm:$0xff]
        %v3223 = vld [vmem:[#allocation10 + $0x28] sm:$0xff]
        %v3224 = vld [vmem:[#allocation10 + $0x30] sm:$0xff]
        %v3225 = vld [vmem:[#allocation10 + $0x38] sm:$0xff]
        %v3226 = vld [vmem:[#allocation10 + $0x40] sm:$0xff]
        %v3227 = vld [vmem:[#allocation10 + $0x48] sm:$0xff]
        %v3228 = vld [vmem:[#allocation10 + $0x50] sm:$0xff]
        %v3229 = vld [vmem:[#allocation10 + $0x58] sm:$0xff]
        %v3230 = vld [vmem:[#allocation10 + $0x60] sm:$0xff]
        %v3231 = vld [vmem:[#allocation10 + $0x68] sm:$0xff]
        %v3232 = vld [vmem:[#allocation10 + $0x70] sm:$0xff]
        %v3233 = vld [vmem:[#allocation10 + $0x78] sm:$0xff]
        %v3234 = vld [vmem:[#allocation10 + $0x80] sm:$0xff]
        %v3235 = vld [vmem:[#allocation10 + $0x88] sm:$0xff]
        %v3236 = vld [vmem:[#allocation10 + $0x90] sm:$0xff]
        %v3237 = vld [vmem:[#allocation10 + $0x98] sm:$0xff]
        %v3238 = vld [vmem:[#allocation10 + $0xa0] sm:$0xff]
        %v3239 = vld [vmem:[#allocation10 + $0xa8] sm:$0xff]
        %v3240 = vld [vmem:[#allocation10 + $0xb0] sm:$0xff]
        %v3241 = vld [vmem:[#allocation10 + $0xb8] sm:$0xff]
        %v3242 = vld [vmem:[#allocation10 + $0xc0] sm:$0xff]
        %v3243 = vld [vmem:[#allocation10 + $0xc8] sm:$0xff]
        %v3244 = vld [vmem:[#allocation10 + $0xd0] sm:$0xff]
        %v3245 = vld [vmem:[#allocation10 + $0xd8] sm:$0xff]
        %v3246 = vld [vmem:[#allocation10 + $0xe0] sm:$0xff]
        %v3247 = vld [vmem:[#allocation10 + $0xe8] sm:$0xff]
        %v3248 = vld [vmem:[#allocation10 + $0xf0] sm:$0xff]
        %v3249 = vld [vmem:[#allocation10 + $0xf8] sm:$0xff]
        %v3250 = vld [vmem:[#allocation10 + $0x100] sm:$0xff]
        %v3251 = vld [vmem:[#allocation10 + $0x108] sm:$0xff]
        %v3252 = vld [vmem:[#allocation10 + $0x110] sm:$0xff]
        %v3253 = vld [vmem:[#allocation10 + $0x118] sm:$0xff]
        %v3254 = vld [vmem:[#allocation10 + $0x120] sm:$0xff]
        %v3255 = vld [vmem:[#allocation10 + $0x128] sm:$0xff]
        %v3256 = vld [vmem:[#allocation10 + $0x130] sm:$0xff]
        %v3257 = vld [vmem:[#allocation10 + $0x138] sm:$0xff]
        %v3258 = vld [vmem:[#allocation10 + $0x140] sm:$0xff]
        %v3259 = vld [vmem:[#allocation10 + $0x148] sm:$0xff]
        %v3260 = vld [vmem:[#allocation10 + $0x150] sm:$0xff]
        %v3261 = vld [vmem:[#allocation10 + $0x158] sm:$0xff]
        %v3262 = vld [vmem:[#allocation10 + $0x160] sm:$0xff]
        %v3263 = vld [vmem:[#allocation10 + $0x168] sm:$0xff]
        %v3264 = vld [vmem:[#allocation10 + $0x170] sm:$0xff]
        %v3265 = vld [vmem:[#allocation10 + $0x178] sm:$0xff]
        %v3266 = vld [vmem:[#allocation10 + $0x180] sm:$0xff]
        %v3267 = vld [vmem:[#allocation10 + $0x188] sm:$0xff]
        %v3268 = vld [vmem:[#allocation10 + $0x190] sm:$0xff]
        %v3269 = vld [vmem:[#allocation10 + $0x198] sm:$0xff]
        %v3270 = vld [vmem:[#allocation10 + $0x1a0] sm:$0xff]
        %v3271 = vld [vmem:[#allocation10 + $0x1a8] sm:$0xff]
        %v3272 = vld [vmem:[#allocation10 + $0x1b0] sm:$0xff]
        %v3273 = vld [vmem:[#allocation10 + $0x1b8] sm:$0xff]
        %v3274 = vld [vmem:[#allocation10 + $0x1c0] sm:$0xff]
        %v3275 = vld [vmem:[#allocation10 + $0x1c8] sm:$0xff]
        %v3276 = vld [vmem:[#allocation10 + $0x1d0] sm:$0xff]
        %v3277 = vld [vmem:[#allocation10 + $0x1d8] sm:$0xff]
        %v3278 = vld [vmem:[#allocation10 + $0x1e0] sm:$0xff]
        %v3279 = vld [vmem:[#allocation10 + $0x1e8] sm:$0xff]
        %v3280 = vld [vmem:[#allocation10 + $0x1f0] sm:$0xff]
        %v3281 = vld [vmem:[#allocation10 + $0x1f8] sm:$0xff]
        %v3282 = vld [vmem:[%s6] sm:$0x3]
        %v3284 = vlaneseq
        %v3285 = vshrl.u32 %v3284, 7
        %v3286 = vsub.s32 0, %v3285
        %v3287 = vrot.slane %v3282, %v3286
        %v3288 = vlaneseq
        %v3289 = vshrl.u32 %v3288, 7
        %v3290 = vsub.s32 1, %v3289
        %v3291 = vrot.slane %v3282, %v3290
        %v3358 = vunpack.c.l.b16 %v3218
        %v3359 = vunpack.c.h.b16 %v3218
        %v3360 = vunpack.c.l.b16 %v3219
        %v3361 = vunpack.c.h.b16 %v3219
        %v3362 = vunpack.c.l.b16 %v3220
        %v3363 = vunpack.c.h.b16 %v3220
        %v3364 = vunpack.c.l.b16 %v3221
        %v3365 = vunpack.c.h.b16 %v3221
        %v3366 = vunpack.c.l.b16 %v3222
        %v3367 = vunpack.c.h.b16 %v3222
        %v3368 = vunpack.c.l.b16 %v3223
        %v3369 = vunpack.c.h.b16 %v3223
        %v3370 = vunpack.c.l.b16 %v3224
        %v3371 = vunpack.c.h.b16 %v3224
        %v3372 = vunpack.c.l.b16 %v3225
        %v3373 = vunpack.c.h.b16 %v3225
        %v3374 = vunpack.c.l.b16 %v3226
        %v3375 = vunpack.c.h.b16 %v3226
        %v3376 = vunpack.c.l.b16 %v3227
        %v3377 = vunpack.c.h.b16 %v3227
        %v3378 = vunpack.c.l.b16 %v3228
        %v3379 = vunpack.c.h.b16 %v3228
        %v3380 = vunpack.c.l.b16 %v3229
        %v3381 = vunpack.c.h.b16 %v3229
        %v3382 = vunpack.c.l.b16 %v3230
        %v3383 = vunpack.c.h.b16 %v3230
        %v3384 = vunpack.c.l.b16 %v3231
        %v3385 = vunpack.c.h.b16 %v3231
        %v3386 = vunpack.c.l.b16 %v3232
        %v3387 = vunpack.c.h.b16 %v3232
        %v3388 = vunpack.c.l.b16 %v3233
        %v3389 = vunpack.c.h.b16 %v3233
        %v3390 = vunpack.c.l.b16 %v3234
        %v3391 = vunpack.c.h.b16 %v3234
        %v3392 = vunpack.c.l.b16 %v3235
        %v3393 = vunpack.c.h.b16 %v3235
        %v3394 = vunpack.c.l.b16 %v3236
        %v3395 = vunpack.c.h.b16 %v3236
        %v3396 = vunpack.c.l.b16 %v3237
        %v3397 = vunpack.c.h.b16 %v3237
        %v3398 = vunpack.c.l.b16 %v3238
        %v3399 = vunpack.c.h.b16 %v3238
        %v3400 = vunpack.c.l.b16 %v3239
        %v3401 = vunpack.c.h.b16 %v3239
        %v3402 = vunpack.c.l.b16 %v3240
        %v3403 = vunpack.c.h.b16 %v3240
        %v3404 = vunpack.c.l.b16 %v3241
        %v3405 = vunpack.c.h.b16 %v3241
        %v3406 = vunpack.c.l.b16 %v3242
        %v3407 = vunpack.c.h.b16 %v3242
        %v3408 = vunpack.c.l.b16 %v3243
        %v3409 = vunpack.c.h.b16 %v3243
        %v3410 = vunpack.c.l.b16 %v3244
        %v3411 = vunpack.c.h.b16 %v3244
        %v3412 = vunpack.c.l.b16 %v3245
        %v3413 = vunpack.c.h.b16 %v3245
        %v3414 = vunpack.c.l.b16 %v3246
        %v3415 = vunpack.c.h.b16 %v3246
        %v3416 = vunpack.c.l.b16 %v3247
        %v3417 = vunpack.c.h.b16 %v3247
        %v3418 = vunpack.c.l.b16 %v3248
        %v3419 = vunpack.c.h.b16 %v3248
        %v3420 = vunpack.c.l.b16 %v3249
        %v3421 = vunpack.c.h.b16 %v3249
        %v3422 = vunpack.c.l.b16 %v3250
        %v3423 = vunpack.c.h.b16 %v3250
        %v3424 = vunpack.c.l.b16 %v3251
        %v3425 = vunpack.c.h.b16 %v3251
        %v3426 = vunpack.c.l.b16 %v3252
        %v3427 = vunpack.c.h.b16 %v3252
        %v3428 = vunpack.c.l.b16 %v3253
        %v3429 = vunpack.c.h.b16 %v3253
        %v3430 = vunpack.c.l.b16 %v3254
        %v3431 = vunpack.c.h.b16 %v3254
        %v3432 = vunpack.c.l.b16 %v3255
        %v3433 = vunpack.c.h.b16 %v3255
        %v3434 = vunpack.c.l.b16 %v3256
        %v3435 = vunpack.c.h.b16 %v3256
        %v3436 = vunpack.c.l.b16 %v3257
        %v3437 = vunpack.c.h.b16 %v3257
        %v3438 = vunpack.c.l.b16 %v3258
        %v3439 = vunpack.c.h.b16 %v3258
        %v3440 = vunpack.c.l.b16 %v3259
        %v3441 = vunpack.c.h.b16 %v3259
        %v3442 = vunpack.c.l.b16 %v3260
        %v3443 = vunpack.c.h.b16 %v3260
        %v3444 = vunpack.c.l.b16 %v3261
        %v3445 = vunpack.c.h.b16 %v3261
        %v3446 = vunpack.c.l.b16 %v3262
        %v3447 = vunpack.c.h.b16 %v3262
        %v3448 = vunpack.c.l.b16 %v3263
        %v3449 = vunpack.c.h.b16 %v3263
        %v3450 = vunpack.c.l.b16 %v3264
        %v3451 = vunpack.c.h.b16 %v3264
        %v3452 = vunpack.c.l.b16 %v3265
        %v3453 = vunpack.c.h.b16 %v3265
        %v3454 = vunpack.c.l.b16 %v3266
        %v3455 = vunpack.c.h.b16 %v3266
        %v3456 = vunpack.c.l.b16 %v3267
        %v3457 = vunpack.c.h.b16 %v3267
        %v3458 = vunpack.c.l.b16 %v3268
        %v3459 = vunpack.c.h.b16 %v3268
        %v3460 = vunpack.c.l.b16 %v3269
        %v3461 = vunpack.c.h.b16 %v3269
        %v3462 = vunpack.c.l.b16 %v3270
        %v3463 = vunpack.c.h.b16 %v3270
        %v3464 = vunpack.c.l.b16 %v3271
        %v3465 = vunpack.c.h.b16 %v3271
        %v3466 = vunpack.c.l.b16 %v3272
        %v3467 = vunpack.c.h.b16 %v3272
        %v3468 = vunpack.c.l.b16 %v3273
        %v3469 = vunpack.c.h.b16 %v3273
        %v3470 = vunpack.c.l.b16 %v3274
        %v3471 = vunpack.c.h.b16 %v3274
        %v3472 = vunpack.c.l.b16 %v3275
        %v3473 = vunpack.c.h.b16 %v3275
        %v3474 = vunpack.c.l.b16 %v3276
        %v3475 = vunpack.c.h.b16 %v3276
        %v3476 = vunpack.c.l.b16 %v3277
        %v3477 = vunpack.c.h.b16 %v3277
        %v3478 = vunpack.c.l.b16 %v3278
        %v3479 = vunpack.c.h.b16 %v3278
        %v3480 = vunpack.c.l.b16 %v3279
        %v3481 = vunpack.c.h.b16 %v3279
        %v3482 = vunpack.c.l.b16 %v3280
        %v3483 = vunpack.c.h.b16 %v3280
        %v3484 = vunpack.c.l.b16 %v3281
        %v3485 = vunpack.c.h.b16 %v3281
        %v3486 = vpack.c.b16 %v3360, %v3358
        %v3487 = vpack.c.b16 %v3361, %v3359
        %v3488 = vpack.c.b16 %v3364, %v3362
        %v3489 = vpack.c.b16 %v3365, %v3363
        %v3490 = vpack.c.b16 %v3368, %v3366
        %v3491 = vpack.c.b16 %v3369, %v3367
        %v3492 = vpack.c.b16 %v3372, %v3370
        %v3493 = vpack.c.b16 %v3373, %v3371
        %v3494 = vpack.c.b16 %v3376, %v3374
        %v3495 = vpack.c.b16 %v3377, %v3375
        %v3496 = vpack.c.b16 %v3380, %v3378
        %v3497 = vpack.c.b16 %v3381, %v3379
        %v3498 = vpack.c.b16 %v3384, %v3382
        %v3499 = vpack.c.b16 %v3385, %v3383
        %v3500 = vpack.c.b16 %v3388, %v3386
        %v3501 = vpack.c.b16 %v3389, %v3387
        %v3502 = vpack.c.b16 %v3392, %v3390
        %v3503 = vpack.c.b16 %v3393, %v3391
        %v3504 = vpack.c.b16 %v3396, %v3394
        %v3505 = vpack.c.b16 %v3397, %v3395
        %v3506 = vpack.c.b16 %v3400, %v3398
        %v3507 = vpack.c.b16 %v3401, %v3399
        %v3508 = vpack.c.b16 %v3404, %v3402
        %v3509 = vpack.c.b16 %v3405, %v3403
        %v3510 = vpack.c.b16 %v3408, %v3406
        %v3511 = vpack.c.b16 %v3409, %v3407
        %v3512 = vpack.c.b16 %v3412, %v3410
        %v3513 = vpack.c.b16 %v3413, %v3411
        %v3514 = vpack.c.b16 %v3416, %v3414
        %v3515 = vpack.c.b16 %v3417, %v3415
        %v3516 = vpack.c.b16 %v3420, %v3418
        %v3517 = vpack.c.b16 %v3421, %v3419
        %v3518 = vpack.c.b16 %v3424, %v3422
        %v3519 = vpack.c.b16 %v3425, %v3423
        %v3520 = vpack.c.b16 %v3428, %v3426
        %v3521 = vpack.c.b16 %v3429, %v3427
        %v3522 = vpack.c.b16 %v3432, %v3430
        %v3523 = vpack.c.b16 %v3433, %v3431
        %v3524 = vpack.c.b16 %v3436, %v3434
        %v3525 = vpack.c.b16 %v3437, %v3435
        %v3526 = vpack.c.b16 %v3440, %v3438
        %v3527 = vpack.c.b16 %v3441, %v3439
        %v3528 = vpack.c.b16 %v3444, %v3442
        %v3529 = vpack.c.b16 %v3445, %v3443
        %v3530 = vpack.c.b16 %v3448, %v3446
        %v3531 = vpack.c.b16 %v3449, %v3447
        %v3532 = vpack.c.b16 %v3452, %v3450
        %v3533 = vpack.c.b16 %v3453, %v3451
        %v3534 = vpack.c.b16 %v3456, %v3454
        %v3535 = vpack.c.b16 %v3457, %v3455
        %v3536 = vpack.c.b16 %v3460, %v3458
        %v3537 = vpack.c.b16 %v3461, %v3459
        %v3538 = vpack.c.b16 %v3464, %v3462
        %v3539 = vpack.c.b16 %v3465, %v3463
        %v3540 = vpack.c.b16 %v3468, %v3466
        %v3541 = vpack.c.b16 %v3469, %v3467
        %v3542 = vpack.c.b16 %v3472, %v3470
        %v3543 = vpack.c.b16 %v3473, %v3471
        %v3544 = vpack.c.b16 %v3476, %v3474
        %v3545 = vpack.c.b16 %v3477, %v3475
        %v3546 = vpack.c.b16 %v3480, %v3478
        %v3547 = vpack.c.b16 %v3481, %v3479
        %v3548 = vpack.c.b16 %v3484, %v3482
        %v3549 = vpack.c.b16 %v3485, %v3483
        %3614 = vmatprep.subr.bf16.mxu0 %v3501
        %3615 = vmatpush1.bf16.msra.mxu0 %v3500
        %3616 = vmatprep.subr.bf16.mxu0 %v3499
        %3617 = vmatpush1.bf16.msra.mxu0 %v3498
        %3618 = vmatprep.subr.bf16.mxu0 %v3497
        %3619 = vmatpush1.bf16.msra.mxu0 %v3496
        %3620 = vmatprep.subr.bf16.mxu0 %v3495
        %3621 = vmatpush1.bf16.msra.mxu0 %v3494
        %3622 = vmatprep.subr.bf16.mxu0 %v3493
        %3623 = vmatpush1.bf16.msra.mxu0 %v3492
        %3624 = vmatprep.subr.bf16.mxu0 %v3491
        %3625 = vmatpush1.bf16.msra.mxu0 %v3490
        %3626 = vmatprep.subr.bf16.mxu0 %v3489
        %3627 = vmatpush1.bf16.msra.mxu0 %v3488
        %3628 = vmatprep.subr.bf16.mxu0 %v3487
        %3629 = vmatpush1.bf16.msra.mxu0 %v3486
        %3630 = vmatprep.subr.bf16.mxu0 %v3517
        %3631 = vmatpush2.bf16.msra.mxu0 %v3516
        %3632 = vmatprep.subr.bf16.mxu0 %v3515
        %3633 = vmatpush2.bf16.msra.mxu0 %v3514
        %3634 = vmatprep.subr.bf16.mxu0 %v3513
        %3635 = vmatpush2.bf16.msra.mxu0 %v3512
        %3636 = vmatprep.subr.bf16.mxu0 %v3511
        %3637 = vmatpush2.bf16.msra.mxu0 %v3510
        %3638 = vmatprep.subr.bf16.mxu0 %v3509
        %3639 = vmatpush2.bf16.msra.mxu0 %v3508
        %3640 = vmatprep.subr.bf16.mxu0 %v3507
        %3641 = vmatpush2.bf16.msra.mxu0 %v3506
        %3642 = vmatprep.subr.bf16.mxu0 %v3505
        %3643 = vmatpush2.bf16.msra.mxu0 %v3504
        %3644 = vmatprep.subr.bf16.mxu0 %v3503
        %3645 = vmatpush2.bf16.msra.mxu0 %v3502
        %3646 = vmatprep.mubr.bf16.mxu0 %v3187
        %3647 = vmatmul.mubr.bf16.gmra.mxu0 %v3186
        %v3648 = vpop.f32.mrf.mxu0
        %v3649 = vadd.f32 %v3287, %v3648
        %v3650 = vpop.f32.mrf.mxu0
        %v3651 = vadd.f32 %v3291, %v3650
        %v3652 = vpop.f32.mrf.mxu0
        %v3653 = vadd.f32 %v3287, %v3652
        %v3654 = vpop.f32.mrf.mxu0
        %v3655 = vadd.f32 %v3291, %v3654
        %3656 = vmatprep.mubr.bf16.mxu0 %v3191
        %3657 = vmatmul.mubr.bf16.gmra.mxu0 %v3190
        %v3658 = vpop.f32.mrf.mxu0
        %v3659 = vadd.f32 %v3287, %v3658
        %v3660 = vpop.f32.mrf.mxu0
        %v3661 = vadd.f32 %v3291, %v3660
        %v3662 = vpop.f32.mrf.mxu0
        %v3663 = vadd.f32 %v3287, %v3662
        %v3664 = vpop.f32.mrf.mxu0
        %v3665 = vadd.f32 %v3291, %v3664
        %3666 = vmatprep.mubr.bf16.mxu0 %v3195
        %3667 = vmatmul.mubr.bf16.gmra.mxu0 %v3194
        %v3668 = vpop.f32.mrf.mxu0
        %v3669 = vadd.f32 %v3287, %v3668
        %v3670 = vpop.f32.mrf.mxu0
        %v3671 = vadd.f32 %v3291, %v3670
        %v3672 = vpop.f32.mrf.mxu0
        %v3673 = vadd.f32 %v3287, %v3672
        %v3674 = vpop.f32.mrf.mxu0
        %v3675 = vadd.f32 %v3291, %v3674
        %3676 = vmatprep.mubr.bf16.mxu0 %v3199
        %3677 = vmatmul.mubr.bf16.gmra.mxu0 %v3198
        %v3678 = vpop.f32.mrf.mxu0
        %v3679 = vadd.f32 %v3287, %v3678
        %v3680 = vpop.f32.mrf.mxu0
        %v3681 = vadd.f32 %v3291, %v3680
        %v3682 = vpop.f32.mrf.mxu0
        %v3683 = vadd.f32 %v3287, %v3682
        %v3684 = vpop.f32.mrf.mxu0
        %v3685 = vadd.f32 %v3291, %v3684
        %3686 = vmatprep.mubr.bf16.mxu0 %v3203
        %3687 = vmatmul.mubr.bf16.gmra.mxu0 %v3202
        %v3688 = vpop.f32.mrf.mxu0
        %v3689 = vadd.f32 %v3287, %v3688
        %v3690 = vpop.f32.mrf.mxu0
        %v3691 = vadd.f32 %v3291, %v3690
        %v3692 = vpop.f32.mrf.mxu0
        %v3693 = vadd.f32 %v3287, %v3692
        %v3694 = vpop.f32.mrf.mxu0
        %v3695 = vadd.f32 %v3291, %v3694
        %3696 = vmatprep.mubr.bf16.mxu0 %v3207
        %3697 = vmatmul.mubr.bf16.gmra.mxu0 %v3206
        %v3698 = vpop.f32.mrf.mxu0
        %v3699 = vadd.f32 %v3287, %v3698
        %v3700 = vpop.f32.mrf.mxu0
        %v3701 = vadd.f32 %v3291, %v3700
        %v3702 = vpop.f32.mrf.mxu0
        %v3703 = vadd.f32 %v3287, %v3702
        %v3704 = vpop.f32.mrf.mxu0
        %v3705 = vadd.f32 %v3291, %v3704
        %3706 = vmatprep.mubr.bf16.mxu0 %v3211
        %3707 = vmatmul.mubr.bf16.gmra.mxu0 %v3210
        %v3708 = vpop.f32.mrf.mxu0
        %v3709 = vadd.f32 %v3287, %v3708
        %v3710 = vpop.f32.mrf.mxu0
        %v3711 = vadd.f32 %v3291, %v3710
        %v3712 = vpop.f32.mrf.mxu0
        %v3713 = vadd.f32 %v3287, %v3712
        %v3714 = vpop.f32.mrf.mxu0
        %v3715 = vadd.f32 %v3291, %v3714
        %3716 = vmatprep.mubr.bf16.mxu0 %v3215
        %3717 = vmatmul.mubr.bf16.gmra.mxu0 %v3214
        %v3718 = vpop.f32.mrf.mxu0
        %v3719 = vadd.f32 %v3287, %v3718
        %v3720 = vpop.f32.mrf.mxu0
        %v3721 = vadd.f32 %v3291, %v3720
        %v3722 = vpop.f32.mrf.mxu0
        %v3723 = vadd.f32 %v3287, %v3722
        %v3724 = vpop.f32.mrf.mxu0
        %v3725 = vadd.f32 %v3291, %v3724
        %3726 = vdwg.mxu0
        %3727 = vmatprep.subr.bf16.mxu0 %v3533
        %3728 = vmatpush1.bf16.msra.mxu0 %v3532
        %3729 = vmatprep.subr.bf16.mxu0 %v3531
        %3730 = vmatpush1.bf16.msra.mxu0 %v3530
        %3731 = vmatprep.subr.bf16.mxu0 %v3529
        %3732 = vmatpush1.bf16.msra.mxu0 %v3528
        %3733 = vmatprep.subr.bf16.mxu0 %v3527
        %3734 = vmatpush1.bf16.msra.mxu0 %v3526
        %3735 = vmatprep.subr.bf16.mxu0 %v3525
        %3736 = vmatpush1.bf16.msra.mxu0 %v3524
        %3737 = vmatprep.subr.bf16.mxu0 %v3523
        %3738 = vmatpush1.bf16.msra.mxu0 %v3522
        %3739 = vmatprep.subr.bf16.mxu0 %v3521
        %3740 = vmatpush1.bf16.msra.mxu0 %v3520
        %3741 = vmatprep.subr.bf16.mxu0 %v3519
        %3742 = vmatpush1.bf16.msra.mxu0 %v3518
        %3743 = vmatprep.subr.bf16.mxu0 %v3549
        %3744 = vmatpush2.bf16.msra.mxu0 %v3548
        %3745 = vmatprep.subr.bf16.mxu0 %v3547
        %3746 = vmatpush2.bf16.msra.mxu0 %v3546
        %3747 = vmatprep.subr.bf16.mxu0 %v3545
        %3748 = vmatpush2.bf16.msra.mxu0 %v3544
        %3749 = vmatprep.subr.bf16.mxu0 %v3543
        %3750 = vmatpush2.bf16.msra.mxu0 %v3542
        %3751 = vmatprep.subr.bf16.mxu0 %v3541
        %3752 = vmatpush2.bf16.msra.mxu0 %v3540
        %3753 = vmatprep.subr.bf16.mxu0 %v3539
        %3754 = vmatpush2.bf16.msra.mxu0 %v3538
        %3755 = vmatprep.subr.bf16.mxu0 %v3537
        %3756 = vmatpush2.bf16.msra.mxu0 %v3536
        %3757 = vmatprep.subr.bf16.mxu0 %v3535
        %3758 = vmatpush2.bf16.msra.mxu0 %v3534
        %3759 = vmatprep.mubr.bf16.mxu0 %v3189
        %3760 = vmatmul.mubr.bf16.gmra.mxu0 %v3188
        %v3761 = vpop.f32.mrf.mxu0
        %v3762 = vadd.f32 %v3649, %v3761
        %v3763 = vpop.f32.mrf.mxu0
        %v3764 = vadd.f32 %v3651, %v3763
        %v3765 = vpop.f32.mrf.mxu0
        %v3766 = vadd.f32 %v3653, %v3765
        %v3767 = vpop.f32.mrf.mxu0
        %v3768 = vadd.f32 %v3655, %v3767
        %3769 = vmatprep.mubr.bf16.mxu0 %v3193
        %3770 = vmatmul.mubr.bf16.gmra.mxu0 %v3192
        %v3771 = vpop.f32.mrf.mxu0
        %v3772 = vadd.f32 %v3659, %v3771
        %v3773 = vpop.f32.mrf.mxu0
        %v3774 = vadd.f32 %v3661, %v3773
        %v3775 = vpop.f32.mrf.mxu0
        %v3776 = vadd.f32 %v3663, %v3775
        %v3777 = vpop.f32.mrf.mxu0
        %v3778 = vadd.f32 %v3665, %v3777
        %3779 = vmatprep.mubr.bf16.mxu0 %v3197
        %3780 = vmatmul.mubr.bf16.gmra.mxu0 %v3196
        %v3781 = vpop.f32.mrf.mxu0
        %v3782 = vadd.f32 %v3669, %v3781
        %v3783 = vpop.f32.mrf.mxu0
        %v3784 = vadd.f32 %v3671, %v3783
        %v3785 = vpop.f32.mrf.mxu0
        %v3786 = vadd.f32 %v3673, %v3785
        %v3787 = vpop.f32.mrf.mxu0
        %v3788 = vadd.f32 %v3675, %v3787
        %3789 = vmatprep.mubr.bf16.mxu0 %v3201
        %3790 = vmatmul.mubr.bf16.gmra.mxu0 %v3200
        %v3791 = vpop.f32.mrf.mxu0
        %v3792 = vadd.f32 %v3679, %v3791
        %v3793 = vpop.f32.mrf.mxu0
        %v3794 = vadd.f32 %v3681, %v3793
        %v3795 = vpop.f32.mrf.mxu0
        %v3796 = vadd.f32 %v3683, %v3795
        %v3797 = vpop.f32.mrf.mxu0
        %v3798 = vadd.f32 %v3685, %v3797
        %3799 = vmatprep.mubr.bf16.mxu0 %v3205
        %3800 = vmatmul.mubr.bf16.gmra.mxu0 %v3204
        %v3801 = vpop.f32.mrf.mxu0
        %v3802 = vadd.f32 %v3689, %v3801
        %v3803 = vpop.f32.mrf.mxu0
        %v3804 = vadd.f32 %v3691, %v3803
        %v3805 = vpop.f32.mrf.mxu0
        %v3806 = vadd.f32 %v3693, %v3805
        %v3807 = vpop.f32.mrf.mxu0
        %v3808 = vadd.f32 %v3695, %v3807
        %3809 = vmatprep.mubr.bf16.mxu0 %v3209
        %3810 = vmatmul.mubr.bf16.gmra.mxu0 %v3208
        %v3811 = vpop.f32.mrf.mxu0
        %v3812 = vadd.f32 %v3699, %v3811
        %v3813 = vpop.f32.mrf.mxu0
        %v3814 = vadd.f32 %v3701, %v3813
        %v3815 = vpop.f32.mrf.mxu0
        %v3816 = vadd.f32 %v3703, %v3815
        %v3817 = vpop.f32.mrf.mxu0
        %v3818 = vadd.f32 %v3705, %v3817
        %3819 = vmatprep.mubr.bf16.mxu0 %v3213
        %3820 = vmatmul.mubr.bf16.gmra.mxu0 %v3212
        %v3821 = vpop.f32.mrf.mxu0
        %v3822 = vadd.f32 %v3709, %v3821
        %v3823 = vpop.f32.mrf.mxu0
        %v3824 = vadd.f32 %v3711, %v3823
        %v3825 = vpop.f32.mrf.mxu0
        %v3826 = vadd.f32 %v3713, %v3825
        %v3827 = vpop.f32.mrf.mxu0
        %v3828 = vadd.f32 %v3715, %v3827
        %3829 = vmatprep.mubr.bf16.mxu0 %v3217
        %3830 = vmatmul.mubr.bf16.gmra.mxu0 %v3216
        %v3831 = vpop.f32.mrf.mxu0
        %v3832 = vadd.f32 %v3719, %v3831
        %v3833 = vpop.f32.mrf.mxu0
        %v3834 = vadd.f32 %v3721, %v3833
        %v3835 = vpop.f32.mrf.mxu0
        %v3836 = vadd.f32 %v3723, %v3835
        %v3837 = vpop.f32.mrf.mxu0
        %v3838 = vadd.f32 %v3725, %v3837
        %3839 = vdwg.mxu0
        %v3840 = vmax.f32 %v3762, -1.0
        %v3841 = vmax.f32 %v3764, -1.0
        %v3842 = vmax.f32 %v3766, -1.0
        %v3843 = vmax.f32 %v3768, -1.0
        %v3844 = vmax.f32 %v3772, -1.0
        %v3845 = vmax.f32 %v3774, -1.0
        %v3846 = vmax.f32 %v3776, -1.0
        %v3847 = vmax.f32 %v3778, -1.0
        %v3848 = vmax.f32 %v3782, -1.0
        %v3849 = vmax.f32 %v3784, -1.0
        %v3850 = vmax.f32 %v3786, -1.0
        %v3851 = vmax.f32 %v3788, -1.0
        %v3852 = vmax.f32 %v3792, -1.0
        %v3853 = vmax.f32 %v3794, -1.0
        %v3854 = vmax.f32 %v3796, -1.0
        %v3855 = vmax.f32 %v3798, -1.0
        %v3856 = vmax.f32 %v3802, -1.0
        %v3857 = vmax.f32 %v3804, -1.0
        %v3858 = vmax.f32 %v3806, -1.0
        %v3859 = vmax.f32 %v3808, -1.0
        %v3860 = vmax.f32 %v3812, -1.0
        %v3861 = vmax.f32 %v3814, -1.0
        %v3862 = vmax.f32 %v3816, -1.0
        %v3863 = vmax.f32 %v3818, -1.0
        %v3864 = vmax.f32 %v3822, -1.0
        %v3865 = vmax.f32 %v3824, -1.0
        %v3866 = vmax.f32 %v3826, -1.0
        %v3867 = vmax.f32 %v3828, -1.0
        %v3868 = vmax.f32 %v3832, -1.0
        %v3869 = vmax.f32 %v3834, -1.0
        %v3870 = vmax.f32 %v3836, -1.0
        %v3871 = vmax.f32 %v3838, -1.0
        %v3872 = vmin.f32 %v3840, 1.0
        %v3873 = vmin.f32 %v3841, 1.0
        %v3874 = vmin.f32 %v3842, 1.0
        %v3875 = vmin.f32 %v3843, 1.0
        %v3876 = vmin.f32 %v3844, 1.0
        %v3877 = vmin.f32 %v3845, 1.0
        %v3878 = vmin.f32 %v3846, 1.0
        %v3879 = vmin.f32 %v3847, 1.0
        %v3880 = vmin.f32 %v3848, 1.0
        %v3881 = vmin.f32 %v3849, 1.0
        %v3882 = vmin.f32 %v3850, 1.0
        %v3883 = vmin.f32 %v3851, 1.0
        %v3884 = vmin.f32 %v3852, 1.0
        %v3885 = vmin.f32 %v3853, 1.0
        %v3886 = vmin.f32 %v3854, 1.0
        %v3887 = vmin.f32 %v3855, 1.0
        %v3888 = vmin.f32 %v3856, 1.0
        %v3889 = vmin.f32 %v3857, 1.0
        %v3890 = vmin.f32 %v3858, 1.0
        %v3891 = vmin.f32 %v3859, 1.0
        %v3892 = vmin.f32 %v3860, 1.0
        %v3893 = vmin.f32 %v3861, 1.0
        %v3894 = vmin.f32 %v3862, 1.0
        %v3895 = vmin.f32 %v3863, 1.0
        %v3896 = vmin.f32 %v3864, 1.0
        %v3897 = vmin.f32 %v3865, 1.0
        %v3898 = vmin.f32 %v3866, 1.0
        %v3899 = vmin.f32 %v3867, 1.0
        %v3900 = vmin.f32 %v3868, 1.0
        %v3901 = vmin.f32 %v3869, 1.0
        %v3902 = vmin.f32 %v3870, 1.0
        %v3903 = vmin.f32 %v3871, 1.0
        %v3904 = vld [vmem:[%s503] sm:$0xff]
        %v3905 = vld [vmem:[%s503 + $0x8] sm:$0xff]
        %v3906 = vld [vmem:[%s503 + $0x10] sm:$0xff]
        %v3907 = vld [vmem:[%s503 + $0x18] sm:$0xff]
        %v3908 = vld [vmem:[%s503 + $0x20] sm:$0xff]
        %v3909 = vld [vmem:[%s503 + $0x28] sm:$0xff]
        %v3910 = vld [vmem:[%s503 + $0x30] sm:$0xff]
        %v3911 = vld [vmem:[%s503 + $0x38] sm:$0xff]
        %v3912 = vld [vmem:[%s503 + $0x40] sm:$0xff]
        %v3913 = vld [vmem:[%s503 + $0x48] sm:$0xff]
        %v3914 = vld [vmem:[%s503 + $0x50] sm:$0xff]
        %v3915 = vld [vmem:[%s503 + $0x58] sm:$0xff]
        %v3916 = vld [vmem:[%s503 + $0x60] sm:$0xff]
        %v3917 = vld [vmem:[%s503 + $0x68] sm:$0xff]
        %v3918 = vld [vmem:[%s503 + $0x70] sm:$0xff]
        %v3919 = vld [vmem:[%s503 + $0x78] sm:$0xff]
        %v3920 = vunpack.c.l.bf16 %v3904
        %v3921 = vunpack.c.h.bf16 %v3904
        %v3922 = vunpack.c.l.bf16 %v3905
        %v3923 = vunpack.c.h.bf16 %v3905
        %v3924 = vunpack.c.l.bf16 %v3906
        %v3925 = vunpack.c.h.bf16 %v3906
        %v3926 = vunpack.c.l.bf16 %v3907
        %v3927 = vunpack.c.h.bf16 %v3907
        %v3928 = vunpack.c.l.bf16 %v3908
        %v3929 = vunpack.c.h.bf16 %v3908
        %v3930 = vunpack.c.l.bf16 %v3909
        %v3931 = vunpack.c.h.bf16 %v3909
        %v3932 = vunpack.c.l.bf16 %v3910
        %v3933 = vunpack.c.h.bf16 %v3910
        %v3934 = vunpack.c.l.bf16 %v3911
        %v3935 = vunpack.c.h.bf16 %v3911
        %v3936 = vunpack.c.l.bf16 %v3912
        %v3937 = vunpack.c.h.bf16 %v3912
        %v3938 = vunpack.c.l.bf16 %v3913
        %v3939 = vunpack.c.h.bf16 %v3913
        %v3940 = vunpack.c.l.bf16 %v3914
        %v3941 = vunpack.c.h.bf16 %v3914
        %v3942 = vunpack.c.l.bf16 %v3915
        %v3943 = vunpack.c.h.bf16 %v3915
        %v3944 = vunpack.c.l.bf16 %v3916
        %v3945 = vunpack.c.h.bf16 %v3916
        %v3946 = vunpack.c.l.bf16 %v3917
        %v3947 = vunpack.c.h.bf16 %v3917
        %v3948 = vunpack.c.l.bf16 %v3918
        %v3949 = vunpack.c.h.bf16 %v3918
        %v3950 = vunpack.c.l.bf16 %v3919
        %v3951 = vunpack.c.h.bf16 %v3919
        %v3952 = vmul.f32 %v3920, 0.05
        %v3953 = vmul.f32 %v3921, 0.05
        %v3954 = vmul.f32 %v3922, 0.05
        %v3955 = vmul.f32 %v3923, 0.05
        %v3956 = vmul.f32 %v3924, 0.05
        %v3957 = vmul.f32 %v3925, 0.05
        %v3958 = vmul.f32 %v3926, 0.05
        %v3959 = vmul.f32 %v3927, 0.05
        %v3960 = vmul.f32 %v3928, 0.05
        %v3961 = vmul.f32 %v3929, 0.05
        %v3962 = vmul.f32 %v3930, 0.05
        %v3963 = vmul.f32 %v3931, 0.05
        %v3964 = vmul.f32 %v3932, 0.05
        %v3965 = vmul.f32 %v3933, 0.05
        %v3966 = vmul.f32 %v3934, 0.05
        %v3967 = vmul.f32 %v3935, 0.05
        %v3968 = vmul.f32 %v3936, 0.05
        %v3969 = vmul.f32 %v3937, 0.05
        %v3970 = vmul.f32 %v3938, 0.05
        %v3971 = vmul.f32 %v3939, 0.05
        %v3972 = vmul.f32 %v3940, 0.05
        %v3973 = vmul.f32 %v3941, 0.05
        %v3974 = vmul.f32 %v3942, 0.05
        %v3975 = vmul.f32 %v3943, 0.05
        %v3976 = vmul.f32 %v3944, 0.05
        %v3977 = vmul.f32 %v3945, 0.05
        %v3978 = vmul.f32 %v3946, 0.05
        %v3979 = vmul.f32 %v3947, 0.05
        %v3980 = vmul.f32 %v3948, 0.05
        %v3981 = vmul.f32 %v3949, 0.05
        %v3982 = vmul.f32 %v3950, 0.05
        %v3983 = vmul.f32 %v3951, 0.05
        %v3984 = vadd.f32 %v3872, %v3952
        %v3985 = vadd.f32 %v3873, %v3953
        %v3986 = vadd.f32 %v3874, %v3954
        %v3987 = vadd.f32 %v3875, %v3955
        %v3988 = vadd.f32 %v3876, %v3956
        %v3989 = vadd.f32 %v3877, %v3957
        %v3990 = vadd.f32 %v3878, %v3958
        %v3991 = vadd.f32 %v3879, %v3959
        %v3992 = vadd.f32 %v3880, %v3960
        %v3993 = vadd.f32 %v3881, %v3961
        %v3994 = vadd.f32 %v3882, %v3962
        %v3995 = vadd.f32 %v3883, %v3963
        %v3996 = vadd.f32 %v3884, %v3964
        %v3997 = vadd.f32 %v3885, %v3965
        %v3998 = vadd.f32 %v3886, %v3966
        %v3999 = vadd.f32 %v3887, %v3967
        %v4000 = vadd.f32 %v3888, %v3968
        %v4001 = vadd.f32 %v3889, %v3969
        %v4002 = vadd.f32 %v3890, %v3970
        %v4003 = vadd.f32 %v3891, %v3971
        %v4004 = vadd.f32 %v3892, %v3972
        %v4005 = vadd.f32 %v3893, %v3973
        %v4006 = vadd.f32 %v3894, %v3974
        %v4007 = vadd.f32 %v3895, %v3975
        %v4008 = vadd.f32 %v3896, %v3976
        %v4009 = vadd.f32 %v3897, %v3977
        %v4010 = vadd.f32 %v3898, %v3978
        %v4011 = vadd.f32 %v3899, %v3979
        %v4012 = vadd.f32 %v3900, %v3980
        %v4013 = vadd.f32 %v3901, %v3981
        %v4014 = vadd.f32 %v3902, %v3982
        %v4015 = vadd.f32 %v3903, %v3983
        %4016 = vst [vmem:[%s554] sm:$0xff] %v3984
        %4017 = vst [vmem:[%s554 + $0x8] sm:$0xff] %v3985
        %4018 = vst [vmem:[%s554 + $0x10] sm:$0xff] %v3986
        %4019 = vst [vmem:[%s554 + $0x18] sm:$0xff] %v3987
        %4020 = vst [vmem:[%s554 + $0x20] sm:$0xff] %v3988
        %4021 = vst [vmem:[%s554 + $0x28] sm:$0xff] %v3989
        %4022 = vst [vmem:[%s554 + $0x30] sm:$0xff] %v3990
        %4023 = vst [vmem:[%s554 + $0x38] sm:$0xff] %v3991
        %4024 = vst [vmem:[%s554 + $0x40] sm:$0xff] %v3992
        %4025 = vst [vmem:[%s554 + $0x48] sm:$0xff] %v3993
        %4026 = vst [vmem:[%s554 + $0x50] sm:$0xff] %v3994
        %4027 = vst [vmem:[%s554 + $0x58] sm:$0xff] %v3995
        %4028 = vst [vmem:[%s554 + $0x60] sm:$0xff] %v3996
        %4029 = vst [vmem:[%s554 + $0x68] sm:$0xff] %v3997
        %4030 = vst [vmem:[%s554 + $0x70] sm:$0xff] %v3998
        %4031 = vst [vmem:[%s554 + $0x78] sm:$0xff] %v3999
        %4032 = vst [vmem:[%s554 + $0x80] sm:$0xff] %v4000
        %4033 = vst [vmem:[%s554 + $0x88] sm:$0xff] %v4001
        %4034 = vst [vmem:[%s554 + $0x90] sm:$0xff] %v4002
        %4035 = vst [vmem:[%s554 + $0x98] sm:$0xff] %v4003
        %4036 = vst [vmem:[%s554 + $0xa0] sm:$0xff] %v4004
        %4037 = vst [vmem:[%s554 + $0xa8] sm:$0xff] %v4005
        %4038 = vst [vmem:[%s554 + $0xb0] sm:$0xff] %v4006
        %4039 = vst [vmem:[%s554 + $0xb8] sm:$0xff] %v4007
        %4040 = vst [vmem:[%s554 + $0xc0] sm:$0xff] %v4008
        %4041 = vst [vmem:[%s554 + $0xc8] sm:$0xff] %v4009
        %4042 = vst [vmem:[%s554 + $0xd0] sm:$0xff] %v4010
        %4043 = vst [vmem:[%s554 + $0xd8] sm:$0xff] %v4011
        %4044 = vst [vmem:[%s554 + $0xe0] sm:$0xff] %v4012
        %4045 = vst [vmem:[%s554 + $0xe8] sm:$0xff] %v4013
        %4046 = vst [vmem:[%s554 + $0xf0] sm:$0xff] %v4014
        %4047 = vst [vmem:[%s554 + $0xf8] sm:$0xff] %v4015
        %s4048 = sand.u32 %s273, 1
        %s4049 = scalar_lea.sflag [#allocation4], %s4048
        %s4050 = sand.u32 %s273, 1
        %s4051 = smul.addr %s4050, 256
        %s4052 = scalar_lea.vmem [#allocation16], %s4051
        // Predicated region
        $region93: #{tpu_custom_call.1} parent=59 // pred_check
          %p4053 = pneg %p283
        $region94: #{tpu_custom_call.1} parent=59 // pred_check_branch
          %4055 = sbr.rel (%p4053) target = $region96
        $region95: #{tpu_custom_call.1} parent=59 // pred_region
          %s4056 = smul.u32 16, %s35
          %s4058 = ssub.s32 4096, 4096
          %4059 = vsyncadd %s4049, %s4058
          %s4060 = smul.addr %s4056, 2
          %s4061 = smul.addr %s4060, 128
          %s4062 = scalar_lea.hbm %s10, %s4061
          %s4063 = sshll.u32 %s4052, 4
          %s4064 = int_to_ptr.vmem [resolvable:$true] %s4063
          %4069 = dma.vmem_to_hbm [thread:$0]  %s4064, 4096, %s4062, %s4049, 256, 256, 16
        $region96: #{tpu_custom_call.1} parent=59 // pred_fallthru
          _
      $region60: #{tpu_custom_call.1} parent=5 // pred_fallthru
        _
      %p4070 = scmp.le.s32.totalorder 2, %s30
      // Predicated region
      $region97: #{tpu_custom_call.1} parent=5 // pred_check
        %p4071 = pneg %p4070
      $region98: #{tpu_custom_call.1} parent=5 // pred_check_branch
        %4073 = sbr.rel (%p4071) target = $region100
      $region99: #{tpu_custom_call.1} parent=5 // pred_region
        %s4074 = ssub.s32 %s30, 2
        // Predicated region
        $region101: #{tpu_custom_call.1} parent=99 // pred_check
          %p4075 = pneg %p289
        $region102: #{tpu_custom_call.1} parent=99 // pred_check_branch
          %4077 = sbr.rel (%p4075) target = $region104
        $region103: #{tpu_custom_call.1} parent=99 // pred_region
          %s4078 = sand.u32 %s274, 1
          %s4079 = scalar_lea.sflag [#allocation4], %s4078
          %s4080 = sand.u32 %s274, 1
          %s4081 = smul.addr %s4080, 256
          %s4082 = scalar_lea.vmem [#allocation16], %s4081
          %4083 = dma.done %s4079, 4096
        $region104: #{tpu_custom_call.1} parent=99 // pred_fallthru
          _
      $region100: #{tpu_custom_call.1} parent=5 // pred_fallthru
        _
    $region6: #{tpu_custom_call.1} parent=1 // loop_footer
      %s34 = sadd.s32 1, %s30
    $region7: #{tpu_custom_call.1} parent=1 // loop_footer_branch
      %29 = sbr.rel target = $region3
    $region8: #{tpu_custom_call.1} parent=1 // loop_exit
      _
    %4084 = vsyncpa [#allocation3], 1
    %s4085 = scalar_lea.sflag [#allocation3], 1
    %4086 = vsyncpa %s4085, 1
    %4087 = vsyncpa [#allocation6], 1
    %4088 = vsyncpa [#allocation9], 1
    %4089 = vsyncpa [#allocation12], 1
    %s4090 = scalar_lea.sflag [#allocation12], 1
    %4091 = vsyncpa %s4090, 1
    %4092 = vsyncpa [#allocation15], 1
    %s4093 = scalar_lea.sflag [#allocation15], 1
    %4094 = vsyncpa %s4093, 1
    %4095 = vsyncpa [#allocation4], 1
    %s4096 = scalar_lea.sflag [#allocation4], 1
    %4097 = vsyncpa %s4096, 1

</llo_original>
